<compile_context>
chip_gen: v5e
topology: v5e:2x2
jax: 0.10.0
libtpu: 0.0.40
codegen_flags: <defaults>
</compile_context>

<pallas_src>
import functools
import numpy as np
import jax
import jax.numpy as jnp
from jax.experimental import pallas as pl
from jax.experimental.pallas import tpu as pltpu

D_IN = 3
D_OUT = 5
D_HIDDEN = 64
N_LAYERS = 6
SKIP_IN = (4,)
SCALE = 1.5
SQRT2 = float(np.sqrt(2.0))

DIMS = [D_IN] + [D_HIDDEN] * N_LAYERS + [D_OUT]   # len == n_layers + 2
NUM_LAYERS = len(DIMS)                             # 8 -> linear layers l = 0..6


def _round_up(n, m):
    return ((n + m - 1) // m) * m


def _softplus_beta100(x):
    # torch.nn.Softplus(beta=100): x if beta*x > 20 else log(1 + exp(beta*x)) / beta
    beta = 100.0
    bx = beta * x
    soft = jnp.log(1.0 + jnp.exp(jnp.minimum(bx, 20.0))) / beta
    return jnp.where(bx > 20.0, x, soft)


def cloth_sdf_kernel(x_ref, win_ref, wh_ref, bh_ref, w6_ref, b6_ref, out_ref, *, mm_dtype):
    f32 = jnp.float32
    x = x_ref[...]                                     # (TB, 3) raw (unscaled) points
    x0, x1, x2 = x[:, 0:1], x[:, 1:2], x[:, 2:3]

    win = win_ref[...]                                 # (8, 64):
    #   rows 0-2 : scale * W0            rows 3-5 : (scale/sqrt2) * W4[61:64]
    #   row  6   : b0                    row  7   : zero padding

    # layer 0: K=3 matmul done as VPU broadcast-FMAs (scale & bias folded into win)
    h = _softplus_beta100(x0 * win[0:1] + x1 * win[1:2] + x2 * win[2:3] + win[6:7])

    # raw-input contribution of the skip layer (scale and 1/sqrt(2) already folded in)
    skip = x0 * win[3:4] + x1 * win[4:5] + x2 * win[5:6]

    # hidden layers 1..5; stack index 3 is the skip layer (lin4)
    for l in range(5):
        pre = jnp.dot(h.astype(mm_dtype), wh_ref[l],
                      preferred_element_type=f32) + bh_ref[l]
        if l == 3:
            pre = pre + skip
        h = _softplus_beta100(pre)

    # final linear layer; cat([y[:, :1]/scale, y[:, 1:]]) folded into w6/b6
    out_ref[...] = jnp.dot(h.astype(mm_dtype), w6_ref[...],
                           preferred_element_type=f32) + b6_ref[...]


def init_params(key):
    """Deterministic parameter init mirroring the module's __init__ shapes/logic
    (multires=0, geometric_init=True). weight_norm is identity at init (g = ||v||)."""
    Ws, bs = [], []
    for l in range(NUM_LAYERS - 1):
        in_dim = DIMS[l]
        if l + 1 in SKIP_IN:
            out_dim = DIMS[l + 1] - DIMS[0]
        else:
            out_dim = DIMS[l + 1]
        key, sub = jax.random.split(key)
        if l != NUM_LAYERS - 2:
            std = np.sqrt(2.0) / np.sqrt(out_dim)
        else:
            std = 1e-4  # torch path: geometric_init and l == num_layers-2 -> else branch
        W = std * jax.random.normal(sub, (in_dim, out_dim), dtype=jnp.float32)
        b = jnp.zeros((1, out_dim), dtype=jnp.float32)
        Ws.append(W)
        bs.append(b)
    return Ws, bs


def _pack_params(Ws, bs, mxu_dtype):
    """One-time constant folding + padding + operand packing (done on tiny weights)."""
    W0, W1, W2, W3, W4, W5, W6 = Ws
    b0, b1, b2, b3, b4, b5, b6 = bs
    H, D = D_HIDDEN, D_IN

    # layer 3 feeds the skip concat -> pad its 61 output columns up to 64
    W3p = jnp.pad(W3, ((0, 0), (0, H - W3.shape[1])))
    b3p = jnp.pad(b3, ((0, 0), (0, H - b3.shape[1])))

    # split the skip layer: rows [0:61] act on h, rows [61:64] act on the scaled inputs.
    # Fold the 1/sqrt(2) of the concat into both halves; pad W4a with zero rows so the
    # padded softplus(0) columns of h3 contribute exactly zero (bit-exact).
    W4a = jnp.pad(W4[: H - D, :] / SQRT2, ((0, D), (0, 0)))            # (64, 64)
    W4b = (SCALE / SQRT2) * W4[H - D:, :]                              # (3, 64)

    wh = jnp.stack([W1, W2, W3p, W4a, W5]).astype(mxu_dtype)           # (5, 64, 64)
    bh = jnp.stack([b1, b2, b3p, b4, b5]).astype(jnp.float32)          # (5, 1, 64)

    # input-side slab: rows 0-2 scale*W0, rows 3-5 (scale/sqrt2)*W4b, row 6 b0, row 7 zeros
    win = jnp.concatenate(
        [SCALE * W0, W4b, b0, jnp.zeros((1, H), jnp.float32)], axis=0
    ).astype(jnp.float32)                                              # (8, 64)

    # fold the final cat([y[:, :1]/scale, y[:, 1:]]) into the last layer
    w6 = jnp.concatenate([W6[:, :1] / SCALE, W6[:, 1:]], axis=1).astype(mxu_dtype)    # (64, 5)
    b6f = jnp.concatenate([b6[:, :1] / SCALE, b6[:, 1:]], axis=1).astype(jnp.float32) # (1, 5)
    return win, wh, bh, w6, b6f


def cloth_sdf_forward(x, Ws, bs, *, tile_b=2048, mxu_dtype=jnp.bfloat16):
    """Forward pass of ClothSDFNetwork. mxu_dtype=jnp.float32 gives bit-close-to-reference
    results; jnp.bfloat16 (default) keeps f32 accumulation but feeds the MXU bf16 inputs."""
    N = x.shape[0]
    # tile size: multiple of 8 rows, no bigger than the (padded) batch
    tb = min(int(tile_b), _round_up(N, 8))
    tb = _round_up(tb, 8)
    num_tiles = pl.cdiv(N, tb)
    n_pad = num_tiles * tb
    xp = x if n_pad == N else jnp.pad(x, ((0, n_pad - N), (0, 0)))

    win, wh, bh, w6, b6 = _pack_params(Ws, bs, mxu_dtype)

    kernel = functools.partial(cloth_sdf_kernel, mm_dtype=mxu_dtype)

    out = pl.pallas_call(
        kernel,
        out_shape=jax.ShapeDtypeStruct((n_pad, D_OUT), jnp.float32),
        grid_spec=pltpu.PrefetchScalarGridSpec(
            num_scalar_prefetch=0,
            grid=(num_tiles,),
            in_specs=[
                pl.BlockSpec((tb, D_IN), lambda i: (i, 0)),
                pl.BlockSpec(win.shape, lambda i: (0, 0)),
                pl.BlockSpec(wh.shape, lambda i: (0, 0, 0)),
                pl.BlockSpec(bh.shape, lambda i: (0, 0, 0)),
                pl.BlockSpec(w6.shape, lambda i: (0, 0)),
                pl.BlockSpec(b6.shape, lambda i: (0, 0)),
            ],
            out_specs=pl.BlockSpec((tb, D_OUT), lambda i: (i, 0)),
        ),
        compiler_params=pltpu.CompilerParams(dimension_semantics=("parallel",)),
    )(xp, win, wh, bh, w6, b6)
    return out[:N]


def reference_forward(x, Ws, bs):
    """Pure-JAX reference of ClothSDFNetwork.forward (multires=0)."""
    inputs = x * SCALE
    h = inputs
    for l in range(NUM_LAYERS - 1):
        if l in SKIP_IN:
            h = jnp.concatenate([h, inputs], axis=1) / np.sqrt(2.0)
        h = h @ Ws[l] + bs[l]
        if l < NUM_LAYERS - 2:
            h = _softplus_beta100(h)
    return jnp.concatenate([h[:, :1] / SCALE, h[:, 1:]], axis=-1)


if __name__ == "__main__":
    key = jax.random.PRNGKey(0)
    k_x, k_p = jax.random.split(key)

    N = 1000                     # deliberately not a multiple of 8/tile to exercise padding
    x = jax.random.normal(k_x, (N, D_IN), dtype=jnp.float32)
    Ws, bs = init_params(k_p)
    ref = reference_forward(x, Ws, bs)

    # Exact path: f32 MXU inputs, small tile to exercise a multi-step grid + tail padding.
    out_f32 = jax.block_until_ready(
        cloth_sdf_forward(x, Ws, bs, tile_b=256, mxu_dtype=jnp.float32))
    np.testing.assert_allclose(np.asarray(out_f32), np.asarray(ref), rtol=1e-5, atol=1e-5)

    # Fast path (default): bf16 MXU inputs / f32 accumulation, large tile.
    out_bf16 = jax.block_until_ready(cloth_sdf_forward(x, Ws, bs))
    np.testing.assert_allclose(np.asarray(out_bf16), np.asarray(ref), rtol=5e-2, atol=5e-4)

    assert out_f32.shape == (N, D_OUT) and out_bf16.shape == (N, D_OUT)
    print("KERNEL_OK")
</pallas_src>

<mosaic_0001>
module attributes {stable_mosaic.version = 11 : i64} {
  func.func @cloth_sdf_kernel(%arg0: i32, %arg1: memref<256x3xf32, #tpu.memory_space<vmem>>, %arg2: memref<8x64xf32, #tpu.memory_space<vmem>>, %arg3: memref<5x64x64xf32, #tpu.memory_space<vmem>>, %arg4: memref<5x1x64xf32, #tpu.memory_space<vmem>>, %arg5: memref<64x5xf32, #tpu.memory_space<vmem>>, %arg6: memref<1x5xf32, #tpu.memory_space<vmem>>, %arg7: memref<256x5xf32, #tpu.memory_space<vmem>>) attributes {dimension_semantics = [#tpu.dimension_semantics<parallel>], iteration_bounds = array<i64: 4>, scalar_prefetch = 0 : i64, scratch_operands = 0 : i64, tpu.core_type = #tpu.core_type<tc>, window_params = [{transform_indices = @transform_0, window_bounds = array<i64: 256, 3>}, {pipeline_mode = #tpu.pipeline_mode<synchronous>, transform_indices = @transform_1, window_bounds = array<i64: 8, 64>}, {pipeline_mode = #tpu.pipeline_mode<synchronous>, transform_indices = @transform_2, window_bounds = array<i64: 5, 64, 64>}, {pipeline_mode = #tpu.pipeline_mode<synchronous>, transform_indices = @transform_3, window_bounds = array<i64: 5, 1, 64>}, {pipeline_mode = #tpu.pipeline_mode<synchronous>, transform_indices = @transform_4, window_bounds = array<i64: 64, 5>}, {pipeline_mode = #tpu.pipeline_mode<synchronous>, transform_indices = @transform_5, window_bounds = array<i64: 1, 5>}, {transform_indices = @transform_6, window_bounds = array<i64: 256, 5>}]} {
    %c0 = arith.constant 0 : index
    %c0_0 = arith.constant 0 : index
    %0 = vector.load %arg1[%c0, %c0_0] : memref<256x3xf32, #tpu.memory_space<vmem>>, vector<256x3xf32>
    %1 = vector.extract_strided_slice %0 {offsets = [0, 0], sizes = [256, 1], strides = [1, 1]} : vector<256x3xf32> to vector<256x1xf32>
    %2 = vector.extract_strided_slice %0 {offsets = [0, 1], sizes = [256, 1], strides = [1, 1]} : vector<256x3xf32> to vector<256x1xf32>
    %3 = vector.extract_strided_slice %0 {offsets = [0, 2], sizes = [256, 1], strides = [1, 1]} : vector<256x3xf32> to vector<256x1xf32>
    %c0_1 = arith.constant 0 : index
    %c0_2 = arith.constant 0 : index
    %4 = vector.load %arg2[%c0_1, %c0_2] : memref<8x64xf32, #tpu.memory_space<vmem>>, vector<8x64xf32>
    %5 = vector.extract_strided_slice %4 {offsets = [0, 0], sizes = [1, 64], strides = [1, 1]} : vector<8x64xf32> to vector<1x64xf32>
    %6 = vector.broadcast %1 : vector<256x1xf32> to vector<256x64xf32>
    %7 = vector.broadcast %5 : vector<1x64xf32> to vector<256x64xf32>
    %8 = arith.mulf %6, %7 : vector<256x64xf32>
    %9 = vector.extract_strided_slice %4 {offsets = [1, 0], sizes = [1, 64], strides = [1, 1]} : vector<8x64xf32> to vector<1x64xf32>
    %10 = vector.broadcast %2 : vector<256x1xf32> to vector<256x64xf32>
    %11 = vector.broadcast %9 : vector<1x64xf32> to vector<256x64xf32>
    %12 = arith.mulf %10, %11 : vector<256x64xf32>
    %13 = arith.addf %8, %12 : vector<256x64xf32>
    %14 = vector.extract_strided_slice %4 {offsets = [2, 0], sizes = [1, 64], strides = [1, 1]} : vector<8x64xf32> to vector<1x64xf32>
    %15 = vector.broadcast %3 : vector<256x1xf32> to vector<256x64xf32>
    %16 = vector.broadcast %14 : vector<1x64xf32> to vector<256x64xf32>
    %17 = arith.mulf %15, %16 : vector<256x64xf32>
    %18 = arith.addf %13, %17 : vector<256x64xf32>
    %19 = vector.extract_strided_slice %4 {offsets = [6, 0], sizes = [1, 64], strides = [1, 1]} : vector<8x64xf32> to vector<1x64xf32>
    %20 = vector.broadcast %19 : vector<1x64xf32> to vector<256x64xf32>
    %21 = arith.addf %18, %20 : vector<256x64xf32>
    %cst = arith.constant 1.000000e+02 : f32
    %22 = vector.broadcast %cst : f32 to vector<256x64xf32>
    %23 = arith.mulf %22, %21 : vector<256x64xf32>
    %cst_3 = arith.constant 2.000000e+01 : f32
    %24 = vector.broadcast %cst_3 : f32 to vector<256x64xf32>
    %25 = arith.minimumf %23, %24 : vector<256x64xf32>
    %26 = math.exp %25 : vector<256x64xf32>
    %cst_4 = arith.constant 1.000000e+00 : f32
    %27 = vector.broadcast %cst_4 : f32 to vector<256x64xf32>
    %28 = arith.addf %27, %26 : vector<256x64xf32>
    %29 = math.log %28 : vector<256x64xf32>
    %cst_5 = arith.constant 1.000000e+02 : f32
    %30 = vector.broadcast %cst_5 : f32 to vector<256x64xf32>
    %31 = arith.divf %29, %30 : vector<256x64xf32>
    %cst_6 = arith.constant 2.000000e+01 : f32
    %32 = vector.broadcast %cst_6 : f32 to vector<256x64xf32>
    %33 = arith.cmpf ogt, %23, %32 : vector<256x64xf32>
    %34 = arith.select %33, %21, %31 : vector<256x64xi1>, vector<256x64xf32>
    %35 = vector.extract_strided_slice %4 {offsets = [3, 0], sizes = [1, 64], strides = [1, 1]} : vector<8x64xf32> to vector<1x64xf32>
    %36 = vector.broadcast %1 : vector<256x1xf32> to vector<256x64xf32>
    %37 = vector.broadcast %35 : vector<1x64xf32> to vector<256x64xf32>
    %38 = arith.mulf %36, %37 : vector<256x64xf32>
    %39 = vector.extract_strided_slice %4 {offsets = [4, 0], sizes = [1, 64], strides = [1, 1]} : vector<8x64xf32> to vector<1x64xf32>
    %40 = vector.broadcast %2 : vector<256x1xf32> to vector<256x64xf32>
    %41 = vector.broadcast %39 : vector<1x64xf32> to vector<256x64xf32>
    %42 = arith.mulf %40, %41 : vector<256x64xf32>
    %43 = arith.addf %38, %42 : vector<256x64xf32>
    %44 = vector.extract_strided_slice %4 {offsets = [5, 0], sizes = [1, 64], strides = [1, 1]} : vector<8x64xf32> to vector<1x64xf32>
    %45 = vector.broadcast %3 : vector<256x1xf32> to vector<256x64xf32>
    %46 = vector.broadcast %44 : vector<1x64xf32> to vector<256x64xf32>
    %47 = arith.mulf %45, %46 : vector<256x64xf32>
    %48 = arith.addf %43, %47 : vector<256x64xf32>
    %c0_7 = arith.constant 0 : index
    %c0_8 = arith.constant 0 : index
    %c0_9 = arith.constant 0 : index
    %49 = vector.load %arg3[%c0_7, %c0_8, %c0_9] : memref<5x64x64xf32, #tpu.memory_space<vmem>>, vector<1x64x64xf32>
    %50 = vector.shape_cast %49 : vector<1x64x64xf32> to vector<64x64xf32>
    %cst_10 = arith.constant dense<0.000000e+00> : vector<256x64xf32>
    %51 = tpu.matmul %34, %50, %cst_10 {dimension_numbers = #tpu.dot_dimension_numbers<[1], [0], [0], [1], [0, 0, 1, 1], [], []>} : vector<256x64xf32>, vector<64x64xf32>, vector<256x64xf32> -> vector<256x64xf32>
    %c0_11 = arith.constant 0 : index
    %c0_12 = arith.constant 0 : index
    %c0_13 = arith.constant 0 : index
    %52 = vector.load %arg4[%c0_11, %c0_12, %c0_13] : memref<5x1x64xf32, #tpu.memory_space<vmem>>, vector<1x1x64xf32>
    %53 = vector.shape_cast %52 : vector<1x1x64xf32> to vector<1x64xf32>
    %54 = vector.broadcast %53 : vector<1x64xf32> to vector<256x64xf32>
    %55 = arith.addf %51, %54 : vector<256x64xf32>
    %cst_14 = arith.constant 1.000000e+02 : f32
    %56 = vector.broadcast %cst_14 : f32 to vector<256x64xf32>
    %57 = arith.mulf %56, %55 : vector<256x64xf32>
    %cst_15 = arith.constant 2.000000e+01 : f32
    %58 = vector.broadcast %cst_15 : f32 to vector<256x64xf32>
    %59 = arith.minimumf %57, %58 : vector<256x64xf32>
    %60 = math.exp %59 : vector<256x64xf32>
    %cst_16 = arith.constant 1.000000e+00 : f32
    %61 = vector.broadcast %cst_16 : f32 to vector<256x64xf32>
    %62 = arith.addf %61, %60 : vector<256x64xf32>
    %63 = math.log %62 : vector<256x64xf32>
    %cst_17 = arith.constant 1.000000e+02 : f32
    %64 = vector.broadcast %cst_17 : f32 to vector<256x64xf32>
    %65 = arith.divf %63, %64 : vector<256x64xf32>
    %cst_18 = arith.constant 2.000000e+01 : f32
    %66 = vector.broadcast %cst_18 : f32 to vector<256x64xf32>
    %67 = arith.cmpf ogt, %57, %66 : vector<256x64xf32>
    %68 = arith.select %67, %55, %65 : vector<256x64xi1>, vector<256x64xf32>
    %c1 = arith.constant 1 : index
    %c0_19 = arith.constant 0 : index
    %c0_20 = arith.constant 0 : index
    %69 = vector.load %arg3[%c1, %c0_19, %c0_20] : memref<5x64x64xf32, #tpu.memory_space<vmem>>, vector<1x64x64xf32>
    %70 = vector.shape_cast %69 : vector<1x64x64xf32> to vector<64x64xf32>
    %cst_21 = arith.constant dense<0.000000e+00> : vector<256x64xf32>
    %71 = tpu.matmul %68, %70, %cst_21 {dimension_numbers = #tpu.dot_dimension_numbers<[1], [0], [0], [1], [0, 0, 1, 1], [], []>} : vector<256x64xf32>, vector<64x64xf32>, vector<256x64xf32> -> vector<256x64xf32>
    %c1_22 = arith.constant 1 : index
    %c0_23 = arith.constant 0 : index
    %c0_24 = arith.constant 0 : index
    %72 = vector.load %arg4[%c1_22, %c0_23, %c0_24] : memref<5x1x64xf32, #tpu.memory_space<vmem>>, vector<1x1x64xf32>
    %73 = vector.shape_cast %72 : vector<1x1x64xf32> to vector<1x64xf32>
    %74 = vector.broadcast %73 : vector<1x64xf32> to vector<256x64xf32>
    %75 = arith.addf %71, %74 : vector<256x64xf32>
    %cst_25 = arith.constant 1.000000e+02 : f32
    %76 = vector.broadcast %cst_25 : f32 to vector<256x64xf32>
    %77 = arith.mulf %76, %75 : vector<256x64xf32>
    %cst_26 = arith.constant 2.000000e+01 : f32
    %78 = vector.broadcast %cst_26 : f32 to vector<256x64xf32>
    %79 = arith.minimumf %77, %78 : vector<256x64xf32>
    %80 = math.exp %79 : vector<256x64xf32>
    %cst_27 = arith.constant 1.000000e+00 : f32
    %81 = vector.broadcast %cst_27 : f32 to vector<256x64xf32>
    %82 = arith.addf %81, %80 : vector<256x64xf32>
    %83 = math.log %82 : vector<256x64xf32>
    %cst_28 = arith.constant 1.000000e+02 : f32
    %84 = vector.broadcast %cst_28 : f32 to vector<256x64xf32>
    %85 = arith.divf %83, %84 : vector<256x64xf32>
    %cst_29 = arith.constant 2.000000e+01 : f32
    %86 = vector.broadcast %cst_29 : f32 to vector<256x64xf32>
    %87 = arith.cmpf ogt, %77, %86 : vector<256x64xf32>
    %88 = arith.select %87, %75, %85 : vector<256x64xi1>, vector<256x64xf32>
    %c2 = arith.constant 2 : index
    %c0_30 = arith.constant 0 : index
    %c0_31 = arith.constant 0 : index
    %89 = vector.load %arg3[%c2, %c0_30, %c0_31] : memref<5x64x64xf32, #tpu.memory_space<vmem>>, vector<1x64x64xf32>
    %90 = vector.shape_cast %89 : vector<1x64x64xf32> to vector<64x64xf32>
    %cst_32 = arith.constant dense<0.000000e+00> : vector<256x64xf32>
    %91 = tpu.matmul %88, %90, %cst_32 {dimension_numbers = #tpu.dot_dimension_numbers<[1], [0], [0], [1], [0, 0, 1, 1], [], []>} : vector<256x64xf32>, vector<64x64xf32>, vector<256x64xf32> -> vector<256x64xf32>
    %c2_33 = arith.constant 2 : index
    %c0_34 = arith.constant 0 : index
    %c0_35 = arith.constant 0 : index
    %92 = vector.load %arg4[%c2_33, %c0_34, %c0_35] : memref<5x1x64xf32, #tpu.memory_space<vmem>>, vector<1x1x64xf32>
    %93 = vector.shape_cast %92 : vector<1x1x64xf32> to vector<1x64xf32>
    %94 = vector.broadcast %93 : vector<1x64xf32> to vector<256x64xf32>
    %95 = arith.addf %91, %94 : vector<256x64xf32>
    %cst_36 = arith.constant 1.000000e+02 : f32
    %96 = vector.broadcast %cst_36 : f32 to vector<256x64xf32>
    %97 = arith.mulf %96, %95 : vector<256x64xf32>
    %cst_37 = arith.constant 2.000000e+01 : f32
    %98 = vector.broadcast %cst_37 : f32 to vector<256x64xf32>
    %99 = arith.minimumf %97, %98 : vector<256x64xf32>
    %100 = math.exp %99 : vector<256x64xf32>
    %cst_38 = arith.constant 1.000000e+00 : f32
    %101 = vector.broadcast %cst_38 : f32 to vector<256x64xf32>
    %102 = arith.addf %101, %100 : vector<256x64xf32>
    %103 = math.log %102 : vector<256x64xf32>
    %cst_39 = arith.constant 1.000000e+02 : f32
    %104 = vector.broadcast %cst_39 : f32 to vector<256x64xf32>
    %105 = arith.divf %103, %104 : vector<256x64xf32>
    %cst_40 = arith.constant 2.000000e+01 : f32
    %106 = vector.broadcast %cst_40 : f32 to vector<256x64xf32>
    %107 = arith.cmpf ogt, %97, %106 : vector<256x64xf32>
    %108 = arith.select %107, %95, %105 : vector<256x64xi1>, vector<256x64xf32>
    %c3 = arith.constant 3 : index
    %c0_41 = arith.constant 0 : index
    %c0_42 = arith.constant 0 : index
    %109 = vector.load %arg3[%c3, %c0_41, %c0_42] : memref<5x64x64xf32, #tpu.memory_space<vmem>>, vector<1x64x64xf32>
    %110 = vector.shape_cast %109 : vector<1x64x64xf32> to vector<64x64xf32>
    %cst_43 = arith.constant dense<0.000000e+00> : vector<256x64xf32>
    %111 = tpu.matmul %108, %110, %cst_43 {dimension_numbers = #tpu.dot_dimension_numbers<[1], [0], [0], [1], [0, 0, 1, 1], [], []>} : vector<256x64xf32>, vector<64x64xf32>, vector<256x64xf32> -> vector<256x64xf32>
    %c3_44 = arith.constant 3 : index
    %c0_45 = arith.constant 0 : index
    %c0_46 = arith.constant 0 : index
    %112 = vector.load %arg4[%c3_44, %c0_45, %c0_46] : memref<5x1x64xf32, #tpu.memory_space<vmem>>, vector<1x1x64xf32>
    %113 = vector.shape_cast %112 : vector<1x1x64xf32> to vector<1x64xf32>
    %114 = vector.broadcast %113 : vector<1x64xf32> to vector<256x64xf32>
    %115 = arith.addf %111, %114 : vector<256x64xf32>
    %116 = arith.addf %115, %48 : vector<256x64xf32>
    %cst_47 = arith.constant 1.000000e+02 : f32
    %117 = vector.broadcast %cst_47 : f32 to vector<256x64xf32>
    %118 = arith.mulf %117, %116 : vector<256x64xf32>
    %cst_48 = arith.constant 2.000000e+01 : f32
    %119 = vector.broadcast %cst_48 : f32 to vector<256x64xf32>
    %120 = arith.minimumf %118, %119 : vector<256x64xf32>
    %121 = math.exp %120 : vector<256x64xf32>
    %cst_49 = arith.constant 1.000000e+00 : f32
    %122 = vector.broadcast %cst_49 : f32 to vector<256x64xf32>
    %123 = arith.addf %122, %121 : vector<256x64xf32>
    %124 = math.log %123 : vector<256x64xf32>
    %cst_50 = arith.constant 1.000000e+02 : f32
    %125 = vector.broadcast %cst_50 : f32 to vector<256x64xf32>
    %126 = arith.divf %124, %125 : vector<256x64xf32>
    %cst_51 = arith.constant 2.000000e+01 : f32
    %127 = vector.broadcast %cst_51 : f32 to vector<256x64xf32>
    %128 = arith.cmpf ogt, %118, %127 : vector<256x64xf32>
    %129 = arith.select %128, %116, %126 : vector<256x64xi1>, vector<256x64xf32>
    %c4 = arith.constant 4 : index
    %c0_52 = arith.constant 0 : index
    %c0_53 = arith.constant 0 : index
    %130 = vector.load %arg3[%c4, %c0_52, %c0_53] : memref<5x64x64xf32, #tpu.memory_space<vmem>>, vector<1x64x64xf32>
    %131 = vector.shape_cast %130 : vector<1x64x64xf32> to vector<64x64xf32>
    %cst_54 = arith.constant dense<0.000000e+00> : vector<256x64xf32>
    %132 = tpu.matmul %129, %131, %cst_54 {dimension_numbers = #tpu.dot_dimension_numbers<[1], [0], [0], [1], [0, 0, 1, 1], [], []>} : vector<256x64xf32>, vector<64x64xf32>, vector<256x64xf32> -> vector<256x64xf32>
    %c4_55 = arith.constant 4 : index
    %c0_56 = arith.constant 0 : index
    %c0_57 = arith.constant 0 : index
    %133 = vector.load %arg4[%c4_55, %c0_56, %c0_57] : memref<5x1x64xf32, #tpu.memory_space<vmem>>, vector<1x1x64xf32>
    %134 = vector.shape_cast %133 : vector<1x1x64xf32> to vector<1x64xf32>
    %135 = vector.broadcast %134 : vector<1x64xf32> to vector<256x64xf32>
    %136 = arith.addf %132, %135 : vector<256x64xf32>
    %cst_58 = arith.constant 1.000000e+02 : f32
    %137 = vector.broadcast %cst_58 : f32 to vector<256x64xf32>
    %138 = arith.mulf %137, %136 : vector<256x64xf32>
    %cst_59 = arith.constant 2.000000e+01 : f32
    %139 = vector.broadcast %cst_59 : f32 to vector<256x64xf32>
    %140 = arith.minimumf %138, %139 : vector<256x64xf32>
    %141 = math.exp %140 : vector<256x64xf32>
    %cst_60 = arith.constant 1.000000e+00 : f32
    %142 = vector.broadcast %cst_60 : f32 to vector<256x64xf32>
    %143 = arith.addf %142, %141 : vector<256x64xf32>
    %144 = math.log %143 : vector<256x64xf32>
    %cst_61 = arith.constant 1.000000e+02 : f32
    %145 = vector.broadcast %cst_61 : f32 to vector<256x64xf32>
    %146 = arith.divf %144, %145 : vector<256x64xf32>
    %cst_62 = arith.constant 2.000000e+01 : f32
    %147 = vector.broadcast %cst_62 : f32 to vector<256x64xf32>
    %148 = arith.cmpf ogt, %138, %147 : vector<256x64xf32>
    %149 = arith.select %148, %136, %146 : vector<256x64xi1>, vector<256x64xf32>
    %c0_63 = arith.constant 0 : index
    %c0_64 = arith.constant 0 : index
    %150 = vector.load %arg5[%c0_63, %c0_64] : memref<64x5xf32, #tpu.memory_space<vmem>>, vector<64x5xf32>
    %cst_65 = arith.constant dense<0.000000e+00> : vector<256x5xf32>
    %151 = tpu.matmul %149, %150, %cst_65 {dimension_numbers = #tpu.dot_dimension_numbers<[1], [0], [0], [1], [0, 0, 1, 1], [], []>} : vector<256x64xf32>, vector<64x5xf32>, vector<256x5xf32> -> vector<256x5xf32>
    %c0_66 = arith.constant 0 : index
    %c0_67 = arith.constant 0 : index
    %152 = vector.load %arg6[%c0_66, %c0_67] : memref<1x5xf32, #tpu.memory_space<vmem>>, vector<1x5xf32>
    %153 = vector.broadcast %152 : vector<1x5xf32> to vector<256x5xf32>
    %154 = arith.addf %151, %153 : vector<256x5xf32>
    %c0_68 = arith.constant 0 : index
    %c0_69 = arith.constant 0 : index
    %155 = vector.load %arg7[%c0_68, %c0_69] : memref<256x5xf32, #tpu.memory_space<vmem>>, vector<256x5xf32>
    tpu.vector_store %arg7[%c0_68, %c0_69], %154 {strides = array<i32>} : memref<256x5xf32, #tpu.memory_space<vmem>>, vector<256x5xf32>,
    return
  }
  func.func @transform_0(%arg0: i32) -> (i32, i32) {
    %c0_i32 = arith.constant 0 : i32
    %c0_i32_0 = arith.constant 0 : i32
    return %arg0, %c0_i32 : i32, i32
  }
  func.func @transform_1(%arg0: i32) -> (i32, i32) {
    %c0_i32 = arith.constant 0 : i32
    %c0_i32_0 = arith.constant 0 : i32
    %c0_i32_1 = arith.constant 0 : i32
    return %c0_i32, %c0_i32_0 : i32, i32
  }
  func.func @transform_2(%arg0: i32) -> (i32, i32, i32) {
    %c0_i32 = arith.constant 0 : i32
    %c0_i32_0 = arith.constant 0 : i32
    %c0_i32_1 = arith.constant 0 : i32
    %c0_i32_2 = arith.constant 0 : i32
    return %c0_i32, %c0_i32_0, %c0_i32_1 : i32, i32, i32
  }
  func.func @transform_3(%arg0: i32) -> (i32, i32, i32) {
    %c0_i32 = arith.constant 0 : i32
    %c0_i32_0 = arith.constant 0 : i32
    %c0_i32_1 = arith.constant 0 : i32
    %c0_i32_2 = arith.constant 0 : i32
    return %c0_i32, %c0_i32_0, %c0_i32_1 : i32, i32, i32
  }
  func.func @transform_4(%arg0: i32) -> (i32, i32) {
    %c0_i32 = arith.constant 0 : i32
    %c0_i32_0 = arith.constant 0 : i32
    %c0_i32_1 = arith.constant 0 : i32
    return %c0_i32, %c0_i32_0 : i32, i32
  }
  func.func @transform_5(%arg0: i32) -> (i32, i32) {
    %c0_i32 = arith.constant 0 : i32
    %c0_i32_0 = arith.constant 0 : i32
    %c0_i32_1 = arith.constant 0 : i32
    return %c0_i32, %c0_i32_0 : i32, i32
  }
  func.func @transform_6(%arg0: i32) -> (i32, i32) {
    %c0_i32 = arith.constant 0 : i32
    %c0_i32_0 = arith.constant 0 : i32
    return %arg0, %c0_i32 : i32, i32
  }
}

</mosaic_0001>

<llo_original>
// kernel: tpu_custom_call.1
$region0: #{tpu_custom_call.1}
  #allocation0 [shape = 'u32[]', space=smem, size = 0x4, offset = 0x4, fixed_abs, tag = 'smem constant byte address 0x4 - core index']
  #allocation1 [shape = 'u32[72,128]{1,0:T(1,128)}', space=vmem, size = 0x9000, scoped, tag = 'internal scratch']
  %s0 = inlined_call_operand.vmem [shape: f32[1024,3], index: 0, kind: input, shape index: {}]
  %s1 = inlined_call_operand.vmem [shape: f32[8,64], index: 1, kind: input, shape index: {}]
  %s2 = inlined_call_operand.vmem [shape: f32[5,64,64], index: 2, kind: input, shape index: {}]
  %s3 = inlined_call_operand.vmem [shape: f32[5,1,64], index: 3, kind: input, shape index: {}]
  %s4 = inlined_call_operand.vmem [shape: f32[64,5], index: 4, kind: input, shape index: {}]
  %s5 = inlined_call_operand.vmem [shape: f32[1,5], index: 5, kind: input, shape index: {}]
  %s6 = inlined_call_operand.vmem [shape: f32[1024,5], index: 6, kind: output, shape index: {}]
  %s7 = sld [smem:[#allocation0]]
  $region57: #{tpu_custom_call.1} parent=0
    _
  %s9 = ssub.s32 1, %s7
  %s10 = scalar_select 0, %s9, %s7
  loop: start=0, step=1, limit=6
  $region2: #{tpu_custom_call.1} parent=0 // loop_pre_header
    _
  $region3: #{tpu_custom_call.1} parent=0 // loop_header
    %s12 = sphi 0, %s16
    %p13 = scmp.ge.s32.totalorder %s12, 6
    %s22 = sphi 0, %s24
    %s25 = sphi 0, %s22
    %s26 = sphi 0, %s25
    %s42 = sphi 0, %s26
    %s46 = sphi 0, %s46
    %s48 = sphi 0, %s46
    %s49 = sphi 0, %s48
    %s63 = sphi 0, %s49
    %s67 = sphi 0, %s67
    %s69 = sphi 0, %s67
    %s70 = sphi 0, %s69
    %s84 = sphi 0, %s70
    %s88 = sphi 0, %s88
    %s90 = sphi 0, %s88
    %s91 = sphi 0, %s90
    %s105 = sphi 0, %s91
    %s109 = sphi 0, %s109
    %s111 = sphi 0, %s109
    %s112 = sphi 0, %s111
    %s126 = sphi 0, %s112
    %s130 = sphi 0, %s130
    %s132 = sphi 0, %s130
    %s133 = sphi 0, %s132
    %s147 = sphi 0, %s133
    %s153 = sphi 0, %s155
    %s156 = sphi 0, %s153
    %s157 = sphi 0, %s156
    %s173 = sphi 0, %s157
  $region4: #{tpu_custom_call.1} parent=0 // loop_header_branch
    %15 = sbr.rel (%p13) target = $region8
  $region5: #{tpu_custom_call.1} parent=0 // loop_body
    %s17 = ssub.s32 %s12, 1
    %s18 = ssub.s32 %s12, 2
    %s19 = sadd.s32 %s12, 1
    %s20 = ssub.s32 %s12, %s19
    %p21 = scmp.eq.s32.totalorder %s20, 0
    %s23 = sadd.s32 %s22, 1
    %s24 = scalar_select %p21, %s22, %s23
    %p27 = pneg %p21
    %p28 = scmp.eq.s32.totalorder %s12, 3
    %p29 = por %p27, %p28
    %p30 = scmp.ne.s32.totalorder %s22, %s25
    %p31 = scmp.eq.s32.totalorder %s12, 0
    %p32 = por %p30, %p31
    %p33 = scmp.ne.s32.totalorder %s22, %s25
    %p34 = scmp.eq.s32.totalorder %s17, 3
    %p35 = por %p33, %p34
    %p36 = scmp.ne.s32.totalorder %s25, %s26
    %p37 = scmp.eq.s32.totalorder %s17, 0
    %p38 = por %p36, %p37
    %p39 = scmp.ne.s32.totalorder %s25, %s26
    %p40 = scmp.eq.s32.totalorder %s18, 3
    %p41 = por %p39, %p40
    %p43 = scmp.ne.s32.totalorder %s26, %s42
    %p44 = scmp.eq.s32.totalorder %s18, 0
    %p45 = por %p43, %p44
    %s47 = sadd.s32 %s46, 1
    %p50 = scmp.eq.s32.totalorder %s12, 3
    %p51 = scmp.ne.s32.totalorder %s46, %s48
    %p52 = scmp.eq.s32.totalorder %s12, 0
    %p53 = por %p51, %p52
    %p54 = scmp.ne.s32.totalorder %s46, %s48
    %p55 = scmp.eq.s32.totalorder %s17, 3
    %p56 = por %p54, %p55
    %p57 = scmp.ne.s32.totalorder %s48, %s49
    %p58 = scmp.eq.s32.totalorder %s17, 0
    %p59 = por %p57, %p58
    %p60 = scmp.ne.s32.totalorder %s48, %s49
    %p61 = scmp.eq.s32.totalorder %s18, 3
    %p62 = por %p60, %p61
    %p64 = scmp.ne.s32.totalorder %s49, %s63
    %p65 = scmp.eq.s32.totalorder %s18, 0
    %p66 = por %p64, %p65
    %s68 = sadd.s32 %s67, 1
    %p71 = scmp.eq.s32.totalorder %s12, 3
    %p72 = scmp.ne.s32.totalorder %s67, %s69
    %p73 = scmp.eq.s32.totalorder %s12, 0
    %p74 = por %p72, %p73
    %p75 = scmp.ne.s32.totalorder %s67, %s69
    %p76 = scmp.eq.s32.totalorder %s17, 3
    %p77 = por %p75, %p76
    %p78 = scmp.ne.s32.totalorder %s69, %s70
    %p79 = scmp.eq.s32.totalorder %s17, 0
    %p80 = por %p78, %p79
    %p81 = scmp.ne.s32.totalorder %s69, %s70
    %p82 = scmp.eq.s32.totalorder %s18, 3
    %p83 = por %p81, %p82
    %p85 = scmp.ne.s32.totalorder %s70, %s84
    %p86 = scmp.eq.s32.totalorder %s18, 0
    %p87 = por %p85, %p86
    %s89 = sadd.s32 %s88, 1
    %p92 = scmp.eq.s32.totalorder %s12, 3
    %p93 = scmp.ne.s32.totalorder %s88, %s90
    %p94 = scmp.eq.s32.totalorder %s12, 0
    %p95 = por %p93, %p94
    %p96 = scmp.ne.s32.totalorder %s88, %s90
    %p97 = scmp.eq.s32.totalorder %s17, 3
    %p98 = por %p96, %p97
    %p99 = scmp.ne.s32.totalorder %s90, %s91
    %p100 = scmp.eq.s32.totalorder %s17, 0
    %p101 = por %p99, %p100
    %p102 = scmp.ne.s32.totalorder %s90, %s91
    %p103 = scmp.eq.s32.totalorder %s18, 3
    %p104 = por %p102, %p103
    %p106 = scmp.ne.s32.totalorder %s91, %s105
    %p107 = scmp.eq.s32.totalorder %s18, 0
    %p108 = por %p106, %p107
    %s110 = sadd.s32 %s109, 1
    %p113 = scmp.eq.s32.totalorder %s12, 3
    %p114 = scmp.ne.s32.totalorder %s109, %s111
    %p115 = scmp.eq.s32.totalorder %s12, 0
    %p116 = por %p114, %p115
    %p117 = scmp.ne.s32.totalorder %s109, %s111
    %p118 = scmp.eq.s32.totalorder %s17, 3
    %p119 = por %p117, %p118
    %p120 = scmp.ne.s32.totalorder %s111, %s112
    %p121 = scmp.eq.s32.totalorder %s17, 0
    %p122 = por %p120, %p121
    %p123 = scmp.ne.s32.totalorder %s111, %s112
    %p124 = scmp.eq.s32.totalorder %s18, 3
    %p125 = por %p123, %p124
    %p127 = scmp.ne.s32.totalorder %s112, %s126
    %p128 = scmp.eq.s32.totalorder %s18, 0
    %p129 = por %p127, %p128
    %s131 = sadd.s32 %s130, 1
    %p134 = scmp.eq.s32.totalorder %s12, 3
    %p135 = scmp.ne.s32.totalorder %s130, %s132
    %p136 = scmp.eq.s32.totalorder %s12, 0
    %p137 = por %p135, %p136
    %p138 = scmp.ne.s32.totalorder %s130, %s132
    %p139 = scmp.eq.s32.totalorder %s17, 3
    %p140 = por %p138, %p139
    %p141 = scmp.ne.s32.totalorder %s132, %s133
    %p142 = scmp.eq.s32.totalorder %s17, 0
    %p143 = por %p141, %p142
    %p144 = scmp.ne.s32.totalorder %s132, %s133
    %p145 = scmp.eq.s32.totalorder %s18, 3
    %p146 = por %p144, %p145
    %p148 = scmp.ne.s32.totalorder %s133, %s147
    %p149 = scmp.eq.s32.totalorder %s18, 0
    %p150 = por %p148, %p149
    %s151 = ssub.s32 %s12, %s19
    %p152 = scmp.eq.s32.totalorder %s151, 0
    %s154 = sadd.s32 %s153, 1
    %s155 = scalar_select %p152, %s153, %s154
    %p158 = pneg %p152
    %p159 = scmp.eq.s32.totalorder %s12, 3
    %p160 = por %p158, %p159
    %p161 = scmp.ne.s32.totalorder %s153, %s156
    %p162 = scmp.eq.s32.totalorder %s12, 0
    %p163 = por %p161, %p162
    %p164 = scmp.ne.s32.totalorder %s153, %s156
    %p165 = scmp.eq.s32.totalorder %s17, 3
    %p166 = por %p164, %p165
    %p167 = scmp.ne.s32.totalorder %s156, %s157
    %p168 = scmp.eq.s32.totalorder %s17, 0
    %p169 = por %p167, %p168
    %p170 = scmp.ne.s32.totalorder %s156, %s157
    %p171 = scmp.eq.s32.totalorder %s18, 3
    %p172 = por %p170, %p171
    %p174 = scmp.ne.s32.totalorder %s157, %s173
    %p175 = scmp.eq.s32.totalorder %s18, 0
    %p176 = por %p174, %p175
    %p177 = scmp.le.s32.totalorder 1, %s12
    %p178 = scmp.lt.s32.totalorder %s12, 5
    %p179 = pnand %p177, %p178
    %p180 = pneg %p179
    // Predicated region
    $region9: #{tpu_custom_call.1} parent=5 // pred_check
      _
    $region10: #{tpu_custom_call.1} parent=5 // pred_check_branch
      %182 = sbr.rel (%p179) target = $region12
    $region11: #{tpu_custom_call.1} parent=5 // pred_region
      %s183 = ssub.s32 %s12, 1
      // Predicated region
      $region13: #{tpu_custom_call.1} parent=11 // pred_check
        %p184 = pneg %p59
      $region14: #{tpu_custom_call.1} parent=11 // pred_check_branch
        %186 = sbr.rel (%p184) target = $region16
      $region15: #{tpu_custom_call.1} parent=11 // pred_region
        _
      $region16: #{tpu_custom_call.1} parent=11 // pred_fallthru
        _
      // Predicated region
      $region17: #{tpu_custom_call.1} parent=11 // pred_check
        %p187 = pneg %p80
      $region18: #{tpu_custom_call.1} parent=11 // pred_check_branch
        %189 = sbr.rel (%p187) target = $region20
      $region19: #{tpu_custom_call.1} parent=11 // pred_region
        _
      $region20: #{tpu_custom_call.1} parent=11 // pred_fallthru
        _
      // Predicated region
      $region21: #{tpu_custom_call.1} parent=11 // pred_check
        %p190 = pneg %p101
      $region22: #{tpu_custom_call.1} parent=11 // pred_check_branch
        %192 = sbr.rel (%p190) target = $region24
      $region23: #{tpu_custom_call.1} parent=11 // pred_region
        _
      $region24: #{tpu_custom_call.1} parent=11 // pred_fallthru
        _
      // Predicated region
      $region25: #{tpu_custom_call.1} parent=11 // pred_check
        %p193 = pneg %p122
      $region26: #{tpu_custom_call.1} parent=11 // pred_check_branch
        %195 = sbr.rel (%p193) target = $region28
      $region27: #{tpu_custom_call.1} parent=11 // pred_region
        _
      $region28: #{tpu_custom_call.1} parent=11 // pred_fallthru
        _
      // Predicated region
      $region29: #{tpu_custom_call.1} parent=11 // pred_check
        %p196 = pneg %p143
      $region30: #{tpu_custom_call.1} parent=11 // pred_check_branch
        %198 = sbr.rel (%p196) target = $region32
      $region31: #{tpu_custom_call.1} parent=11 // pred_region
        _
      $region32: #{tpu_custom_call.1} parent=11 // pred_fallthru
        _
    $region12: #{tpu_custom_call.1} parent=5 // pred_fallthru
      _
    %p199 = scmp.lt.s32.totalorder %s12, 4
    // Predicated region
    $region33: #{tpu_custom_call.1} parent=5 // pred_check
      %p200 = pneg %p199
    $region34: #{tpu_custom_call.1} parent=5 // pred_check_branch
      %202 = sbr.rel (%p200) target = $region36
    $region35: #{tpu_custom_call.1} parent=5 // pred_region
      // Predicated region
      $region37: #{tpu_custom_call.1} parent=35 // pred_check
        %p203 = pneg %p32
      $region38: #{tpu_custom_call.1} parent=35 // pred_check_branch
        %205 = sbr.rel (%p203) target = $region40
      $region39: #{tpu_custom_call.1} parent=35 // pred_region
        %s206 = smul.u32 32, %s12
        %p207 = scmp.lt.s32.totalorder %s206, 127
        %s208 = scalar_select %p207, %s206, 127
        %s209 = smul.addr %s208, 8
        %s210 = scalar_lea.vmem %s0, %s209
        %s211 = smul.u32 32, %s12
      $region40: #{tpu_custom_call.1} parent=35 // pred_fallthru
        _
    $region36: #{tpu_custom_call.1} parent=5 // pred_fallthru
      _
    %p212 = scmp.le.s32.totalorder 1, %s12
    %p213 = scmp.lt.s32.totalorder %s12, 5
    %p214 = pnand %p212, %p213
    %p215 = pneg %p214
    // Predicated region
    $region41: #{tpu_custom_call.1} parent=5 // pred_check
      _
    $region42: #{tpu_custom_call.1} parent=5 // pred_check_branch
      %217 = sbr.rel (%p214) target = $region44
    $region43: #{tpu_custom_call.1} parent=5 // pred_region
      %s218 = ssub.s32 %s12, 1
      %s219 = smul.u32 32, %s17
      %p220 = scmp.lt.s32.totalorder %s219, 127
      %s221 = scalar_select %p220, %s219, 127
      %s222 = smul.addr %s221, 8
      %s223 = scalar_lea.vmem %s0, %s222
      %p224 = pneg %p38
      %p225 = pneg %p35
      %p226 = pneg %p59
      %p227 = pneg %p56
      %p228 = pneg %p80
      %p229 = pneg %p77
      %p230 = pneg %p101
      %p231 = pneg %p98
      %p232 = pneg %p122
      %p233 = pneg %p119
      %p234 = pneg %p143
      %p235 = pneg %p140
      %p236 = pneg %p169
      %p237 = pneg %p166
      %s238 = smul.u32 32, %s17
      %p239 = scmp.lt.s32.totalorder %s238, 127
      %s240 = scalar_select %p239, %s238, 127
      %s241 = smul.addr %s240, 8
      %s242 = scalar_lea.vmem %s6, %s241
      %s243 = smul.u32 32, %s17
      %p244 = scmp.lt.s32.totalorder %s243, 127
      %s245 = scalar_select %p244, %s243, 127
      %s246 = smul.addr %s245, 8
      %s247 = scalar_lea.vmem %s0, %s246
      %s248 = smul.u32 32, %s17
      %s249 = smul.u32 32, %s17
      %p250 = scmp.lt.s32.totalorder %s249, 127
      %s251 = scalar_select %p250, %s249, 127
      %s252 = smul.addr %s251, 8
      %s253 = scalar_lea.vmem %s6, %s252
      %s254 = smul.u32 32, %s17
      %v255 = vld [vmem:[%s247] sm:$0xff]
      %v256 = vld [vmem:[%s247 + $0x8] sm:$0xff]
      %v257 = vld [vmem:[%s247 + $0x10] sm:$0xff]
      %v258 = vld [vmem:[%s247 + $0x18] sm:$0xff]
      %v259 = vld [vmem:[%s247 + $0x20] sm:$0xff]
      %v260 = vld [vmem:[%s247 + $0x28] sm:$0xff]
      %v261 = vld [vmem:[%s247 + $0x30] sm:$0xff]
      %v262 = vld [vmem:[%s247 + $0x38] sm:$0xff]
      %v263 = vld [vmem:[%s247 + $0x40] sm:$0xff]
      %v264 = vld [vmem:[%s247 + $0x48] sm:$0xff]
      %v265 = vld [vmem:[%s247 + $0x50] sm:$0xff]
      %v266 = vld [vmem:[%s247 + $0x58] sm:$0xff]
      %v267 = vld [vmem:[%s247 + $0x60] sm:$0xff]
      %v268 = vld [vmem:[%s247 + $0x68] sm:$0xff]
      %v269 = vld [vmem:[%s247 + $0x70] sm:$0xff]
      %v270 = vld [vmem:[%s247 + $0x78] sm:$0xff]
      %v271 = vld [vmem:[%s247 + $0x80] sm:$0xff]
      %v272 = vld [vmem:[%s247 + $0x88] sm:$0xff]
      %v273 = vld [vmem:[%s247 + $0x90] sm:$0xff]
      %v274 = vld [vmem:[%s247 + $0x98] sm:$0xff]
      %v275 = vld [vmem:[%s247 + $0xa0] sm:$0xff]
      %v276 = vld [vmem:[%s247 + $0xa8] sm:$0xff]
      %v277 = vld [vmem:[%s247 + $0xb0] sm:$0xff]
      %v278 = vld [vmem:[%s247 + $0xb8] sm:$0xff]
      %v279 = vld [vmem:[%s247 + $0xc0] sm:$0xff]
      %v280 = vld [vmem:[%s247 + $0xc8] sm:$0xff]
      %v281 = vld [vmem:[%s247 + $0xd0] sm:$0xff]
      %v282 = vld [vmem:[%s247 + $0xd8] sm:$0xff]
      %v283 = vld [vmem:[%s247 + $0xe0] sm:$0xff]
      %v284 = vld [vmem:[%s247 + $0xe8] sm:$0xff]
      %v285 = vld [vmem:[%s247 + $0xf0] sm:$0xff]
      %v286 = vld [vmem:[%s247 + $0xf8] sm:$0xff]
      %v287 = vld [vmem:[%s1] sm:$0xff]
      %289 = vset.pattern.permute.xlu0 0
      %290 = vperm.xlu0 %289, %v255
      %v291 = vpop.permute.xlu0 %290
      %294 = vset.pattern.permute.xlu0 0
      %295 = vperm.xlu0 %294, %v256
      %v296 = vpop.permute.xlu0 %295
      %299 = vset.pattern.permute.xlu0 0
      %300 = vperm.xlu0 %299, %v257
      %v301 = vpop.permute.xlu0 %300
      %304 = vset.pattern.permute.xlu0 0
      %305 = vperm.xlu0 %304, %v258
      %v306 = vpop.permute.xlu0 %305
      %309 = vset.pattern.permute.xlu0 0
      %310 = vperm.xlu0 %309, %v259
      %v311 = vpop.permute.xlu0 %310
      %314 = vset.pattern.permute.xlu0 0
      %315 = vperm.xlu0 %314, %v260
      %v316 = vpop.permute.xlu0 %315
      %319 = vset.pattern.permute.xlu0 0
      %320 = vperm.xlu0 %319, %v261
      %v321 = vpop.permute.xlu0 %320
      %324 = vset.pattern.permute.xlu0 0
      %325 = vperm.xlu0 %324, %v262
      %v326 = vpop.permute.xlu0 %325
      %329 = vset.pattern.permute.xlu0 0
      %330 = vperm.xlu0 %329, %v263
      %v331 = vpop.permute.xlu0 %330
      %334 = vset.pattern.permute.xlu0 0
      %335 = vperm.xlu0 %334, %v264
      %v336 = vpop.permute.xlu0 %335
      %339 = vset.pattern.permute.xlu0 0
      %340 = vperm.xlu0 %339, %v265
      %v341 = vpop.permute.xlu0 %340
      %344 = vset.pattern.permute.xlu0 0
      %345 = vperm.xlu0 %344, %v266
      %v346 = vpop.permute.xlu0 %345
      %349 = vset.pattern.permute.xlu0 0
      %350 = vperm.xlu0 %349, %v267
      %v351 = vpop.permute.xlu0 %350
      %354 = vset.pattern.permute.xlu0 0
      %355 = vperm.xlu0 %354, %v268
      %v356 = vpop.permute.xlu0 %355
      %359 = vset.pattern.permute.xlu0 0
      %360 = vperm.xlu0 %359, %v269
      %v361 = vpop.permute.xlu0 %360
      %364 = vset.pattern.permute.xlu0 0
      %365 = vperm.xlu0 %364, %v270
      %v366 = vpop.permute.xlu0 %365
      %369 = vset.pattern.permute.xlu0 0
      %370 = vperm.xlu0 %369, %v271
      %v371 = vpop.permute.xlu0 %370
      %374 = vset.pattern.permute.xlu0 0
      %375 = vperm.xlu0 %374, %v272
      %v376 = vpop.permute.xlu0 %375
      %379 = vset.pattern.permute.xlu0 0
      %380 = vperm.xlu0 %379, %v273
      %v381 = vpop.permute.xlu0 %380
      %384 = vset.pattern.permute.xlu0 0
      %385 = vperm.xlu0 %384, %v274
      %v386 = vpop.permute.xlu0 %385
      %389 = vset.pattern.permute.xlu0 0
      %390 = vperm.xlu0 %389, %v275
      %v391 = vpop.permute.xlu0 %390
      %394 = vset.pattern.permute.xlu0 0
      %395 = vperm.xlu0 %394, %v276
      %v396 = vpop.permute.xlu0 %395
      %399 = vset.pattern.permute.xlu0 0
      %400 = vperm.xlu0 %399, %v277
      %v401 = vpop.permute.xlu0 %400
      %404 = vset.pattern.permute.xlu0 0
      %405 = vperm.xlu0 %404, %v278
      %v406 = vpop.permute.xlu0 %405
      %409 = vset.pattern.permute.xlu0 0
      %410 = vperm.xlu0 %409, %v279
      %v411 = vpop.permute.xlu0 %410
      %414 = vset.pattern.permute.xlu0 0
      %415 = vperm.xlu0 %414, %v280
      %v416 = vpop.permute.xlu0 %415
      %419 = vset.pattern.permute.xlu0 0
      %420 = vperm.xlu0 %419, %v281
      %v421 = vpop.permute.xlu0 %420
      %424 = vset.pattern.permute.xlu0 0
      %425 = vperm.xlu0 %424, %v282
      %v426 = vpop.permute.xlu0 %425
      %429 = vset.pattern.permute.xlu0 0
      %430 = vperm.xlu0 %429, %v283
      %v431 = vpop.permute.xlu0 %430
      %434 = vset.pattern.permute.xlu0 0
      %435 = vperm.xlu0 %434, %v284
      %v436 = vpop.permute.xlu0 %435
      %439 = vset.pattern.permute.xlu0 0
      %440 = vperm.xlu0 %439, %v285
      %v441 = vpop.permute.xlu0 %440
      %444 = vset.pattern.permute.xlu0 0
      %445 = vperm.xlu0 %444, %v286
      %v446 = vpop.permute.xlu0 %445
      %v448 = vperm.slane %v287, 0
      %v449 = vmul.f32 %v291, %v448
      %v450 = vmul.f32 %v296, %v448
      %v451 = vmul.f32 %v301, %v448
      %v452 = vmul.f32 %v306, %v448
      %v453 = vmul.f32 %v311, %v448
      %v454 = vmul.f32 %v316, %v448
      %v455 = vmul.f32 %v321, %v448
      %v456 = vmul.f32 %v326, %v448
      %v457 = vmul.f32 %v331, %v448
      %v458 = vmul.f32 %v336, %v448
      %v459 = vmul.f32 %v341, %v448
      %v460 = vmul.f32 %v346, %v448
      %v461 = vmul.f32 %v351, %v448
      %v462 = vmul.f32 %v356, %v448
      %v463 = vmul.f32 %v361, %v448
      %v464 = vmul.f32 %v366, %v448
      %v465 = vmul.f32 %v371, %v448
      %v466 = vmul.f32 %v376, %v448
      %v467 = vmul.f32 %v381, %v448
      %v468 = vmul.f32 %v386, %v448
      %v469 = vmul.f32 %v391, %v448
      %v470 = vmul.f32 %v396, %v448
      %v471 = vmul.f32 %v401, %v448
      %v472 = vmul.f32 %v406, %v448
      %v473 = vmul.f32 %v411, %v448
      %v474 = vmul.f32 %v416, %v448
      %v475 = vmul.f32 %v421, %v448
      %v476 = vmul.f32 %v426, %v448
      %v477 = vmul.f32 %v431, %v448
      %v478 = vmul.f32 %v436, %v448
      %v479 = vmul.f32 %v441, %v448
      %v480 = vmul.f32 %v446, %v448
      %481 = vset.pattern.permute.xlu0 1
      %482 = vperm.xlu0 %481, %v255
      %v483 = vpop.permute.xlu0 %482
      %485 = vset.pattern.permute.xlu0 1
      %486 = vperm.xlu0 %485, %v256
      %v487 = vpop.permute.xlu0 %486
      %489 = vset.pattern.permute.xlu0 1
      %490 = vperm.xlu0 %489, %v257
      %v491 = vpop.permute.xlu0 %490
      %493 = vset.pattern.permute.xlu0 1
      %494 = vperm.xlu0 %493, %v258
      %v495 = vpop.permute.xlu0 %494
      %497 = vset.pattern.permute.xlu0 1
      %498 = vperm.xlu0 %497, %v259
      %v499 = vpop.permute.xlu0 %498
      %501 = vset.pattern.permute.xlu0 1
      %502 = vperm.xlu0 %501, %v260
      %v503 = vpop.permute.xlu0 %502
      %505 = vset.pattern.permute.xlu0 1
      %506 = vperm.xlu0 %505, %v261
      %v507 = vpop.permute.xlu0 %506
      %509 = vset.pattern.permute.xlu0 1
      %510 = vperm.xlu0 %509, %v262
      %v511 = vpop.permute.xlu0 %510
      %513 = vset.pattern.permute.xlu0 1
      %514 = vperm.xlu0 %513, %v263
      %v515 = vpop.permute.xlu0 %514
      %517 = vset.pattern.permute.xlu0 1
      %518 = vperm.xlu0 %517, %v264
      %v519 = vpop.permute.xlu0 %518
      %521 = vset.pattern.permute.xlu0 1
      %522 = vperm.xlu0 %521, %v265
      %v523 = vpop.permute.xlu0 %522
      %525 = vset.pattern.permute.xlu0 1
      %526 = vperm.xlu0 %525, %v266
      %v527 = vpop.permute.xlu0 %526
      %529 = vset.pattern.permute.xlu0 1
      %530 = vperm.xlu0 %529, %v267
      %v531 = vpop.permute.xlu0 %530
      %533 = vset.pattern.permute.xlu0 1
      %534 = vperm.xlu0 %533, %v268
      %v535 = vpop.permute.xlu0 %534
      %537 = vset.pattern.permute.xlu0 1
      %538 = vperm.xlu0 %537, %v269
      %v539 = vpop.permute.xlu0 %538
      %541 = vset.pattern.permute.xlu0 1
      %542 = vperm.xlu0 %541, %v270
      %v543 = vpop.permute.xlu0 %542
      %545 = vset.pattern.permute.xlu0 1
      %546 = vperm.xlu0 %545, %v271
      %v547 = vpop.permute.xlu0 %546
      %549 = vset.pattern.permute.xlu0 1
      %550 = vperm.xlu0 %549, %v272
      %v551 = vpop.permute.xlu0 %550
      %553 = vset.pattern.permute.xlu0 1
      %554 = vperm.xlu0 %553, %v273
      %v555 = vpop.permute.xlu0 %554
      %557 = vset.pattern.permute.xlu0 1
      %558 = vperm.xlu0 %557, %v274
      %v559 = vpop.permute.xlu0 %558
      %561 = vset.pattern.permute.xlu0 1
      %562 = vperm.xlu0 %561, %v275
      %v563 = vpop.permute.xlu0 %562
      %565 = vset.pattern.permute.xlu0 1
      %566 = vperm.xlu0 %565, %v276
      %v567 = vpop.permute.xlu0 %566
      %569 = vset.pattern.permute.xlu0 1
      %570 = vperm.xlu0 %569, %v277
      %v571 = vpop.permute.xlu0 %570
      %573 = vset.pattern.permute.xlu0 1
      %574 = vperm.xlu0 %573, %v278
      %v575 = vpop.permute.xlu0 %574
      %577 = vset.pattern.permute.xlu0 1
      %578 = vperm.xlu0 %577, %v279
      %v579 = vpop.permute.xlu0 %578
      %581 = vset.pattern.permute.xlu0 1
      %582 = vperm.xlu0 %581, %v280
      %v583 = vpop.permute.xlu0 %582
      %585 = vset.pattern.permute.xlu0 1
      %586 = vperm.xlu0 %585, %v281
      %v587 = vpop.permute.xlu0 %586
      %589 = vset.pattern.permute.xlu0 1
      %590 = vperm.xlu0 %589, %v282
      %v591 = vpop.permute.xlu0 %590
      %593 = vset.pattern.permute.xlu0 1
      %594 = vperm.xlu0 %593, %v283
      %v595 = vpop.permute.xlu0 %594
      %597 = vset.pattern.permute.xlu0 1
      %598 = vperm.xlu0 %597, %v284
      %v599 = vpop.permute.xlu0 %598
      %601 = vset.pattern.permute.xlu0 1
      %602 = vperm.xlu0 %601, %v285
      %v603 = vpop.permute.xlu0 %602
      %605 = vset.pattern.permute.xlu0 1
      %606 = vperm.xlu0 %605, %v286
      %v607 = vpop.permute.xlu0 %606
      %v609 = vperm.slane %v287, 1
      %v610 = vmul.f32 %v483, %v609
      %v611 = vmul.f32 %v487, %v609
      %v612 = vmul.f32 %v491, %v609
      %v613 = vmul.f32 %v495, %v609
      %v614 = vmul.f32 %v499, %v609
      %v615 = vmul.f32 %v503, %v609
      %v616 = vmul.f32 %v507, %v609
      %v617 = vmul.f32 %v511, %v609
      %v618 = vmul.f32 %v515, %v609
      %v619 = vmul.f32 %v519, %v609
      %v620 = vmul.f32 %v523, %v609
      %v621 = vmul.f32 %v527, %v609
      %v622 = vmul.f32 %v531, %v609
      %v623 = vmul.f32 %v535, %v609
      %v624 = vmul.f32 %v539, %v609
      %v625 = vmul.f32 %v543, %v609
      %v626 = vmul.f32 %v547, %v609
      %v627 = vmul.f32 %v551, %v609
      %v628 = vmul.f32 %v555, %v609
      %v629 = vmul.f32 %v559, %v609
      %v630 = vmul.f32 %v563, %v609
      %v631 = vmul.f32 %v567, %v609
      %v632 = vmul.f32 %v571, %v609
      %v633 = vmul.f32 %v575, %v609
      %v634 = vmul.f32 %v579, %v609
      %v635 = vmul.f32 %v583, %v609
      %v636 = vmul.f32 %v587, %v609
      %v637 = vmul.f32 %v591, %v609
      %v638 = vmul.f32 %v595, %v609
      %v639 = vmul.f32 %v599, %v609
      %v640 = vmul.f32 %v603, %v609
      %v641 = vmul.f32 %v607, %v609
      %v642 = vadd.f32 %v449, %v610
      %v643 = vadd.f32 %v450, %v611
      %v644 = vadd.f32 %v451, %v612
      %v645 = vadd.f32 %v452, %v613
      %v646 = vadd.f32 %v453, %v614
      %v647 = vadd.f32 %v454, %v615
      %v648 = vadd.f32 %v455, %v616
      %v649 = vadd.f32 %v456, %v617
      %v650 = vadd.f32 %v457, %v618
      %v651 = vadd.f32 %v458, %v619
      %v652 = vadd.f32 %v459, %v620
      %v653 = vadd.f32 %v460, %v621
      %v654 = vadd.f32 %v461, %v622
      %v655 = vadd.f32 %v462, %v623
      %v656 = vadd.f32 %v463, %v624
      %v657 = vadd.f32 %v464, %v625
      %v658 = vadd.f32 %v465, %v626
      %v659 = vadd.f32 %v466, %v627
      %v660 = vadd.f32 %v467, %v628
      %v661 = vadd.f32 %v468, %v629
      %v662 = vadd.f32 %v469, %v630
      %v663 = vadd.f32 %v470, %v631
      %v664 = vadd.f32 %v471, %v632
      %v665 = vadd.f32 %v472, %v633
      %v666 = vadd.f32 %v473, %v634
      %v667 = vadd.f32 %v474, %v635
      %v668 = vadd.f32 %v475, %v636
      %v669 = vadd.f32 %v476, %v637
      %v670 = vadd.f32 %v477, %v638
      %v671 = vadd.f32 %v478, %v639
      %v672 = vadd.f32 %v479, %v640
      %v673 = vadd.f32 %v480, %v641
      %674 = vset.pattern.permute.xlu0 2
      %675 = vperm.xlu0 %674, %v255
      %v676 = vpop.permute.xlu0 %675
      %678 = vset.pattern.permute.xlu0 2
      %679 = vperm.xlu0 %678, %v256
      %v680 = vpop.permute.xlu0 %679
      %682 = vset.pattern.permute.xlu0 2
      %683 = vperm.xlu0 %682, %v257
      %v684 = vpop.permute.xlu0 %683
      %686 = vset.pattern.permute.xlu0 2
      %687 = vperm.xlu0 %686, %v258
      %v688 = vpop.permute.xlu0 %687
      %690 = vset.pattern.permute.xlu0 2
      %691 = vperm.xlu0 %690, %v259
      %v692 = vpop.permute.xlu0 %691
      %694 = vset.pattern.permute.xlu0 2
      %695 = vperm.xlu0 %694, %v260
      %v696 = vpop.permute.xlu0 %695
      %698 = vset.pattern.permute.xlu0 2
      %699 = vperm.xlu0 %698, %v261
      %v700 = vpop.permute.xlu0 %699
      %702 = vset.pattern.permute.xlu0 2
      %703 = vperm.xlu0 %702, %v262
      %v704 = vpop.permute.xlu0 %703
      %706 = vset.pattern.permute.xlu0 2
      %707 = vperm.xlu0 %706, %v263
      %v708 = vpop.permute.xlu0 %707
      %710 = vset.pattern.permute.xlu0 2
      %711 = vperm.xlu0 %710, %v264
      %v712 = vpop.permute.xlu0 %711
      %714 = vset.pattern.permute.xlu0 2
      %715 = vperm.xlu0 %714, %v265
      %v716 = vpop.permute.xlu0 %715
      %718 = vset.pattern.permute.xlu0 2
      %719 = vperm.xlu0 %718, %v266
      %v720 = vpop.permute.xlu0 %719
      %722 = vset.pattern.permute.xlu0 2
      %723 = vperm.xlu0 %722, %v267
      %v724 = vpop.permute.xlu0 %723
      %726 = vset.pattern.permute.xlu0 2
      %727 = vperm.xlu0 %726, %v268
      %v728 = vpop.permute.xlu0 %727
      %730 = vset.pattern.permute.xlu0 2
      %731 = vperm.xlu0 %730, %v269
      %v732 = vpop.permute.xlu0 %731
      %734 = vset.pattern.permute.xlu0 2
      %735 = vperm.xlu0 %734, %v270
      %v736 = vpop.permute.xlu0 %735
      %738 = vset.pattern.permute.xlu0 2
      %739 = vperm.xlu0 %738, %v271
      %v740 = vpop.permute.xlu0 %739
      %742 = vset.pattern.permute.xlu0 2
      %743 = vperm.xlu0 %742, %v272
      %v744 = vpop.permute.xlu0 %743
      %746 = vset.pattern.permute.xlu0 2
      %747 = vperm.xlu0 %746, %v273
      %v748 = vpop.permute.xlu0 %747
      %750 = vset.pattern.permute.xlu0 2
      %751 = vperm.xlu0 %750, %v274
      %v752 = vpop.permute.xlu0 %751
      %754 = vset.pattern.permute.xlu0 2
      %755 = vperm.xlu0 %754, %v275
      %v756 = vpop.permute.xlu0 %755
      %758 = vset.pattern.permute.xlu0 2
      %759 = vperm.xlu0 %758, %v276
      %v760 = vpop.permute.xlu0 %759
      %762 = vset.pattern.permute.xlu0 2
      %763 = vperm.xlu0 %762, %v277
      %v764 = vpop.permute.xlu0 %763
      %766 = vset.pattern.permute.xlu0 2
      %767 = vperm.xlu0 %766, %v278
      %v768 = vpop.permute.xlu0 %767
      %770 = vset.pattern.permute.xlu0 2
      %771 = vperm.xlu0 %770, %v279
      %v772 = vpop.permute.xlu0 %771
      %774 = vset.pattern.permute.xlu0 2
      %775 = vperm.xlu0 %774, %v280
      %v776 = vpop.permute.xlu0 %775
      %778 = vset.pattern.permute.xlu0 2
      %779 = vperm.xlu0 %778, %v281
      %v780 = vpop.permute.xlu0 %779
      %782 = vset.pattern.permute.xlu0 2
      %783 = vperm.xlu0 %782, %v282
      %v784 = vpop.permute.xlu0 %783
      %786 = vset.pattern.permute.xlu0 2
      %787 = vperm.xlu0 %786, %v283
      %v788 = vpop.permute.xlu0 %787
      %790 = vset.pattern.permute.xlu0 2
      %791 = vperm.xlu0 %790, %v284
      %v792 = vpop.permute.xlu0 %791
      %794 = vset.pattern.permute.xlu0 2
      %795 = vperm.xlu0 %794, %v285
      %v796 = vpop.permute.xlu0 %795
      %798 = vset.pattern.permute.xlu0 2
      %799 = vperm.xlu0 %798, %v286
      %v800 = vpop.permute.xlu0 %799
      %v802 = vperm.slane %v287, 2
      %v803 = vmul.f32 %v676, %v802
      %v804 = vmul.f32 %v680, %v802
      %v805 = vmul.f32 %v684, %v802
      %v806 = vmul.f32 %v688, %v802
      %v807 = vmul.f32 %v692, %v802
      %v808 = vmul.f32 %v696, %v802
      %v809 = vmul.f32 %v700, %v802
      %v810 = vmul.f32 %v704, %v802
      %v811 = vmul.f32 %v708, %v802
      %v812 = vmul.f32 %v712, %v802
      %v813 = vmul.f32 %v716, %v802
      %v814 = vmul.f32 %v720, %v802
      %v815 = vmul.f32 %v724, %v802
      %v816 = vmul.f32 %v728, %v802
      %v817 = vmul.f32 %v732, %v802
      %v818 = vmul.f32 %v736, %v802
      %v819 = vmul.f32 %v740, %v802
      %v820 = vmul.f32 %v744, %v802
      %v821 = vmul.f32 %v748, %v802
      %v822 = vmul.f32 %v752, %v802
      %v823 = vmul.f32 %v756, %v802
      %v824 = vmul.f32 %v760, %v802
      %v825 = vmul.f32 %v764, %v802
      %v826 = vmul.f32 %v768, %v802
      %v827 = vmul.f32 %v772, %v802
      %v828 = vmul.f32 %v776, %v802
      %v829 = vmul.f32 %v780, %v802
      %v830 = vmul.f32 %v784, %v802
      %v831 = vmul.f32 %v788, %v802
      %v832 = vmul.f32 %v792, %v802
      %v833 = vmul.f32 %v796, %v802
      %v834 = vmul.f32 %v800, %v802
      %v835 = vadd.f32 %v642, %v803
      %v836 = vadd.f32 %v643, %v804
      %v837 = vadd.f32 %v644, %v805
      %v838 = vadd.f32 %v645, %v806
      %v839 = vadd.f32 %v646, %v807
      %v840 = vadd.f32 %v647, %v808
      %v841 = vadd.f32 %v648, %v809
      %v842 = vadd.f32 %v649, %v810
      %v843 = vadd.f32 %v650, %v811
      %v844 = vadd.f32 %v651, %v812
      %v845 = vadd.f32 %v652, %v813
      %v846 = vadd.f32 %v653, %v814
      %v847 = vadd.f32 %v654, %v815
      %v848 = vadd.f32 %v655, %v816
      %v849 = vadd.f32 %v656, %v817
      %v850 = vadd.f32 %v657, %v818
      %v851 = vadd.f32 %v658, %v819
      %v852 = vadd.f32 %v659, %v820
      %v853 = vadd.f32 %v660, %v821
      %v854 = vadd.f32 %v661, %v822
      %v855 = vadd.f32 %v662, %v823
      %v856 = vadd.f32 %v663, %v824
      %v857 = vadd.f32 %v664, %v825
      %v858 = vadd.f32 %v665, %v826
      %v859 = vadd.f32 %v666, %v827
      %v860 = vadd.f32 %v667, %v828
      %v861 = vadd.f32 %v668, %v829
      %v862 = vadd.f32 %v669, %v830
      %v863 = vadd.f32 %v670, %v831
      %v864 = vadd.f32 %v671, %v832
      %v865 = vadd.f32 %v672, %v833
      %v866 = vadd.f32 %v673, %v834
      %v867 = vperm.slane %v287, 6
      %v868 = vadd.f32 %v835, %v867
      %v869 = vadd.f32 %v836, %v867
      %v870 = vadd.f32 %v837, %v867
      %v871 = vadd.f32 %v838, %v867
      %v872 = vadd.f32 %v839, %v867
      %v873 = vadd.f32 %v840, %v867
      %v874 = vadd.f32 %v841, %v867
      %v875 = vadd.f32 %v842, %v867
      %v876 = vadd.f32 %v843, %v867
      %v877 = vadd.f32 %v844, %v867
      %v878 = vadd.f32 %v845, %v867
      %v879 = vadd.f32 %v846, %v867
      %v880 = vadd.f32 %v847, %v867
      %v881 = vadd.f32 %v848, %v867
      %v882 = vadd.f32 %v849, %v867
      %v883 = vadd.f32 %v850, %v867
      %v884 = vadd.f32 %v851, %v867
      %v885 = vadd.f32 %v852, %v867
      %v886 = vadd.f32 %v853, %v867
      %v887 = vadd.f32 %v854, %v867
      %v888 = vadd.f32 %v855, %v867
      %v889 = vadd.f32 %v856, %v867
      %v890 = vadd.f32 %v857, %v867
      %v891 = vadd.f32 %v858, %v867
      %v892 = vadd.f32 %v859, %v867
      %v893 = vadd.f32 %v860, %v867
      %v894 = vadd.f32 %v861, %v867
      %v895 = vadd.f32 %v862, %v867
      %v896 = vadd.f32 %v863, %v867
      %v897 = vadd.f32 %v864, %v867
      %v898 = vadd.f32 %v865, %v867
      %v899 = vadd.f32 %v866, %v867
      %v900 = vmul.f32 %v868, 100.0
      %v901 = vmul.f32 %v869, 100.0
      %v902 = vmul.f32 %v870, 100.0
      %v903 = vmul.f32 %v871, 100.0
      %v904 = vmul.f32 %v872, 100.0
      %v905 = vmul.f32 %v873, 100.0
      %v906 = vmul.f32 %v874, 100.0
      %v907 = vmul.f32 %v875, 100.0
      %v908 = vmul.f32 %v876, 100.0
      %v909 = vmul.f32 %v877, 100.0
      %v910 = vmul.f32 %v878, 100.0
      %v911 = vmul.f32 %v879, 100.0
      %v912 = vmul.f32 %v880, 100.0
      %v913 = vmul.f32 %v881, 100.0
      %v914 = vmul.f32 %v882, 100.0
      %v915 = vmul.f32 %v883, 100.0
      %v916 = vmul.f32 %v884, 100.0
      %v917 = vmul.f32 %v885, 100.0
      %v918 = vmul.f32 %v886, 100.0
      %v919 = vmul.f32 %v887, 100.0
      %v920 = vmul.f32 %v888, 100.0
      %v921 = vmul.f32 %v889, 100.0
      %v922 = vmul.f32 %v890, 100.0
      %v923 = vmul.f32 %v891, 100.0
      %v924 = vmul.f32 %v892, 100.0
      %v925 = vmul.f32 %v893, 100.0
      %v926 = vmul.f32 %v894, 100.0
      %v927 = vmul.f32 %v895, 100.0
      %v928 = vmul.f32 %v896, 100.0
      %v929 = vmul.f32 %v897, 100.0
      %v930 = vmul.f32 %v898, 100.0
      %v931 = vmul.f32 %v899, 100.0
      %v932 = vmin.f32 %v900, 20.0
      %v933 = vmin.f32 %v901, 20.0
      %v934 = vmin.f32 %v902, 20.0
      %v935 = vmin.f32 %v903, 20.0
      %v936 = vmin.f32 %v904, 20.0
      %v937 = vmin.f32 %v905, 20.0
      %v938 = vmin.f32 %v906, 20.0
      %v939 = vmin.f32 %v907, 20.0
      %v940 = vmin.f32 %v908, 20.0
      %v941 = vmin.f32 %v909, 20.0
      %v942 = vmin.f32 %v910, 20.0
      %v943 = vmin.f32 %v911, 20.0
      %v944 = vmin.f32 %v912, 20.0
      %v945 = vmin.f32 %v913, 20.0
      %v946 = vmin.f32 %v914, 20.0
      %v947 = vmin.f32 %v915, 20.0
      %v948 = vmin.f32 %v916, 20.0
      %v949 = vmin.f32 %v917, 20.0
      %v950 = vmin.f32 %v918, 20.0
      %v951 = vmin.f32 %v919, 20.0
      %v952 = vmin.f32 %v920, 20.0
      %v953 = vmin.f32 %v921, 20.0
      %v954 = vmin.f32 %v922, 20.0
      %v955 = vmin.f32 %v923, 20.0
      %v956 = vmin.f32 %v924, 20.0
      %v957 = vmin.f32 %v925, 20.0
      %v958 = vmin.f32 %v926, 20.0
      %v959 = vmin.f32 %v927, 20.0
      %v960 = vmin.f32 %v928, 20.0
      %v961 = vmin.f32 %v929, 20.0
      %v962 = vmin.f32 %v930, 20.0
      %v963 = vmin.f32 %v931, 20.0
      %v964 = vmul.f32 %v932, 1.442695
      %v965 = vpow.pop %v964
      %v966 = vmul.f32 %v933, 1.442695
      %v967 = vpow.pop %v966
      %v968 = vmul.f32 %v934, 1.442695
      %v969 = vpow.pop %v968
      %v970 = vmul.f32 %v935, 1.442695
      %v971 = vpow.pop %v970
      %v972 = vmul.f32 %v936, 1.442695
      %v973 = vpow.pop %v972
      %v974 = vmul.f32 %v937, 1.442695
      %v975 = vpow.pop %v974
      %v976 = vmul.f32 %v938, 1.442695
      %v977 = vpow.pop %v976
      %v978 = vmul.f32 %v939, 1.442695
      %v979 = vpow.pop %v978
      %v980 = vmul.f32 %v940, 1.442695
      %v981 = vpow.pop %v980
      %v982 = vmul.f32 %v941, 1.442695
      %v983 = vpow.pop %v982
      %v984 = vmul.f32 %v942, 1.442695
      %v985 = vpow.pop %v984
      %v986 = vmul.f32 %v943, 1.442695
      %v987 = vpow.pop %v986
      %v988 = vmul.f32 %v944, 1.442695
      %v989 = vpow.pop %v988
      %v990 = vmul.f32 %v945, 1.442695
      %v991 = vpow.pop %v990
      %v992 = vmul.f32 %v946, 1.442695
      %v993 = vpow.pop %v992
      %v994 = vmul.f32 %v947, 1.442695
      %v995 = vpow.pop %v994
      %v996 = vmul.f32 %v948, 1.442695
      %v997 = vpow.pop %v996
      %v998 = vmul.f32 %v949, 1.442695
      %v999 = vpow.pop %v998
      %v1000 = vmul.f32 %v950, 1.442695
      %v1001 = vpow.pop %v1000
      %v1002 = vmul.f32 %v951, 1.442695
      %v1003 = vpow.pop %v1002
      %v1004 = vmul.f32 %v952, 1.442695
      %v1005 = vpow.pop %v1004
      %v1006 = vmul.f32 %v953, 1.442695
      %v1007 = vpow.pop %v1006
      %v1008 = vmul.f32 %v954, 1.442695
      %v1009 = vpow.pop %v1008
      %v1010 = vmul.f32 %v955, 1.442695
      %v1011 = vpow.pop %v1010
      %v1012 = vmul.f32 %v956, 1.442695
      %v1013 = vpow.pop %v1012
      %v1014 = vmul.f32 %v957, 1.442695
      %v1015 = vpow.pop %v1014
      %v1016 = vmul.f32 %v958, 1.442695
      %v1017 = vpow.pop %v1016
      %v1018 = vmul.f32 %v959, 1.442695
      %v1019 = vpow.pop %v1018
      %v1020 = vmul.f32 %v960, 1.442695
      %v1021 = vpow.pop %v1020
      %v1022 = vmul.f32 %v961, 1.442695
      %v1023 = vpow.pop %v1022
      %v1024 = vmul.f32 %v962, 1.442695
      %v1025 = vpow.pop %v1024
      %v1026 = vmul.f32 %v963, 1.442695
      %v1027 = vpow.pop %v1026
      %v1028 = vadd.f32 %v965, 1.0
      %v1029 = vadd.f32 %v967, 1.0
      %v1030 = vadd.f32 %v969, 1.0
      %v1031 = vadd.f32 %v971, 1.0
      %v1032 = vadd.f32 %v973, 1.0
      %v1033 = vadd.f32 %v975, 1.0
      %v1034 = vadd.f32 %v977, 1.0
      %v1035 = vadd.f32 %v979, 1.0
      %v1036 = vadd.f32 %v981, 1.0
      %v1037 = vadd.f32 %v983, 1.0
      %v1038 = vadd.f32 %v985, 1.0
      %v1039 = vadd.f32 %v987, 1.0
      %v1040 = vadd.f32 %v989, 1.0
      %v1041 = vadd.f32 %v991, 1.0
      %v1042 = vadd.f32 %v993, 1.0
      %v1043 = vadd.f32 %v995, 1.0
      %v1044 = vadd.f32 %v997, 1.0
      %v1045 = vadd.f32 %v999, 1.0
      %v1046 = vadd.f32 %v1001, 1.0
      %v1047 = vadd.f32 %v1003, 1.0
      %v1048 = vadd.f32 %v1005, 1.0
      %v1049 = vadd.f32 %v1007, 1.0
      %v1050 = vadd.f32 %v1009, 1.0
      %v1051 = vadd.f32 %v1011, 1.0
      %v1052 = vadd.f32 %v1013, 1.0
      %v1053 = vadd.f32 %v1015, 1.0
      %v1054 = vadd.f32 %v1017, 1.0
      %v1055 = vadd.f32 %v1019, 1.0
      %v1056 = vadd.f32 %v1021, 1.0
      %v1057 = vadd.f32 %v1023, 1.0
      %v1058 = vadd.f32 %v1025, 1.0
      %v1059 = vadd.f32 %v1027, 1.0
      %v1060 = vlog2.pop %v1028
      %v1061 = vmul.f32 %v1060, 0.6931472
      %v1062 = vlog2.pop %v1029
      %v1063 = vmul.f32 %v1062, 0.6931472
      %v1064 = vlog2.pop %v1030
      %v1065 = vmul.f32 %v1064, 0.6931472
      %v1066 = vlog2.pop %v1031
      %v1067 = vmul.f32 %v1066, 0.6931472
      %v1068 = vlog2.pop %v1032
      %v1069 = vmul.f32 %v1068, 0.6931472
      %v1070 = vlog2.pop %v1033
      %v1071 = vmul.f32 %v1070, 0.6931472
      %v1072 = vlog2.pop %v1034
      %v1073 = vmul.f32 %v1072, 0.6931472
      %v1074 = vlog2.pop %v1035
      %v1075 = vmul.f32 %v1074, 0.6931472
      %v1076 = vlog2.pop %v1036
      %v1077 = vmul.f32 %v1076, 0.6931472
      %v1078 = vlog2.pop %v1037
      %v1079 = vmul.f32 %v1078, 0.6931472
      %v1080 = vlog2.pop %v1038
      %v1081 = vmul.f32 %v1080, 0.6931472
      %v1082 = vlog2.pop %v1039
      %v1083 = vmul.f32 %v1082, 0.6931472
      %v1084 = vlog2.pop %v1040
      %v1085 = vmul.f32 %v1084, 0.6931472
      %v1086 = vlog2.pop %v1041
      %v1087 = vmul.f32 %v1086, 0.6931472
      %v1088 = vlog2.pop %v1042
      %v1089 = vmul.f32 %v1088, 0.6931472
      %v1090 = vlog2.pop %v1043
      %v1091 = vmul.f32 %v1090, 0.6931472
      %v1092 = vlog2.pop %v1044
      %v1093 = vmul.f32 %v1092, 0.6931472
      %v1094 = vlog2.pop %v1045
      %v1095 = vmul.f32 %v1094, 0.6931472
      %v1096 = vlog2.pop %v1046
      %v1097 = vmul.f32 %v1096, 0.6931472
      %v1098 = vlog2.pop %v1047
      %v1099 = vmul.f32 %v1098, 0.6931472
      %v1100 = vlog2.pop %v1048
      %v1101 = vmul.f32 %v1100, 0.6931472
      %v1102 = vlog2.pop %v1049
      %v1103 = vmul.f32 %v1102, 0.6931472
      %v1104 = vlog2.pop %v1050
      %v1105 = vmul.f32 %v1104, 0.6931472
      %v1106 = vlog2.pop %v1051
      %v1107 = vmul.f32 %v1106, 0.6931472
      %v1108 = vlog2.pop %v1052
      %v1109 = vmul.f32 %v1108, 0.6931472
      %v1110 = vlog2.pop %v1053
      %v1111 = vmul.f32 %v1110, 0.6931472
      %v1112 = vlog2.pop %v1054
      %v1113 = vmul.f32 %v1112, 0.6931472
      %v1114 = vlog2.pop %v1055
      %v1115 = vmul.f32 %v1114, 0.6931472
      %v1116 = vlog2.pop %v1056
      %v1117 = vmul.f32 %v1116, 0.6931472
      %v1118 = vlog2.pop %v1057
      %v1119 = vmul.f32 %v1118, 0.6931472
      %v1120 = vlog2.pop %v1058
      %v1121 = vmul.f32 %v1120, 0.6931472
      %v1122 = vlog2.pop %v1059
      %v1123 = vmul.f32 %v1122, 0.6931472
      %v1124 = vrcp.pop 100.0
      %v1125 = vmul.f32 100.0, %v1124
      %v1126 = vsub.f32 1.0, %v1125
      %v1127 = vmul.f32 %v1124, %v1126
      %v1128 = vadd.f32 %v1124, %v1127
      %vm1129 = vweird.f32 %v1124
      %v1130 = vsel %vm1129, %v1124, %v1128
      %v1131 = vmul.f32 %v1061, %v1130
      %v1132 = vmul.f32 %v1063, %v1130
      %v1133 = vmul.f32 %v1065, %v1130
      %v1134 = vmul.f32 %v1067, %v1130
      %v1135 = vmul.f32 %v1069, %v1130
      %v1136 = vmul.f32 %v1071, %v1130
      %v1137 = vmul.f32 %v1073, %v1130
      %v1138 = vmul.f32 %v1075, %v1130
      %v1139 = vmul.f32 %v1077, %v1130
      %v1140 = vmul.f32 %v1079, %v1130
      %v1141 = vmul.f32 %v1081, %v1130
      %v1142 = vmul.f32 %v1083, %v1130
      %v1143 = vmul.f32 %v1085, %v1130
      %v1144 = vmul.f32 %v1087, %v1130
      %v1145 = vmul.f32 %v1089, %v1130
      %v1146 = vmul.f32 %v1091, %v1130
      %v1147 = vmul.f32 %v1093, %v1130
      %v1148 = vmul.f32 %v1095, %v1130
      %v1149 = vmul.f32 %v1097, %v1130
      %v1150 = vmul.f32 %v1099, %v1130
      %v1151 = vmul.f32 %v1101, %v1130
      %v1152 = vmul.f32 %v1103, %v1130
      %v1153 = vmul.f32 %v1105, %v1130
      %v1154 = vmul.f32 %v1107, %v1130
      %v1155 = vmul.f32 %v1109, %v1130
      %v1156 = vmul.f32 %v1111, %v1130
      %v1157 = vmul.f32 %v1113, %v1130
      %v1158 = vmul.f32 %v1115, %v1130
      %v1159 = vmul.f32 %v1117, %v1130
      %v1160 = vmul.f32 %v1119, %v1130
      %v1161 = vmul.f32 %v1121, %v1130
      %v1162 = vmul.f32 %v1123, %v1130
      %vm1163 = vcmp.gt.f32.partialorder %v900, 20.0
      %vm1164 = vcmp.gt.f32.partialorder %v901, 20.0
      %vm1165 = vcmp.gt.f32.partialorder %v902, 20.0
      %vm1166 = vcmp.gt.f32.partialorder %v903, 20.0
      %vm1167 = vcmp.gt.f32.partialorder %v904, 20.0
      %vm1168 = vcmp.gt.f32.partialorder %v905, 20.0
      %vm1169 = vcmp.gt.f32.partialorder %v906, 20.0
      %vm1170 = vcmp.gt.f32.partialorder %v907, 20.0
      %vm1171 = vcmp.gt.f32.partialorder %v908, 20.0
      %vm1172 = vcmp.gt.f32.partialorder %v909, 20.0
      %vm1173 = vcmp.gt.f32.partialorder %v910, 20.0
      %vm1174 = vcmp.gt.f32.partialorder %v911, 20.0
      %vm1175 = vcmp.gt.f32.partialorder %v912, 20.0
      %vm1176 = vcmp.gt.f32.partialorder %v913, 20.0
      %vm1177 = vcmp.gt.f32.partialorder %v914, 20.0
      %vm1178 = vcmp.gt.f32.partialorder %v915, 20.0
      %vm1179 = vcmp.gt.f32.partialorder %v916, 20.0
      %vm1180 = vcmp.gt.f32.partialorder %v917, 20.0
      %vm1181 = vcmp.gt.f32.partialorder %v918, 20.0
      %vm1182 = vcmp.gt.f32.partialorder %v919, 20.0
      %vm1183 = vcmp.gt.f32.partialorder %v920, 20.0
      %vm1184 = vcmp.gt.f32.partialorder %v921, 20.0
      %vm1185 = vcmp.gt.f32.partialorder %v922, 20.0
      %vm1186 = vcmp.gt.f32.partialorder %v923, 20.0
      %vm1187 = vcmp.gt.f32.partialorder %v924, 20.0
      %vm1188 = vcmp.gt.f32.partialorder %v925, 20.0
      %vm1189 = vcmp.gt.f32.partialorder %v926, 20.0
      %vm1190 = vcmp.gt.f32.partialorder %v927, 20.0
      %vm1191 = vcmp.gt.f32.partialorder %v928, 20.0
      %vm1192 = vcmp.gt.f32.partialorder %v929, 20.0
      %vm1193 = vcmp.gt.f32.partialorder %v930, 20.0
      %vm1194 = vcmp.gt.f32.partialorder %v931, 20.0
      %v1195 = vsel %vm1163, %v868, %v1131
      %v1196 = vsel %vm1164, %v869, %v1132
      %v1197 = vsel %vm1165, %v870, %v1133
      %v1198 = vsel %vm1166, %v871, %v1134
      %v1199 = vsel %vm1167, %v872, %v1135
      %v1200 = vsel %vm1168, %v873, %v1136
      %v1201 = vsel %vm1169, %v874, %v1137
      %v1202 = vsel %vm1170, %v875, %v1138
      %v1203 = vsel %vm1171, %v876, %v1139
      %v1204 = vsel %vm1172, %v877, %v1140
      %v1205 = vsel %vm1173, %v878, %v1141
      %v1206 = vsel %vm1174, %v879, %v1142
      %v1207 = vsel %vm1175, %v880, %v1143
      %v1208 = vsel %vm1176, %v881, %v1144
      %v1209 = vsel %vm1177, %v882, %v1145
      %v1210 = vsel %vm1178, %v883, %v1146
      %v1211 = vsel %vm1179, %v884, %v1147
      %v1212 = vsel %vm1180, %v885, %v1148
      %v1213 = vsel %vm1181, %v886, %v1149
      %v1214 = vsel %vm1182, %v887, %v1150
      %v1215 = vsel %vm1183, %v888, %v1151
      %v1216 = vsel %vm1184, %v889, %v1152
      %v1217 = vsel %vm1185, %v890, %v1153
      %v1218 = vsel %vm1186, %v891, %v1154
      %v1219 = vsel %vm1187, %v892, %v1155
      %v1220 = vsel %vm1188, %v893, %v1156
      %v1221 = vsel %vm1189, %v894, %v1157
      %v1222 = vsel %vm1190, %v895, %v1158
      %v1223 = vsel %vm1191, %v896, %v1159
      %v1224 = vsel %vm1192, %v897, %v1160
      %v1225 = vsel %vm1193, %v898, %v1161
      %v1226 = vsel %vm1194, %v899, %v1162
      %v1227 = vperm.slane %v287, 3
      %v1228 = vmul.f32 %v291, %v1227
      %v1229 = vmul.f32 %v296, %v1227
      %v1230 = vmul.f32 %v301, %v1227
      %v1231 = vmul.f32 %v306, %v1227
      %v1232 = vmul.f32 %v311, %v1227
      %v1233 = vmul.f32 %v316, %v1227
      %v1234 = vmul.f32 %v321, %v1227
      %v1235 = vmul.f32 %v326, %v1227
      %v1236 = vmul.f32 %v331, %v1227
      %v1237 = vmul.f32 %v336, %v1227
      %v1238 = vmul.f32 %v341, %v1227
      %v1239 = vmul.f32 %v346, %v1227
      %v1240 = vmul.f32 %v351, %v1227
      %v1241 = vmul.f32 %v356, %v1227
      %v1242 = vmul.f32 %v361, %v1227
      %v1243 = vmul.f32 %v366, %v1227
      %v1244 = vmul.f32 %v371, %v1227
      %v1245 = vmul.f32 %v376, %v1227
      %v1246 = vmul.f32 %v381, %v1227
      %v1247 = vmul.f32 %v386, %v1227
      %v1248 = vmul.f32 %v391, %v1227
      %v1249 = vmul.f32 %v396, %v1227
      %v1250 = vmul.f32 %v401, %v1227
      %v1251 = vmul.f32 %v406, %v1227
      %v1252 = vmul.f32 %v411, %v1227
      %v1253 = vmul.f32 %v416, %v1227
      %v1254 = vmul.f32 %v421, %v1227
      %v1255 = vmul.f32 %v426, %v1227
      %v1256 = vmul.f32 %v431, %v1227
      %v1257 = vmul.f32 %v436, %v1227
      %v1258 = vmul.f32 %v441, %v1227
      %v1259 = vmul.f32 %v446, %v1227
      %v1260 = vperm.slane %v287, 4
      %v1261 = vmul.f32 %v483, %v1260
      %v1262 = vmul.f32 %v487, %v1260
      %v1263 = vmul.f32 %v491, %v1260
      %v1264 = vmul.f32 %v495, %v1260
      %v1265 = vmul.f32 %v499, %v1260
      %v1266 = vmul.f32 %v503, %v1260
      %v1267 = vmul.f32 %v507, %v1260
      %v1268 = vmul.f32 %v511, %v1260
      %v1269 = vmul.f32 %v515, %v1260
      %v1270 = vmul.f32 %v519, %v1260
      %v1271 = vmul.f32 %v523, %v1260
      %v1272 = vmul.f32 %v527, %v1260
      %v1273 = vmul.f32 %v531, %v1260
      %v1274 = vmul.f32 %v535, %v1260
      %v1275 = vmul.f32 %v539, %v1260
      %v1276 = vmul.f32 %v543, %v1260
      %v1277 = vmul.f32 %v547, %v1260
      %v1278 = vmul.f32 %v551, %v1260
      %v1279 = vmul.f32 %v555, %v1260
      %v1280 = vmul.f32 %v559, %v1260
      %v1281 = vmul.f32 %v563, %v1260
      %v1282 = vmul.f32 %v567, %v1260
      %v1283 = vmul.f32 %v571, %v1260
      %v1284 = vmul.f32 %v575, %v1260
      %v1285 = vmul.f32 %v579, %v1260
      %v1286 = vmul.f32 %v583, %v1260
      %v1287 = vmul.f32 %v587, %v1260
      %v1288 = vmul.f32 %v591, %v1260
      %v1289 = vmul.f32 %v595, %v1260
      %v1290 = vmul.f32 %v599, %v1260
      %v1291 = vmul.f32 %v603, %v1260
      %v1292 = vmul.f32 %v607, %v1260
      %v1293 = vadd.f32 %v1228, %v1261
      %v1294 = vadd.f32 %v1229, %v1262
      %v1295 = vadd.f32 %v1230, %v1263
      %v1296 = vadd.f32 %v1231, %v1264
      %v1297 = vadd.f32 %v1232, %v1265
      %v1298 = vadd.f32 %v1233, %v1266
      %v1299 = vadd.f32 %v1234, %v1267
      %v1300 = vadd.f32 %v1235, %v1268
      %v1301 = vadd.f32 %v1236, %v1269
      %v1302 = vadd.f32 %v1237, %v1270
      %v1303 = vadd.f32 %v1238, %v1271
      %v1304 = vadd.f32 %v1239, %v1272
      %v1305 = vadd.f32 %v1240, %v1273
      %v1306 = vadd.f32 %v1241, %v1274
      %v1307 = vadd.f32 %v1242, %v1275
      %v1308 = vadd.f32 %v1243, %v1276
      %v1309 = vadd.f32 %v1244, %v1277
      %v1310 = vadd.f32 %v1245, %v1278
      %v1311 = vadd.f32 %v1246, %v1279
      %v1312 = vadd.f32 %v1247, %v1280
      %v1313 = vadd.f32 %v1248, %v1281
      %v1314 = vadd.f32 %v1249, %v1282
      %v1315 = vadd.f32 %v1250, %v1283
      %v1316 = vadd.f32 %v1251, %v1284
      %v1317 = vadd.f32 %v1252, %v1285
      %v1318 = vadd.f32 %v1253, %v1286
      %v1319 = vadd.f32 %v1254, %v1287
      %v1320 = vadd.f32 %v1255, %v1288
      %v1321 = vadd.f32 %v1256, %v1289
      %v1322 = vadd.f32 %v1257, %v1290
      %v1323 = vadd.f32 %v1258, %v1291
      %v1324 = vadd.f32 %v1259, %v1292
      %v1325 = vperm.slane %v287, 5
      %v1326 = vmul.f32 %v676, %v1325
      %v1327 = vmul.f32 %v680, %v1325
      %v1328 = vmul.f32 %v684, %v1325
      %v1329 = vmul.f32 %v688, %v1325
      %v1330 = vmul.f32 %v692, %v1325
      %v1331 = vmul.f32 %v696, %v1325
      %v1332 = vmul.f32 %v700, %v1325
      %v1333 = vmul.f32 %v704, %v1325
      %v1334 = vmul.f32 %v708, %v1325
      %v1335 = vmul.f32 %v712, %v1325
      %v1336 = vmul.f32 %v716, %v1325
      %v1337 = vmul.f32 %v720, %v1325
      %v1338 = vmul.f32 %v724, %v1325
      %v1339 = vmul.f32 %v728, %v1325
      %v1340 = vmul.f32 %v732, %v1325
      %v1341 = vmul.f32 %v736, %v1325
      %v1342 = vmul.f32 %v740, %v1325
      %v1343 = vmul.f32 %v744, %v1325
      %v1344 = vmul.f32 %v748, %v1325
      %v1345 = vmul.f32 %v752, %v1325
      %v1346 = vmul.f32 %v756, %v1325
      %v1347 = vmul.f32 %v760, %v1325
      %v1348 = vmul.f32 %v764, %v1325
      %v1349 = vmul.f32 %v768, %v1325
      %v1350 = vmul.f32 %v772, %v1325
      %v1351 = vmul.f32 %v776, %v1325
      %v1352 = vmul.f32 %v780, %v1325
      %v1353 = vmul.f32 %v784, %v1325
      %v1354 = vmul.f32 %v788, %v1325
      %v1355 = vmul.f32 %v792, %v1325
      %v1356 = vmul.f32 %v796, %v1325
      %v1357 = vmul.f32 %v800, %v1325
      %v1358 = vadd.f32 %v1293, %v1326
      %v1359 = vadd.f32 %v1294, %v1327
      %v1360 = vadd.f32 %v1295, %v1328
      %v1361 = vadd.f32 %v1296, %v1329
      %v1362 = vadd.f32 %v1297, %v1330
      %v1363 = vadd.f32 %v1298, %v1331
      %v1364 = vadd.f32 %v1299, %v1332
      %v1365 = vadd.f32 %v1300, %v1333
      %v1366 = vadd.f32 %v1301, %v1334
      %v1367 = vadd.f32 %v1302, %v1335
      %v1368 = vadd.f32 %v1303, %v1336
      %v1369 = vadd.f32 %v1304, %v1337
      %v1370 = vadd.f32 %v1305, %v1338
      %v1371 = vadd.f32 %v1306, %v1339
      %v1372 = vadd.f32 %v1307, %v1340
      %v1373 = vadd.f32 %v1308, %v1341
      %v1374 = vadd.f32 %v1309, %v1342
      %v1375 = vadd.f32 %v1310, %v1343
      %v1376 = vadd.f32 %v1311, %v1344
      %v1377 = vadd.f32 %v1312, %v1345
      %v1378 = vadd.f32 %v1313, %v1346
      %v1379 = vadd.f32 %v1314, %v1347
      %v1380 = vadd.f32 %v1315, %v1348
      %v1381 = vadd.f32 %v1316, %v1349
      %v1382 = vadd.f32 %v1317, %v1350
      %v1383 = vadd.f32 %v1318, %v1351
      %v1384 = vadd.f32 %v1319, %v1352
      %v1385 = vadd.f32 %v1320, %v1353
      %v1386 = vadd.f32 %v1321, %v1354
      %v1387 = vadd.f32 %v1322, %v1355
      %v1388 = vadd.f32 %v1323, %v1356
      %v1389 = vadd.f32 %v1324, %v1357
      %v1390 = vld [vmem:[%s2] sm:$0xff]
      %v1391 = vld [vmem:[%s2 + $0x8] sm:$0xff]
      %v1392 = vld [vmem:[%s2 + $0x10] sm:$0xff]
      %v1393 = vld [vmem:[%s2 + $0x18] sm:$0xff]
      %v1394 = vld [vmem:[%s2 + $0x20] sm:$0xff]
      %v1395 = vld [vmem:[%s2 + $0x28] sm:$0xff]
      %v1396 = vld [vmem:[%s2 + $0x30] sm:$0xff]
      %v1397 = vld [vmem:[%s2 + $0x38] sm:$0xff]
      %v1398 = vld [vmem:[%s3] sm:$0x1]
      %v1400 = vperm.slane %v1398, 0
      %vm1402 = vcmask 523264
      %v1404 = vsel %vm1402, %v1195, 0
      %v1407 = vsel %vm1402, %v1196, 0
      %v1410 = vsel %vm1402, %v1197, 0
      %v1413 = vsel %vm1402, %v1198, 0
      %v1416 = vsel %vm1402, %v1199, 0
      %v1419 = vsel %vm1402, %v1200, 0
      %v1422 = vsel %vm1402, %v1201, 0
      %v1425 = vsel %vm1402, %v1202, 0
      %v1428 = vsel %vm1402, %v1203, 0
      %v1431 = vsel %vm1402, %v1204, 0
      %v1434 = vsel %vm1402, %v1205, 0
      %v1437 = vsel %vm1402, %v1206, 0
      %v1440 = vsel %vm1402, %v1207, 0
      %v1443 = vsel %vm1402, %v1208, 0
      %v1446 = vsel %vm1402, %v1209, 0
      %v1449 = vsel %vm1402, %v1210, 0
      %v1452 = vsel %vm1402, %v1211, 0
      %v1455 = vsel %vm1402, %v1212, 0
      %v1458 = vsel %vm1402, %v1213, 0
      %v1461 = vsel %vm1402, %v1214, 0
      %v1464 = vsel %vm1402, %v1215, 0
      %v1467 = vsel %vm1402, %v1216, 0
      %v1470 = vsel %vm1402, %v1217, 0
      %v1473 = vsel %vm1402, %v1218, 0
      %v1476 = vsel %vm1402, %v1219, 0
      %v1479 = vsel %vm1402, %v1220, 0
      %v1482 = vsel %vm1402, %v1221, 0
      %v1485 = vsel %vm1402, %v1222, 0
      %v1488 = vsel %vm1402, %v1223, 0
      %v1491 = vsel %vm1402, %v1224, 0
      %v1494 = vsel %vm1402, %v1225, 0
      %v1497 = vsel %vm1402, %v1226, 0
      %1499 = vmatpush.msra.mxu0 0.0
      %1500 = vmatpush.msra.mxu0 0.0
      %1501 = vmatpush.msra.mxu0 0.0
      %1502 = vmatpush.msra.mxu0 0.0
      %1503 = vmatpush.msra.mxu0 0.0
      %1504 = vmatpush.msra.mxu0 0.0
      %1505 = vmatpush.msra.mxu0 0.0
      %1506 = vmatpush.msra.mxu0 0.0
      %1507 = vmatpush.msra.mxu0 %v1397
      %1508 = vmatpush.msra.mxu0 %v1396
      %1509 = vmatpush.msra.mxu0 %v1395
      %1510 = vmatpush.msra.mxu0 %v1394
      %1511 = vmatpush.msra.mxu0 %v1393
      %1512 = vmatpush.msra.mxu0 %v1392
      %1513 = vmatpush.msra.mxu0 %v1391
      %1514 = vmatpush.msra.mxu0 %v1390
      %1515 = vmatmul.f32.gmra.mxu0 %v1404
      %v1516 = vpop.f32.mrf.mxu0
      %v1517 = vadd.f32 %v1400, %v1516
      %1518 = vmatmul.f32.gmra.mxu0 %v1407
      %v1519 = vpop.f32.mrf.mxu0
      %v1520 = vadd.f32 %v1400, %v1519
      %1521 = vmatmul.f32.gmra.mxu0 %v1410
      %v1522 = vpop.f32.mrf.mxu0
      %v1523 = vadd.f32 %v1400, %v1522
      %1524 = vmatmul.f32.gmra.mxu0 %v1413
      %v1525 = vpop.f32.mrf.mxu0
      %v1526 = vadd.f32 %v1400, %v1525
      %1527 = vmatmul.f32.gmra.mxu0 %v1416
      %v1528 = vpop.f32.mrf.mxu0
      %v1529 = vadd.f32 %v1400, %v1528
      %1530 = vmatmul.f32.gmra.mxu0 %v1419
      %v1531 = vpop.f32.mrf.mxu0
      %v1532 = vadd.f32 %v1400, %v1531
      %1533 = vmatmul.f32.gmra.mxu0 %v1422
      %v1534 = vpop.f32.mrf.mxu0
      %v1535 = vadd.f32 %v1400, %v1534
      %1536 = vmatmul.f32.gmra.mxu0 %v1425
      %v1537 = vpop.f32.mrf.mxu0
      %v1538 = vadd.f32 %v1400, %v1537
      %1539 = vmatmul.f32.gmra.mxu0 %v1428
      %v1540 = vpop.f32.mrf.mxu0
      %v1541 = vadd.f32 %v1400, %v1540
      %1542 = vmatmul.f32.gmra.mxu0 %v1431
      %v1543 = vpop.f32.mrf.mxu0
      %v1544 = vadd.f32 %v1400, %v1543
      %1545 = vmatmul.f32.gmra.mxu0 %v1434
      %v1546 = vpop.f32.mrf.mxu0
      %v1547 = vadd.f32 %v1400, %v1546
      %1548 = vmatmul.f32.gmra.mxu0 %v1437
      %v1549 = vpop.f32.mrf.mxu0
      %v1550 = vadd.f32 %v1400, %v1549
      %1551 = vmatmul.f32.gmra.mxu0 %v1440
      %v1552 = vpop.f32.mrf.mxu0
      %v1553 = vadd.f32 %v1400, %v1552
      %1554 = vmatmul.f32.gmra.mxu0 %v1443
      %v1555 = vpop.f32.mrf.mxu0
      %v1556 = vadd.f32 %v1400, %v1555
      %1557 = vmatmul.f32.gmra.mxu0 %v1446
      %v1558 = vpop.f32.mrf.mxu0
      %v1559 = vadd.f32 %v1400, %v1558
      %1560 = vmatmul.f32.gmra.mxu0 %v1449
      %v1561 = vpop.f32.mrf.mxu0
      %v1562 = vadd.f32 %v1400, %v1561
      %1563 = vmatmul.f32.gmra.mxu0 %v1452
      %v1564 = vpop.f32.mrf.mxu0
      %v1565 = vadd.f32 %v1400, %v1564
      %1566 = vmatmul.f32.gmra.mxu0 %v1455
      %v1567 = vpop.f32.mrf.mxu0
      %v1568 = vadd.f32 %v1400, %v1567
      %1569 = vmatmul.f32.gmra.mxu0 %v1458
      %v1570 = vpop.f32.mrf.mxu0
      %v1571 = vadd.f32 %v1400, %v1570
      %1572 = vmatmul.f32.gmra.mxu0 %v1461
      %v1573 = vpop.f32.mrf.mxu0
      %v1574 = vadd.f32 %v1400, %v1573
      %1575 = vmatmul.f32.gmra.mxu0 %v1464
      %v1576 = vpop.f32.mrf.mxu0
      %v1577 = vadd.f32 %v1400, %v1576
      %1578 = vmatmul.f32.gmra.mxu0 %v1467
      %v1579 = vpop.f32.mrf.mxu0
      %v1580 = vadd.f32 %v1400, %v1579
      %1581 = vmatmul.f32.gmra.mxu0 %v1470
      %v1582 = vpop.f32.mrf.mxu0
      %v1583 = vadd.f32 %v1400, %v1582
      %1584 = vmatmul.f32.gmra.mxu0 %v1473
      %v1585 = vpop.f32.mrf.mxu0
      %v1586 = vadd.f32 %v1400, %v1585
      %1587 = vmatmul.f32.gmra.mxu0 %v1476
      %v1588 = vpop.f32.mrf.mxu0
      %v1589 = vadd.f32 %v1400, %v1588
      %1590 = vmatmul.f32.gmra.mxu0 %v1479
      %v1591 = vpop.f32.mrf.mxu0
      %v1592 = vadd.f32 %v1400, %v1591
      %1593 = vmatmul.f32.gmra.mxu0 %v1482
      %v1594 = vpop.f32.mrf.mxu0
      %v1595 = vadd.f32 %v1400, %v1594
      %1596 = vmatmul.f32.gmra.mxu0 %v1485
      %v1597 = vpop.f32.mrf.mxu0
      %v1598 = vadd.f32 %v1400, %v1597
      %1599 = vmatmul.f32.gmra.mxu0 %v1488
      %v1600 = vpop.f32.mrf.mxu0
      %v1601 = vadd.f32 %v1400, %v1600
      %1602 = vmatmul.f32.gmra.mxu0 %v1491
      %v1603 = vpop.f32.mrf.mxu0
      %v1604 = vadd.f32 %v1400, %v1603
      %1605 = vmatmul.f32.gmra.mxu0 %v1494
      %v1606 = vpop.f32.mrf.mxu0
      %v1607 = vadd.f32 %v1400, %v1606
      %1608 = vmatmul.f32.gmra.mxu0 %v1497
      %v1609 = vpop.f32.mrf.mxu0
      %v1610 = vadd.f32 %v1400, %v1609
      %1611 = vdwg.mxu0
      %v1612 = vmul.f32 %v1517, 100.0
      %v1613 = vmul.f32 %v1520, 100.0
      %v1614 = vmul.f32 %v1523, 100.0
      %v1615 = vmul.f32 %v1526, 100.0
      %v1616 = vmul.f32 %v1529, 100.0
      %v1617 = vmul.f32 %v1532, 100.0
      %v1618 = vmul.f32 %v1535, 100.0
      %v1619 = vmul.f32 %v1538, 100.0
      %v1620 = vmul.f32 %v1541, 100.0
      %v1621 = vmul.f32 %v1544, 100.0
      %v1622 = vmul.f32 %v1547, 100.0
      %v1623 = vmul.f32 %v1550, 100.0
      %v1624 = vmul.f32 %v1553, 100.0
      %v1625 = vmul.f32 %v1556, 100.0
      %v1626 = vmul.f32 %v1559, 100.0
      %v1627 = vmul.f32 %v1562, 100.0
      %v1628 = vmul.f32 %v1565, 100.0
      %v1629 = vmul.f32 %v1568, 100.0
      %v1630 = vmul.f32 %v1571, 100.0
      %v1631 = vmul.f32 %v1574, 100.0
      %v1632 = vmul.f32 %v1577, 100.0
      %v1633 = vmul.f32 %v1580, 100.0
      %v1634 = vmul.f32 %v1583, 100.0
      %v1635 = vmul.f32 %v1586, 100.0
      %v1636 = vmul.f32 %v1589, 100.0
      %v1637 = vmul.f32 %v1592, 100.0
      %v1638 = vmul.f32 %v1595, 100.0
      %v1639 = vmul.f32 %v1598, 100.0
      %v1640 = vmul.f32 %v1601, 100.0
      %v1641 = vmul.f32 %v1604, 100.0
      %v1642 = vmul.f32 %v1607, 100.0
      %v1643 = vmul.f32 %v1610, 100.0
      %v1644 = vmin.f32 %v1612, 20.0
      %v1645 = vmin.f32 %v1613, 20.0
      %v1646 = vmin.f32 %v1614, 20.0
      %v1647 = vmin.f32 %v1615, 20.0
      %v1648 = vmin.f32 %v1616, 20.0
      %v1649 = vmin.f32 %v1617, 20.0
      %v1650 = vmin.f32 %v1618, 20.0
      %v1651 = vmin.f32 %v1619, 20.0
      %v1652 = vmin.f32 %v1620, 20.0
      %v1653 = vmin.f32 %v1621, 20.0
      %v1654 = vmin.f32 %v1622, 20.0
      %v1655 = vmin.f32 %v1623, 20.0
      %v1656 = vmin.f32 %v1624, 20.0
      %v1657 = vmin.f32 %v1625, 20.0
      %v1658 = vmin.f32 %v1626, 20.0
      %v1659 = vmin.f32 %v1627, 20.0
      %v1660 = vmin.f32 %v1628, 20.0
      %v1661 = vmin.f32 %v1629, 20.0
      %v1662 = vmin.f32 %v1630, 20.0
      %v1663 = vmin.f32 %v1631, 20.0
      %v1664 = vmin.f32 %v1632, 20.0
      %v1665 = vmin.f32 %v1633, 20.0
      %v1666 = vmin.f32 %v1634, 20.0
      %v1667 = vmin.f32 %v1635, 20.0
      %v1668 = vmin.f32 %v1636, 20.0
      %v1669 = vmin.f32 %v1637, 20.0
      %v1670 = vmin.f32 %v1638, 20.0
      %v1671 = vmin.f32 %v1639, 20.0
      %v1672 = vmin.f32 %v1640, 20.0
      %v1673 = vmin.f32 %v1641, 20.0
      %v1674 = vmin.f32 %v1642, 20.0
      %v1675 = vmin.f32 %v1643, 20.0
      %v1676 = vmul.f32 %v1644, 1.442695
      %v1677 = vpow.pop %v1676
      %v1678 = vmul.f32 %v1645, 1.442695
      %v1679 = vpow.pop %v1678
      %v1680 = vmul.f32 %v1646, 1.442695
      %v1681 = vpow.pop %v1680
      %v1682 = vmul.f32 %v1647, 1.442695
      %v1683 = vpow.pop %v1682
      %v1684 = vmul.f32 %v1648, 1.442695
      %v1685 = vpow.pop %v1684
      %v1686 = vmul.f32 %v1649, 1.442695
      %v1687 = vpow.pop %v1686
      %v1688 = vmul.f32 %v1650, 1.442695
      %v1689 = vpow.pop %v1688
      %v1690 = vmul.f32 %v1651, 1.442695
      %v1691 = vpow.pop %v1690
      %v1692 = vmul.f32 %v1652, 1.442695
      %v1693 = vpow.pop %v1692
      %v1694 = vmul.f32 %v1653, 1.442695
      %v1695 = vpow.pop %v1694
      %v1696 = vmul.f32 %v1654, 1.442695
      %v1697 = vpow.pop %v1696
      %v1698 = vmul.f32 %v1655, 1.442695
      %v1699 = vpow.pop %v1698
      %v1700 = vmul.f32 %v1656, 1.442695
      %v1701 = vpow.pop %v1700
      %v1702 = vmul.f32 %v1657, 1.442695
      %v1703 = vpow.pop %v1702
      %v1704 = vmul.f32 %v1658, 1.442695
      %v1705 = vpow.pop %v1704
      %v1706 = vmul.f32 %v1659, 1.442695
      %v1707 = vpow.pop %v1706
      %v1708 = vmul.f32 %v1660, 1.442695
      %v1709 = vpow.pop %v1708
      %v1710 = vmul.f32 %v1661, 1.442695
      %v1711 = vpow.pop %v1710
      %v1712 = vmul.f32 %v1662, 1.442695
      %v1713 = vpow.pop %v1712
      %v1714 = vmul.f32 %v1663, 1.442695
      %v1715 = vpow.pop %v1714
      %v1716 = vmul.f32 %v1664, 1.442695
      %v1717 = vpow.pop %v1716
      %v1718 = vmul.f32 %v1665, 1.442695
      %v1719 = vpow.pop %v1718
      %v1720 = vmul.f32 %v1666, 1.442695
      %v1721 = vpow.pop %v1720
      %v1722 = vmul.f32 %v1667, 1.442695
      %v1723 = vpow.pop %v1722
      %v1724 = vmul.f32 %v1668, 1.442695
      %v1725 = vpow.pop %v1724
      %v1726 = vmul.f32 %v1669, 1.442695
      %v1727 = vpow.pop %v1726
      %v1728 = vmul.f32 %v1670, 1.442695
      %v1729 = vpow.pop %v1728
      %v1730 = vmul.f32 %v1671, 1.442695
      %v1731 = vpow.pop %v1730
      %v1732 = vmul.f32 %v1672, 1.442695
      %v1733 = vpow.pop %v1732
      %v1734 = vmul.f32 %v1673, 1.442695
      %v1735 = vpow.pop %v1734
      %v1736 = vmul.f32 %v1674, 1.442695
      %v1737 = vpow.pop %v1736
      %v1738 = vmul.f32 %v1675, 1.442695
      %v1739 = vpow.pop %v1738
      %v1740 = vadd.f32 %v1677, 1.0
      %v1741 = vadd.f32 %v1679, 1.0
      %v1742 = vadd.f32 %v1681, 1.0
      %v1743 = vadd.f32 %v1683, 1.0
      %v1744 = vadd.f32 %v1685, 1.0
      %v1745 = vadd.f32 %v1687, 1.0
      %v1746 = vadd.f32 %v1689, 1.0
      %v1747 = vadd.f32 %v1691, 1.0
      %v1748 = vadd.f32 %v1693, 1.0
      %v1749 = vadd.f32 %v1695, 1.0
      %v1750 = vadd.f32 %v1697, 1.0
      %v1751 = vadd.f32 %v1699, 1.0
      %v1752 = vadd.f32 %v1701, 1.0
      %v1753 = vadd.f32 %v1703, 1.0
      %v1754 = vadd.f32 %v1705, 1.0
      %v1755 = vadd.f32 %v1707, 1.0
      %v1756 = vadd.f32 %v1709, 1.0
      %v1757 = vadd.f32 %v1711, 1.0
      %v1758 = vadd.f32 %v1713, 1.0
      %v1759 = vadd.f32 %v1715, 1.0
      %v1760 = vadd.f32 %v1717, 1.0
      %v1761 = vadd.f32 %v1719, 1.0
      %v1762 = vadd.f32 %v1721, 1.0
      %v1763 = vadd.f32 %v1723, 1.0
      %v1764 = vadd.f32 %v1725, 1.0
      %v1765 = vadd.f32 %v1727, 1.0
      %v1766 = vadd.f32 %v1729, 1.0
      %v1767 = vadd.f32 %v1731, 1.0
      %v1768 = vadd.f32 %v1733, 1.0
      %v1769 = vadd.f32 %v1735, 1.0
      %v1770 = vadd.f32 %v1737, 1.0
      %v1771 = vadd.f32 %v1739, 1.0
      %v1772 = vlog2.pop %v1740
      %v1773 = vmul.f32 %v1772, 0.6931472
      %v1774 = vlog2.pop %v1741
      %v1775 = vmul.f32 %v1774, 0.6931472
      %v1776 = vlog2.pop %v1742
      %v1777 = vmul.f32 %v1776, 0.6931472
      %v1778 = vlog2.pop %v1743
      %v1779 = vmul.f32 %v1778, 0.6931472
      %v1780 = vlog2.pop %v1744
      %v1781 = vmul.f32 %v1780, 0.6931472
      %v1782 = vlog2.pop %v1745
      %v1783 = vmul.f32 %v1782, 0.6931472
      %v1784 = vlog2.pop %v1746
      %v1785 = vmul.f32 %v1784, 0.6931472
      %v1786 = vlog2.pop %v1747
      %v1787 = vmul.f32 %v1786, 0.6931472
      %v1788 = vlog2.pop %v1748
      %v1789 = vmul.f32 %v1788, 0.6931472
      %v1790 = vlog2.pop %v1749
      %v1791 = vmul.f32 %v1790, 0.6931472
      %v1792 = vlog2.pop %v1750
      %v1793 = vmul.f32 %v1792, 0.6931472
      %v1794 = vlog2.pop %v1751
      %v1795 = vmul.f32 %v1794, 0.6931472
      %v1796 = vlog2.pop %v1752
      %v1797 = vmul.f32 %v1796, 0.6931472
      %v1798 = vlog2.pop %v1753
      %v1799 = vmul.f32 %v1798, 0.6931472
      %v1800 = vlog2.pop %v1754
      %v1801 = vmul.f32 %v1800, 0.6931472
      %v1802 = vlog2.pop %v1755
      %v1803 = vmul.f32 %v1802, 0.6931472
      %v1804 = vlog2.pop %v1756
      %v1805 = vmul.f32 %v1804, 0.6931472
      %v1806 = vlog2.pop %v1757
      %v1807 = vmul.f32 %v1806, 0.6931472
      %v1808 = vlog2.pop %v1758
      %v1809 = vmul.f32 %v1808, 0.6931472
      %v1810 = vlog2.pop %v1759
      %v1811 = vmul.f32 %v1810, 0.6931472
      %v1812 = vlog2.pop %v1760
      %v1813 = vmul.f32 %v1812, 0.6931472
      %v1814 = vlog2.pop %v1761
      %v1815 = vmul.f32 %v1814, 0.6931472
      %v1816 = vlog2.pop %v1762
      %v1817 = vmul.f32 %v1816, 0.6931472
      %v1818 = vlog2.pop %v1763
      %v1819 = vmul.f32 %v1818, 0.6931472
      %v1820 = vlog2.pop %v1764
      %v1821 = vmul.f32 %v1820, 0.6931472
      %v1822 = vlog2.pop %v1765
      %v1823 = vmul.f32 %v1822, 0.6931472
      %v1824 = vlog2.pop %v1766
      %v1825 = vmul.f32 %v1824, 0.6931472
      %v1826 = vlog2.pop %v1767
      %v1827 = vmul.f32 %v1826, 0.6931472
      %v1828 = vlog2.pop %v1768
      %v1829 = vmul.f32 %v1828, 0.6931472
      %v1830 = vlog2.pop %v1769
      %v1831 = vmul.f32 %v1830, 0.6931472
      %v1832 = vlog2.pop %v1770
      %v1833 = vmul.f32 %v1832, 0.6931472
      %v1834 = vlog2.pop %v1771
      %v1835 = vmul.f32 %v1834, 0.6931472
      %v1836 = vmul.f32 %v1773, %v1130
      %v1837 = vmul.f32 %v1775, %v1130
      %v1838 = vmul.f32 %v1777, %v1130
      %v1839 = vmul.f32 %v1779, %v1130
      %v1840 = vmul.f32 %v1781, %v1130
      %v1841 = vmul.f32 %v1783, %v1130
      %v1842 = vmul.f32 %v1785, %v1130
      %v1843 = vmul.f32 %v1787, %v1130
      %v1844 = vmul.f32 %v1789, %v1130
      %v1845 = vmul.f32 %v1791, %v1130
      %v1846 = vmul.f32 %v1793, %v1130
      %v1847 = vmul.f32 %v1795, %v1130
      %v1848 = vmul.f32 %v1797, %v1130
      %v1849 = vmul.f32 %v1799, %v1130
      %v1850 = vmul.f32 %v1801, %v1130
      %v1851 = vmul.f32 %v1803, %v1130
      %v1852 = vmul.f32 %v1805, %v1130
      %v1853 = vmul.f32 %v1807, %v1130
      %v1854 = vmul.f32 %v1809, %v1130
      %v1855 = vmul.f32 %v1811, %v1130
      %v1856 = vmul.f32 %v1813, %v1130
      %v1857 = vmul.f32 %v1815, %v1130
      %v1858 = vmul.f32 %v1817, %v1130
      %v1859 = vmul.f32 %v1819, %v1130
      %v1860 = vmul.f32 %v1821, %v1130
      %v1861 = vmul.f32 %v1823, %v1130
      %v1862 = vmul.f32 %v1825, %v1130
      %v1863 = vmul.f32 %v1827, %v1130
      %v1864 = vmul.f32 %v1829, %v1130
      %v1865 = vmul.f32 %v1831, %v1130
      %v1866 = vmul.f32 %v1833, %v1130
      %v1867 = vmul.f32 %v1835, %v1130
      %vm1868 = vcmp.gt.f32.partialorder %v1612, 20.0
      %vm1869 = vcmp.gt.f32.partialorder %v1613, 20.0
      %vm1870 = vcmp.gt.f32.partialorder %v1614, 20.0
      %vm1871 = vcmp.gt.f32.partialorder %v1615, 20.0
      %vm1872 = vcmp.gt.f32.partialorder %v1616, 20.0
      %vm1873 = vcmp.gt.f32.partialorder %v1617, 20.0
      %vm1874 = vcmp.gt.f32.partialorder %v1618, 20.0
      %vm1875 = vcmp.gt.f32.partialorder %v1619, 20.0
      %vm1876 = vcmp.gt.f32.partialorder %v1620, 20.0
      %vm1877 = vcmp.gt.f32.partialorder %v1621, 20.0
      %vm1878 = vcmp.gt.f32.partialorder %v1622, 20.0
      %vm1879 = vcmp.gt.f32.partialorder %v1623, 20.0
      %vm1880 = vcmp.gt.f32.partialorder %v1624, 20.0
      %vm1881 = vcmp.gt.f32.partialorder %v1625, 20.0
      %vm1882 = vcmp.gt.f32.partialorder %v1626, 20.0
      %vm1883 = vcmp.gt.f32.partialorder %v1627, 20.0
      %vm1884 = vcmp.gt.f32.partialorder %v1628, 20.0
      %vm1885 = vcmp.gt.f32.partialorder %v1629, 20.0
      %vm1886 = vcmp.gt.f32.partialorder %v1630, 20.0
      %vm1887 = vcmp.gt.f32.partialorder %v1631, 20.0
      %vm1888 = vcmp.gt.f32.partialorder %v1632, 20.0
      %vm1889 = vcmp.gt.f32.partialorder %v1633, 20.0
      %vm1890 = vcmp.gt.f32.partialorder %v1634, 20.0
      %vm1891 = vcmp.gt.f32.partialorder %v1635, 20.0
      %vm1892 = vcmp.gt.f32.partialorder %v1636, 20.0
      %vm1893 = vcmp.gt.f32.partialorder %v1637, 20.0
      %vm1894 = vcmp.gt.f32.partialorder %v1638, 20.0
      %vm1895 = vcmp.gt.f32.partialorder %v1639, 20.0
      %vm1896 = vcmp.gt.f32.partialorder %v1640, 20.0
      %vm1897 = vcmp.gt.f32.partialorder %v1641, 20.0
      %vm1898 = vcmp.gt.f32.partialorder %v1642, 20.0
      %vm1899 = vcmp.gt.f32.partialorder %v1643, 20.0
      %v1900 = vsel %vm1868, %v1517, %v1836
      %v1901 = vsel %vm1869, %v1520, %v1837
      %v1902 = vsel %vm1870, %v1523, %v1838
      %v1903 = vsel %vm1871, %v1526, %v1839
      %v1904 = vsel %vm1872, %v1529, %v1840
      %v1905 = vsel %vm1873, %v1532, %v1841
      %v1906 = vsel %vm1874, %v1535, %v1842
      %v1907 = vsel %vm1875, %v1538, %v1843
      %v1908 = vsel %vm1876, %v1541, %v1844
      %v1909 = vsel %vm1877, %v1544, %v1845
      %v1910 = vsel %vm1878, %v1547, %v1846
      %v1911 = vsel %vm1879, %v1550, %v1847
      %v1912 = vsel %vm1880, %v1553, %v1848
      %v1913 = vsel %vm1881, %v1556, %v1849
      %v1914 = vsel %vm1882, %v1559, %v1850
      %v1915 = vsel %vm1883, %v1562, %v1851
      %v1916 = vsel %vm1884, %v1565, %v1852
      %v1917 = vsel %vm1885, %v1568, %v1853
      %v1918 = vsel %vm1886, %v1571, %v1854
      %v1919 = vsel %vm1887, %v1574, %v1855
      %v1920 = vsel %vm1888, %v1577, %v1856
      %v1921 = vsel %vm1889, %v1580, %v1857
      %v1922 = vsel %vm1890, %v1583, %v1858
      %v1923 = vsel %vm1891, %v1586, %v1859
      %v1924 = vsel %vm1892, %v1589, %v1860
      %v1925 = vsel %vm1893, %v1592, %v1861
      %v1926 = vsel %vm1894, %v1595, %v1862
      %v1927 = vsel %vm1895, %v1598, %v1863
      %v1928 = vsel %vm1896, %v1601, %v1864
      %v1929 = vsel %vm1897, %v1604, %v1865
      %v1930 = vsel %vm1898, %v1607, %v1866
      %v1931 = vsel %vm1899, %v1610, %v1867
      %s1932 = scalar_lea.vmem %s2, 64
      %v1933 = vld [vmem:[%s1932] sm:$0xff]
      %v1934 = vld [vmem:[%s1932 + $0x8] sm:$0xff]
      %v1935 = vld [vmem:[%s1932 + $0x10] sm:$0xff]
      %v1936 = vld [vmem:[%s1932 + $0x18] sm:$0xff]
      %v1937 = vld [vmem:[%s1932 + $0x20] sm:$0xff]
      %v1938 = vld [vmem:[%s1932 + $0x28] sm:$0xff]
      %v1939 = vld [vmem:[%s1932 + $0x30] sm:$0xff]
      %v1940 = vld [vmem:[%s1932 + $0x38] sm:$0xff]
      %s1941 = scalar_lea.vmem %s3, 1
      %v1942 = vld [vmem:[%s1941] sm:$0x1]
      %v1944 = vperm.slane %v1942, 0
      %v1947 = vsel %vm1402, %v1900, 0
      %v1950 = vsel %vm1402, %v1901, 0
      %v1953 = vsel %vm1402, %v1902, 0
      %v1956 = vsel %vm1402, %v1903, 0
      %v1959 = vsel %vm1402, %v1904, 0
      %v1962 = vsel %vm1402, %v1905, 0
      %v1965 = vsel %vm1402, %v1906, 0
      %v1968 = vsel %vm1402, %v1907, 0
      %v1971 = vsel %vm1402, %v1908, 0
      %v1974 = vsel %vm1402, %v1909, 0
      %v1977 = vsel %vm1402, %v1910, 0
      %v1980 = vsel %vm1402, %v1911, 0
      %v1983 = vsel %vm1402, %v1912, 0
      %v1986 = vsel %vm1402, %v1913, 0
      %v1989 = vsel %vm1402, %v1914, 0
      %v1992 = vsel %vm1402, %v1915, 0
      %v1995 = vsel %vm1402, %v1916, 0
      %v1998 = vsel %vm1402, %v1917, 0
      %v2001 = vsel %vm1402, %v1918, 0
      %v2004 = vsel %vm1402, %v1919, 0
      %v2007 = vsel %vm1402, %v1920, 0
      %v2010 = vsel %vm1402, %v1921, 0
      %v2013 = vsel %vm1402, %v1922, 0
      %v2016 = vsel %vm1402, %v1923, 0
      %v2019 = vsel %vm1402, %v1924, 0
      %v2022 = vsel %vm1402, %v1925, 0
      %v2025 = vsel %vm1402, %v1926, 0
      %v2028 = vsel %vm1402, %v1927, 0
      %v2031 = vsel %vm1402, %v1928, 0
      %v2034 = vsel %vm1402, %v1929, 0
      %v2037 = vsel %vm1402, %v1930, 0
      %v2040 = vsel %vm1402, %v1931, 0
      %2042 = vmatpush.msra.mxu0 0.0
      %2043 = vmatpush.msra.mxu0 0.0
      %2044 = vmatpush.msra.mxu0 0.0
      %2045 = vmatpush.msra.mxu0 0.0
      %2046 = vmatpush.msra.mxu0 0.0
      %2047 = vmatpush.msra.mxu0 0.0
      %2048 = vmatpush.msra.mxu0 0.0
      %2049 = vmatpush.msra.mxu0 0.0
      %2050 = vmatpush.msra.mxu0 %v1940
      %2051 = vmatpush.msra.mxu0 %v1939
      %2052 = vmatpush.msra.mxu0 %v1938
      %2053 = vmatpush.msra.mxu0 %v1937
      %2054 = vmatpush.msra.mxu0 %v1936
      %2055 = vmatpush.msra.mxu0 %v1935
      %2056 = vmatpush.msra.mxu0 %v1934
      %2057 = vmatpush.msra.mxu0 %v1933
      %2058 = vmatmul.f32.gmra.mxu0 %v1947
      %v2059 = vpop.f32.mrf.mxu0
      %v2060 = vadd.f32 %v1944, %v2059
      %2061 = vmatmul.f32.gmra.mxu0 %v1950
      %v2062 = vpop.f32.mrf.mxu0
      %v2063 = vadd.f32 %v1944, %v2062
      %2064 = vmatmul.f32.gmra.mxu0 %v1953
      %v2065 = vpop.f32.mrf.mxu0
      %v2066 = vadd.f32 %v1944, %v2065
      %2067 = vmatmul.f32.gmra.mxu0 %v1956
      %v2068 = vpop.f32.mrf.mxu0
      %v2069 = vadd.f32 %v1944, %v2068
      %2070 = vmatmul.f32.gmra.mxu0 %v1959
      %v2071 = vpop.f32.mrf.mxu0
      %v2072 = vadd.f32 %v1944, %v2071
      %2073 = vmatmul.f32.gmra.mxu0 %v1962
      %v2074 = vpop.f32.mrf.mxu0
      %v2075 = vadd.f32 %v1944, %v2074
      %2076 = vmatmul.f32.gmra.mxu0 %v1965
      %v2077 = vpop.f32.mrf.mxu0
      %v2078 = vadd.f32 %v1944, %v2077
      %2079 = vmatmul.f32.gmra.mxu0 %v1968
      %v2080 = vpop.f32.mrf.mxu0
      %v2081 = vadd.f32 %v1944, %v2080
      %2082 = vmatmul.f32.gmra.mxu0 %v1971
      %v2083 = vpop.f32.mrf.mxu0
      %v2084 = vadd.f32 %v1944, %v2083
      %2085 = vmatmul.f32.gmra.mxu0 %v1974
      %v2086 = vpop.f32.mrf.mxu0
      %v2087 = vadd.f32 %v1944, %v2086
      %2088 = vmatmul.f32.gmra.mxu0 %v1977
      %v2089 = vpop.f32.mrf.mxu0
      %v2090 = vadd.f32 %v1944, %v2089
      %2091 = vmatmul.f32.gmra.mxu0 %v1980
      %v2092 = vpop.f32.mrf.mxu0
      %v2093 = vadd.f32 %v1944, %v2092
      %2094 = vmatmul.f32.gmra.mxu0 %v1983
      %v2095 = vpop.f32.mrf.mxu0
      %v2096 = vadd.f32 %v1944, %v2095
      %2097 = vmatmul.f32.gmra.mxu0 %v1986
      %v2098 = vpop.f32.mrf.mxu0
      %v2099 = vadd.f32 %v1944, %v2098
      %2100 = vmatmul.f32.gmra.mxu0 %v1989
      %v2101 = vpop.f32.mrf.mxu0
      %v2102 = vadd.f32 %v1944, %v2101
      %2103 = vmatmul.f32.gmra.mxu0 %v1992
      %v2104 = vpop.f32.mrf.mxu0
      %v2105 = vadd.f32 %v1944, %v2104
      %2106 = vmatmul.f32.gmra.mxu0 %v1995
      %v2107 = vpop.f32.mrf.mxu0
      %v2108 = vadd.f32 %v1944, %v2107
      %2109 = vmatmul.f32.gmra.mxu0 %v1998
      %v2110 = vpop.f32.mrf.mxu0
      %v2111 = vadd.f32 %v1944, %v2110
      %2112 = vmatmul.f32.gmra.mxu0 %v2001
      %v2113 = vpop.f32.mrf.mxu0
      %v2114 = vadd.f32 %v1944, %v2113
      %2115 = vmatmul.f32.gmra.mxu0 %v2004
      %v2116 = vpop.f32.mrf.mxu0
      %v2117 = vadd.f32 %v1944, %v2116
      %2118 = vmatmul.f32.gmra.mxu0 %v2007
      %v2119 = vpop.f32.mrf.mxu0
      %v2120 = vadd.f32 %v1944, %v2119
      %2121 = vmatmul.f32.gmra.mxu0 %v2010
      %v2122 = vpop.f32.mrf.mxu0
      %v2123 = vadd.f32 %v1944, %v2122
      %2124 = vmatmul.f32.gmra.mxu0 %v2013
      %v2125 = vpop.f32.mrf.mxu0
      %v2126 = vadd.f32 %v1944, %v2125
      %2127 = vmatmul.f32.gmra.mxu0 %v2016
      %v2128 = vpop.f32.mrf.mxu0
      %v2129 = vadd.f32 %v1944, %v2128
      %2130 = vmatmul.f32.gmra.mxu0 %v2019
      %v2131 = vpop.f32.mrf.mxu0
      %v2132 = vadd.f32 %v1944, %v2131
      %2133 = vmatmul.f32.gmra.mxu0 %v2022
      %v2134 = vpop.f32.mrf.mxu0
      %v2135 = vadd.f32 %v1944, %v2134
      %2136 = vmatmul.f32.gmra.mxu0 %v2025
      %v2137 = vpop.f32.mrf.mxu0
      %v2138 = vadd.f32 %v1944, %v2137
      %2139 = vmatmul.f32.gmra.mxu0 %v2028
      %v2140 = vpop.f32.mrf.mxu0
      %v2141 = vadd.f32 %v1944, %v2140
      %2142 = vmatmul.f32.gmra.mxu0 %v2031
      %v2143 = vpop.f32.mrf.mxu0
      %v2144 = vadd.f32 %v1944, %v2143
      %2145 = vmatmul.f32.gmra.mxu0 %v2034
      %v2146 = vpop.f32.mrf.mxu0
      %v2147 = vadd.f32 %v1944, %v2146
      %2148 = vmatmul.f32.gmra.mxu0 %v2037
      %v2149 = vpop.f32.mrf.mxu0
      %v2150 = vadd.f32 %v1944, %v2149
      %2151 = vmatmul.f32.gmra.mxu0 %v2040
      %v2152 = vpop.f32.mrf.mxu0
      %v2153 = vadd.f32 %v1944, %v2152
      %2154 = vdwg.mxu0
      %v2155 = vmul.f32 %v2060, 100.0
      %v2156 = vmul.f32 %v2063, 100.0
      %v2157 = vmul.f32 %v2066, 100.0
      %v2158 = vmul.f32 %v2069, 100.0
      %v2159 = vmul.f32 %v2072, 100.0
      %v2160 = vmul.f32 %v2075, 100.0
      %v2161 = vmul.f32 %v2078, 100.0
      %v2162 = vmul.f32 %v2081, 100.0
      %v2163 = vmul.f32 %v2084, 100.0
      %v2164 = vmul.f32 %v2087, 100.0
      %v2165 = vmul.f32 %v2090, 100.0
      %v2166 = vmul.f32 %v2093, 100.0
      %v2167 = vmul.f32 %v2096, 100.0
      %v2168 = vmul.f32 %v2099, 100.0
      %v2169 = vmul.f32 %v2102, 100.0
      %v2170 = vmul.f32 %v2105, 100.0
      %v2171 = vmul.f32 %v2108, 100.0
      %v2172 = vmul.f32 %v2111, 100.0
      %v2173 = vmul.f32 %v2114, 100.0
      %v2174 = vmul.f32 %v2117, 100.0
      %v2175 = vmul.f32 %v2120, 100.0
      %v2176 = vmul.f32 %v2123, 100.0
      %v2177 = vmul.f32 %v2126, 100.0
      %v2178 = vmul.f32 %v2129, 100.0
      %v2179 = vmul.f32 %v2132, 100.0
      %v2180 = vmul.f32 %v2135, 100.0
      %v2181 = vmul.f32 %v2138, 100.0
      %v2182 = vmul.f32 %v2141, 100.0
      %v2183 = vmul.f32 %v2144, 100.0
      %v2184 = vmul.f32 %v2147, 100.0
      %v2185 = vmul.f32 %v2150, 100.0
      %v2186 = vmul.f32 %v2153, 100.0
      %v2187 = vmin.f32 %v2155, 20.0
      %v2188 = vmin.f32 %v2156, 20.0
      %v2189 = vmin.f32 %v2157, 20.0
      %v2190 = vmin.f32 %v2158, 20.0
      %v2191 = vmin.f32 %v2159, 20.0
      %v2192 = vmin.f32 %v2160, 20.0
      %v2193 = vmin.f32 %v2161, 20.0
      %v2194 = vmin.f32 %v2162, 20.0
      %v2195 = vmin.f32 %v2163, 20.0
      %v2196 = vmin.f32 %v2164, 20.0
      %v2197 = vmin.f32 %v2165, 20.0
      %v2198 = vmin.f32 %v2166, 20.0
      %v2199 = vmin.f32 %v2167, 20.0
      %v2200 = vmin.f32 %v2168, 20.0
      %v2201 = vmin.f32 %v2169, 20.0
      %v2202 = vmin.f32 %v2170, 20.0
      %v2203 = vmin.f32 %v2171, 20.0
      %v2204 = vmin.f32 %v2172, 20.0
      %v2205 = vmin.f32 %v2173, 20.0
      %v2206 = vmin.f32 %v2174, 20.0
      %v2207 = vmin.f32 %v2175, 20.0
      %v2208 = vmin.f32 %v2176, 20.0
      %v2209 = vmin.f32 %v2177, 20.0
      %v2210 = vmin.f32 %v2178, 20.0
      %v2211 = vmin.f32 %v2179, 20.0
      %v2212 = vmin.f32 %v2180, 20.0
      %v2213 = vmin.f32 %v2181, 20.0
      %v2214 = vmin.f32 %v2182, 20.0
      %v2215 = vmin.f32 %v2183, 20.0
      %v2216 = vmin.f32 %v2184, 20.0
      %v2217 = vmin.f32 %v2185, 20.0
      %v2218 = vmin.f32 %v2186, 20.0
      %v2219 = vmul.f32 %v2187, 1.442695
      %v2220 = vpow.pop %v2219
      %v2221 = vmul.f32 %v2188, 1.442695
      %v2222 = vpow.pop %v2221
      %v2223 = vmul.f32 %v2189, 1.442695
      %v2224 = vpow.pop %v2223
      %v2225 = vmul.f32 %v2190, 1.442695
      %v2226 = vpow.pop %v2225
      %v2227 = vmul.f32 %v2191, 1.442695
      %v2228 = vpow.pop %v2227
      %v2229 = vmul.f32 %v2192, 1.442695
      %v2230 = vpow.pop %v2229
      %v2231 = vmul.f32 %v2193, 1.442695
      %v2232 = vpow.pop %v2231
      %v2233 = vmul.f32 %v2194, 1.442695
      %v2234 = vpow.pop %v2233
      %v2235 = vmul.f32 %v2195, 1.442695
      %v2236 = vpow.pop %v2235
      %v2237 = vmul.f32 %v2196, 1.442695
      %v2238 = vpow.pop %v2237
      %v2239 = vmul.f32 %v2197, 1.442695
      %v2240 = vpow.pop %v2239
      %v2241 = vmul.f32 %v2198, 1.442695
      %v2242 = vpow.pop %v2241
      %v2243 = vmul.f32 %v2199, 1.442695
      %v2244 = vpow.pop %v2243
      %v2245 = vmul.f32 %v2200, 1.442695
      %v2246 = vpow.pop %v2245
      %v2247 = vmul.f32 %v2201, 1.442695
      %v2248 = vpow.pop %v2247
      %v2249 = vmul.f32 %v2202, 1.442695
      %v2250 = vpow.pop %v2249
      %v2251 = vmul.f32 %v2203, 1.442695
      %v2252 = vpow.pop %v2251
      %v2253 = vmul.f32 %v2204, 1.442695
      %v2254 = vpow.pop %v2253
      %v2255 = vmul.f32 %v2205, 1.442695
      %v2256 = vpow.pop %v2255
      %v2257 = vmul.f32 %v2206, 1.442695
      %v2258 = vpow.pop %v2257
      %v2259 = vmul.f32 %v2207, 1.442695
      %v2260 = vpow.pop %v2259
      %v2261 = vmul.f32 %v2208, 1.442695
      %v2262 = vpow.pop %v2261
      %v2263 = vmul.f32 %v2209, 1.442695
      %v2264 = vpow.pop %v2263
      %v2265 = vmul.f32 %v2210, 1.442695
      %v2266 = vpow.pop %v2265
      %v2267 = vmul.f32 %v2211, 1.442695
      %v2268 = vpow.pop %v2267
      %v2269 = vmul.f32 %v2212, 1.442695
      %v2270 = vpow.pop %v2269
      %v2271 = vmul.f32 %v2213, 1.442695
      %v2272 = vpow.pop %v2271
      %v2273 = vmul.f32 %v2214, 1.442695
      %v2274 = vpow.pop %v2273
      %v2275 = vmul.f32 %v2215, 1.442695
      %v2276 = vpow.pop %v2275
      %v2277 = vmul.f32 %v2216, 1.442695
      %v2278 = vpow.pop %v2277
      %v2279 = vmul.f32 %v2217, 1.442695
      %v2280 = vpow.pop %v2279
      %v2281 = vmul.f32 %v2218, 1.442695
      %v2282 = vpow.pop %v2281
      %v2283 = vadd.f32 %v2220, 1.0
      %v2284 = vadd.f32 %v2222, 1.0
      %v2285 = vadd.f32 %v2224, 1.0
      %v2286 = vadd.f32 %v2226, 1.0
      %v2287 = vadd.f32 %v2228, 1.0
      %v2288 = vadd.f32 %v2230, 1.0
      %v2289 = vadd.f32 %v2232, 1.0
      %v2290 = vadd.f32 %v2234, 1.0
      %v2291 = vadd.f32 %v2236, 1.0
      %v2292 = vadd.f32 %v2238, 1.0
      %v2293 = vadd.f32 %v2240, 1.0
      %v2294 = vadd.f32 %v2242, 1.0
      %v2295 = vadd.f32 %v2244, 1.0
      %v2296 = vadd.f32 %v2246, 1.0
      %v2297 = vadd.f32 %v2248, 1.0
      %v2298 = vadd.f32 %v2250, 1.0
      %v2299 = vadd.f32 %v2252, 1.0
      %v2300 = vadd.f32 %v2254, 1.0
      %v2301 = vadd.f32 %v2256, 1.0
      %v2302 = vadd.f32 %v2258, 1.0
      %v2303 = vadd.f32 %v2260, 1.0
      %v2304 = vadd.f32 %v2262, 1.0
      %v2305 = vadd.f32 %v2264, 1.0
      %v2306 = vadd.f32 %v2266, 1.0
      %v2307 = vadd.f32 %v2268, 1.0
      %v2308 = vadd.f32 %v2270, 1.0
      %v2309 = vadd.f32 %v2272, 1.0
      %v2310 = vadd.f32 %v2274, 1.0
      %v2311 = vadd.f32 %v2276, 1.0
      %v2312 = vadd.f32 %v2278, 1.0
      %v2313 = vadd.f32 %v2280, 1.0
      %v2314 = vadd.f32 %v2282, 1.0
      %v2315 = vlog2.pop %v2283
      %v2316 = vmul.f32 %v2315, 0.6931472
      %v2317 = vlog2.pop %v2284
      %v2318 = vmul.f32 %v2317, 0.6931472
      %v2319 = vlog2.pop %v2285
      %v2320 = vmul.f32 %v2319, 0.6931472
      %v2321 = vlog2.pop %v2286
      %v2322 = vmul.f32 %v2321, 0.6931472
      %v2323 = vlog2.pop %v2287
      %v2324 = vmul.f32 %v2323, 0.6931472
      %v2325 = vlog2.pop %v2288
      %v2326 = vmul.f32 %v2325, 0.6931472
      %v2327 = vlog2.pop %v2289
      %v2328 = vmul.f32 %v2327, 0.6931472
      %v2329 = vlog2.pop %v2290
      %v2330 = vmul.f32 %v2329, 0.6931472
      %v2331 = vlog2.pop %v2291
      %v2332 = vmul.f32 %v2331, 0.6931472
      %v2333 = vlog2.pop %v2292
      %v2334 = vmul.f32 %v2333, 0.6931472
      %v2335 = vlog2.pop %v2293
      %v2336 = vmul.f32 %v2335, 0.6931472
      %v2337 = vlog2.pop %v2294
      %v2338 = vmul.f32 %v2337, 0.6931472
      %v2339 = vlog2.pop %v2295
      %v2340 = vmul.f32 %v2339, 0.6931472
      %v2341 = vlog2.pop %v2296
      %v2342 = vmul.f32 %v2341, 0.6931472
      %v2343 = vlog2.pop %v2297
      %v2344 = vmul.f32 %v2343, 0.6931472
      %v2345 = vlog2.pop %v2298
      %v2346 = vmul.f32 %v2345, 0.6931472
      %v2347 = vlog2.pop %v2299
      %v2348 = vmul.f32 %v2347, 0.6931472
      %v2349 = vlog2.pop %v2300
      %v2350 = vmul.f32 %v2349, 0.6931472
      %v2351 = vlog2.pop %v2301
      %v2352 = vmul.f32 %v2351, 0.6931472
      %v2353 = vlog2.pop %v2302
      %v2354 = vmul.f32 %v2353, 0.6931472
      %v2355 = vlog2.pop %v2303
      %v2356 = vmul.f32 %v2355, 0.6931472
      %v2357 = vlog2.pop %v2304
      %v2358 = vmul.f32 %v2357, 0.6931472
      %v2359 = vlog2.pop %v2305
      %v2360 = vmul.f32 %v2359, 0.6931472
      %v2361 = vlog2.pop %v2306
      %v2362 = vmul.f32 %v2361, 0.6931472
      %v2363 = vlog2.pop %v2307
      %v2364 = vmul.f32 %v2363, 0.6931472
      %v2365 = vlog2.pop %v2308
      %v2366 = vmul.f32 %v2365, 0.6931472
      %v2367 = vlog2.pop %v2309
      %v2368 = vmul.f32 %v2367, 0.6931472
      %v2369 = vlog2.pop %v2310
      %v2370 = vmul.f32 %v2369, 0.6931472
      %v2371 = vlog2.pop %v2311
      %v2372 = vmul.f32 %v2371, 0.6931472
      %v2373 = vlog2.pop %v2312
      %v2374 = vmul.f32 %v2373, 0.6931472
      %v2375 = vlog2.pop %v2313
      %v2376 = vmul.f32 %v2375, 0.6931472
      %v2377 = vlog2.pop %v2314
      %v2378 = vmul.f32 %v2377, 0.6931472
      %v2379 = vmul.f32 %v2316, %v1130
      %v2380 = vmul.f32 %v2318, %v1130
      %v2381 = vmul.f32 %v2320, %v1130
      %v2382 = vmul.f32 %v2322, %v1130
      %v2383 = vmul.f32 %v2324, %v1130
      %v2384 = vmul.f32 %v2326, %v1130
      %v2385 = vmul.f32 %v2328, %v1130
      %v2386 = vmul.f32 %v2330, %v1130
      %v2387 = vmul.f32 %v2332, %v1130
      %v2388 = vmul.f32 %v2334, %v1130
      %v2389 = vmul.f32 %v2336, %v1130
      %v2390 = vmul.f32 %v2338, %v1130
      %v2391 = vmul.f32 %v2340, %v1130
      %v2392 = vmul.f32 %v2342, %v1130
      %v2393 = vmul.f32 %v2344, %v1130
      %v2394 = vmul.f32 %v2346, %v1130
      %v2395 = vmul.f32 %v2348, %v1130
      %v2396 = vmul.f32 %v2350, %v1130
      %v2397 = vmul.f32 %v2352, %v1130
      %v2398 = vmul.f32 %v2354, %v1130
      %v2399 = vmul.f32 %v2356, %v1130
      %v2400 = vmul.f32 %v2358, %v1130
      %v2401 = vmul.f32 %v2360, %v1130
      %v2402 = vmul.f32 %v2362, %v1130
      %v2403 = vmul.f32 %v2364, %v1130
      %v2404 = vmul.f32 %v2366, %v1130
      %v2405 = vmul.f32 %v2368, %v1130
      %v2406 = vmul.f32 %v2370, %v1130
      %v2407 = vmul.f32 %v2372, %v1130
      %v2408 = vmul.f32 %v2374, %v1130
      %v2409 = vmul.f32 %v2376, %v1130
      %v2410 = vmul.f32 %v2378, %v1130
      %vm2411 = vcmp.gt.f32.partialorder %v2155, 20.0
      %vm2412 = vcmp.gt.f32.partialorder %v2156, 20.0
      %vm2413 = vcmp.gt.f32.partialorder %v2157, 20.0
      %vm2414 = vcmp.gt.f32.partialorder %v2158, 20.0
      %vm2415 = vcmp.gt.f32.partialorder %v2159, 20.0
      %vm2416 = vcmp.gt.f32.partialorder %v2160, 20.0
      %vm2417 = vcmp.gt.f32.partialorder %v2161, 20.0
      %vm2418 = vcmp.gt.f32.partialorder %v2162, 20.0
      %vm2419 = vcmp.gt.f32.partialorder %v2163, 20.0
      %vm2420 = vcmp.gt.f32.partialorder %v2164, 20.0
      %vm2421 = vcmp.gt.f32.partialorder %v2165, 20.0
      %vm2422 = vcmp.gt.f32.partialorder %v2166, 20.0
      %vm2423 = vcmp.gt.f32.partialorder %v2167, 20.0
      %vm2424 = vcmp.gt.f32.partialorder %v2168, 20.0
      %vm2425 = vcmp.gt.f32.partialorder %v2169, 20.0
      %vm2426 = vcmp.gt.f32.partialorder %v2170, 20.0
      %vm2427 = vcmp.gt.f32.partialorder %v2171, 20.0
      %vm2428 = vcmp.gt.f32.partialorder %v2172, 20.0
      %vm2429 = vcmp.gt.f32.partialorder %v2173, 20.0
      %vm2430 = vcmp.gt.f32.partialorder %v2174, 20.0
      %vm2431 = vcmp.gt.f32.partialorder %v2175, 20.0
      %vm2432 = vcmp.gt.f32.partialorder %v2176, 20.0
      %vm2433 = vcmp.gt.f32.partialorder %v2177, 20.0
      %vm2434 = vcmp.gt.f32.partialorder %v2178, 20.0
      %vm2435 = vcmp.gt.f32.partialorder %v2179, 20.0
      %vm2436 = vcmp.gt.f32.partialorder %v2180, 20.0
      %vm2437 = vcmp.gt.f32.partialorder %v2181, 20.0
      %vm2438 = vcmp.gt.f32.partialorder %v2182, 20.0
      %vm2439 = vcmp.gt.f32.partialorder %v2183, 20.0
      %vm2440 = vcmp.gt.f32.partialorder %v2184, 20.0
      %vm2441 = vcmp.gt.f32.partialorder %v2185, 20.0
      %vm2442 = vcmp.gt.f32.partialorder %v2186, 20.0
      %v2443 = vsel %vm2411, %v2060, %v2379
      %v2444 = vsel %vm2412, %v2063, %v2380
      %v2445 = vsel %vm2413, %v2066, %v2381
      %v2446 = vsel %vm2414, %v2069, %v2382
      %v2447 = vsel %vm2415, %v2072, %v2383
      %v2448 = vsel %vm2416, %v2075, %v2384
      %v2449 = vsel %vm2417, %v2078, %v2385
      %v2450 = vsel %vm2418, %v2081, %v2386
      %v2451 = vsel %vm2419, %v2084, %v2387
      %v2452 = vsel %vm2420, %v2087, %v2388
      %v2453 = vsel %vm2421, %v2090, %v2389
      %v2454 = vsel %vm2422, %v2093, %v2390
      %v2455 = vsel %vm2423, %v2096, %v2391
      %v2456 = vsel %vm2424, %v2099, %v2392
      %v2457 = vsel %vm2425, %v2102, %v2393
      %v2458 = vsel %vm2426, %v2105, %v2394
      %v2459 = vsel %vm2427, %v2108, %v2395
      %v2460 = vsel %vm2428, %v2111, %v2396
      %v2461 = vsel %vm2429, %v2114, %v2397
      %v2462 = vsel %vm2430, %v2117, %v2398
      %v2463 = vsel %vm2431, %v2120, %v2399
      %v2464 = vsel %vm2432, %v2123, %v2400
      %v2465 = vsel %vm2433, %v2126, %v2401
      %v2466 = vsel %vm2434, %v2129, %v2402
      %v2467 = vsel %vm2435, %v2132, %v2403
      %v2468 = vsel %vm2436, %v2135, %v2404
      %v2469 = vsel %vm2437, %v2138, %v2405
      %v2470 = vsel %vm2438, %v2141, %v2406
      %v2471 = vsel %vm2439, %v2144, %v2407
      %v2472 = vsel %vm2440, %v2147, %v2408
      %v2473 = vsel %vm2441, %v2150, %v2409
      %v2474 = vsel %vm2442, %v2153, %v2410
      %s2475 = scalar_lea.vmem %s2, 128
      %v2476 = vld [vmem:[%s2475] sm:$0xff]
      %v2477 = vld [vmem:[%s2475 + $0x8] sm:$0xff]
      %v2478 = vld [vmem:[%s2475 + $0x10] sm:$0xff]
      %v2479 = vld [vmem:[%s2475 + $0x18] sm:$0xff]
      %v2480 = vld [vmem:[%s2475 + $0x20] sm:$0xff]
      %v2481 = vld [vmem:[%s2475 + $0x28] sm:$0xff]
      %v2482 = vld [vmem:[%s2475 + $0x30] sm:$0xff]
      %v2483 = vld [vmem:[%s2475 + $0x38] sm:$0xff]
      %s2484 = scalar_lea.vmem %s3, 2
      %v2485 = vld [vmem:[%s2484] sm:$0x1]
      %v2487 = vperm.slane %v2485, 0
      %v2490 = vsel %vm1402, %v2443, 0
      %v2493 = vsel %vm1402, %v2444, 0
      %v2496 = vsel %vm1402, %v2445, 0
      %v2499 = vsel %vm1402, %v2446, 0
      %v2502 = vsel %vm1402, %v2447, 0
      %v2505 = vsel %vm1402, %v2448, 0
      %v2508 = vsel %vm1402, %v2449, 0
      %v2511 = vsel %vm1402, %v2450, 0
      %v2514 = vsel %vm1402, %v2451, 0
      %v2517 = vsel %vm1402, %v2452, 0
      %v2520 = vsel %vm1402, %v2453, 0
      %v2523 = vsel %vm1402, %v2454, 0
      %v2526 = vsel %vm1402, %v2455, 0
      %v2529 = vsel %vm1402, %v2456, 0
      %v2532 = vsel %vm1402, %v2457, 0
      %v2535 = vsel %vm1402, %v2458, 0
      %v2538 = vsel %vm1402, %v2459, 0
      %v2541 = vsel %vm1402, %v2460, 0
      %v2544 = vsel %vm1402, %v2461, 0
      %v2547 = vsel %vm1402, %v2462, 0
      %v2550 = vsel %vm1402, %v2463, 0
      %v2553 = vsel %vm1402, %v2464, 0
      %v2556 = vsel %vm1402, %v2465, 0
      %v2559 = vsel %vm1402, %v2466, 0
      %v2562 = vsel %vm1402, %v2467, 0
      %v2565 = vsel %vm1402, %v2468, 0
      %v2568 = vsel %vm1402, %v2469, 0
      %v2571 = vsel %vm1402, %v2470, 0
      %v2574 = vsel %vm1402, %v2471, 0
      %v2577 = vsel %vm1402, %v2472, 0
      %v2580 = vsel %vm1402, %v2473, 0
      %v2583 = vsel %vm1402, %v2474, 0
      %2585 = vmatpush.msra.mxu0 0.0
      %2586 = vmatpush.msra.mxu0 0.0
      %2587 = vmatpush.msra.mxu0 0.0
      %2588 = vmatpush.msra.mxu0 0.0
      %2589 = vmatpush.msra.mxu0 0.0
      %2590 = vmatpush.msra.mxu0 0.0
      %2591 = vmatpush.msra.mxu0 0.0
      %2592 = vmatpush.msra.mxu0 0.0
      %2593 = vmatpush.msra.mxu0 %v2483
      %2594 = vmatpush.msra.mxu0 %v2482
      %2595 = vmatpush.msra.mxu0 %v2481
      %2596 = vmatpush.msra.mxu0 %v2480
      %2597 = vmatpush.msra.mxu0 %v2479
      %2598 = vmatpush.msra.mxu0 %v2478
      %2599 = vmatpush.msra.mxu0 %v2477
      %2600 = vmatpush.msra.mxu0 %v2476
      %2601 = vmatmul.f32.gmra.mxu0 %v2490
      %v2602 = vpop.f32.mrf.mxu0
      %v2603 = vadd.f32 %v2487, %v2602
      %2604 = vmatmul.f32.gmra.mxu0 %v2493
      %v2605 = vpop.f32.mrf.mxu0
      %v2606 = vadd.f32 %v2487, %v2605
      %2607 = vmatmul.f32.gmra.mxu0 %v2496
      %v2608 = vpop.f32.mrf.mxu0
      %v2609 = vadd.f32 %v2487, %v2608
      %2610 = vmatmul.f32.gmra.mxu0 %v2499
      %v2611 = vpop.f32.mrf.mxu0
      %v2612 = vadd.f32 %v2487, %v2611
      %2613 = vmatmul.f32.gmra.mxu0 %v2502
      %v2614 = vpop.f32.mrf.mxu0
      %v2615 = vadd.f32 %v2487, %v2614
      %2616 = vmatmul.f32.gmra.mxu0 %v2505
      %v2617 = vpop.f32.mrf.mxu0
      %v2618 = vadd.f32 %v2487, %v2617
      %2619 = vmatmul.f32.gmra.mxu0 %v2508
      %v2620 = vpop.f32.mrf.mxu0
      %v2621 = vadd.f32 %v2487, %v2620
      %2622 = vmatmul.f32.gmra.mxu0 %v2511
      %v2623 = vpop.f32.mrf.mxu0
      %v2624 = vadd.f32 %v2487, %v2623
      %2625 = vmatmul.f32.gmra.mxu0 %v2514
      %v2626 = vpop.f32.mrf.mxu0
      %v2627 = vadd.f32 %v2487, %v2626
      %2628 = vmatmul.f32.gmra.mxu0 %v2517
      %v2629 = vpop.f32.mrf.mxu0
      %v2630 = vadd.f32 %v2487, %v2629
      %2631 = vmatmul.f32.gmra.mxu0 %v2520
      %v2632 = vpop.f32.mrf.mxu0
      %v2633 = vadd.f32 %v2487, %v2632
      %2634 = vmatmul.f32.gmra.mxu0 %v2523
      %v2635 = vpop.f32.mrf.mxu0
      %v2636 = vadd.f32 %v2487, %v2635
      %2637 = vmatmul.f32.gmra.mxu0 %v2526
      %v2638 = vpop.f32.mrf.mxu0
      %v2639 = vadd.f32 %v2487, %v2638
      %2640 = vmatmul.f32.gmra.mxu0 %v2529
      %v2641 = vpop.f32.mrf.mxu0
      %v2642 = vadd.f32 %v2487, %v2641
      %2643 = vmatmul.f32.gmra.mxu0 %v2532
      %v2644 = vpop.f32.mrf.mxu0
      %v2645 = vadd.f32 %v2487, %v2644
      %2646 = vmatmul.f32.gmra.mxu0 %v2535
      %v2647 = vpop.f32.mrf.mxu0
      %v2648 = vadd.f32 %v2487, %v2647
      %2649 = vmatmul.f32.gmra.mxu0 %v2538
      %v2650 = vpop.f32.mrf.mxu0
      %v2651 = vadd.f32 %v2487, %v2650
      %2652 = vmatmul.f32.gmra.mxu0 %v2541
      %v2653 = vpop.f32.mrf.mxu0
      %v2654 = vadd.f32 %v2487, %v2653
      %2655 = vmatmul.f32.gmra.mxu0 %v2544
      %v2656 = vpop.f32.mrf.mxu0
      %v2657 = vadd.f32 %v2487, %v2656
      %2658 = vmatmul.f32.gmra.mxu0 %v2547
      %v2659 = vpop.f32.mrf.mxu0
      %v2660 = vadd.f32 %v2487, %v2659
      %2661 = vmatmul.f32.gmra.mxu0 %v2550
      %v2662 = vpop.f32.mrf.mxu0
      %v2663 = vadd.f32 %v2487, %v2662
      %2664 = vmatmul.f32.gmra.mxu0 %v2553
      %v2665 = vpop.f32.mrf.mxu0
      %v2666 = vadd.f32 %v2487, %v2665
      %2667 = vmatmul.f32.gmra.mxu0 %v2556
      %v2668 = vpop.f32.mrf.mxu0
      %v2669 = vadd.f32 %v2487, %v2668
      %2670 = vmatmul.f32.gmra.mxu0 %v2559
      %v2671 = vpop.f32.mrf.mxu0
      %v2672 = vadd.f32 %v2487, %v2671
      %2673 = vmatmul.f32.gmra.mxu0 %v2562
      %v2674 = vpop.f32.mrf.mxu0
      %v2675 = vadd.f32 %v2487, %v2674
      %2676 = vmatmul.f32.gmra.mxu0 %v2565
      %v2677 = vpop.f32.mrf.mxu0
      %v2678 = vadd.f32 %v2487, %v2677
      %2679 = vmatmul.f32.gmra.mxu0 %v2568
      %v2680 = vpop.f32.mrf.mxu0
      %v2681 = vadd.f32 %v2487, %v2680
      %2682 = vmatmul.f32.gmra.mxu0 %v2571
      %v2683 = vpop.f32.mrf.mxu0
      %v2684 = vadd.f32 %v2487, %v2683
      %2685 = vmatmul.f32.gmra.mxu0 %v2574
      %v2686 = vpop.f32.mrf.mxu0
      %v2687 = vadd.f32 %v2487, %v2686
      %2688 = vmatmul.f32.gmra.mxu0 %v2577
      %v2689 = vpop.f32.mrf.mxu0
      %v2690 = vadd.f32 %v2487, %v2689
      %2691 = vmatmul.f32.gmra.mxu0 %v2580
      %v2692 = vpop.f32.mrf.mxu0
      %v2693 = vadd.f32 %v2487, %v2692
      %2694 = vmatmul.f32.gmra.mxu0 %v2583
      %v2695 = vpop.f32.mrf.mxu0
      %v2696 = vadd.f32 %v2487, %v2695
      %2697 = vdwg.mxu0
      %v2698 = vmul.f32 %v2603, 100.0
      %v2699 = vmul.f32 %v2606, 100.0
      %v2700 = vmul.f32 %v2609, 100.0
      %v2701 = vmul.f32 %v2612, 100.0
      %v2702 = vmul.f32 %v2615, 100.0
      %v2703 = vmul.f32 %v2618, 100.0
      %v2704 = vmul.f32 %v2621, 100.0
      %v2705 = vmul.f32 %v2624, 100.0
      %v2706 = vmul.f32 %v2627, 100.0
      %v2707 = vmul.f32 %v2630, 100.0
      %v2708 = vmul.f32 %v2633, 100.0
      %v2709 = vmul.f32 %v2636, 100.0
      %v2710 = vmul.f32 %v2639, 100.0
      %v2711 = vmul.f32 %v2642, 100.0
      %v2712 = vmul.f32 %v2645, 100.0
      %v2713 = vmul.f32 %v2648, 100.0
      %v2714 = vmul.f32 %v2651, 100.0
      %v2715 = vmul.f32 %v2654, 100.0
      %v2716 = vmul.f32 %v2657, 100.0
      %v2717 = vmul.f32 %v2660, 100.0
      %v2718 = vmul.f32 %v2663, 100.0
      %v2719 = vmul.f32 %v2666, 100.0
      %v2720 = vmul.f32 %v2669, 100.0
      %v2721 = vmul.f32 %v2672, 100.0
      %v2722 = vmul.f32 %v2675, 100.0
      %v2723 = vmul.f32 %v2678, 100.0
      %v2724 = vmul.f32 %v2681, 100.0
      %v2725 = vmul.f32 %v2684, 100.0
      %v2726 = vmul.f32 %v2687, 100.0
      %v2727 = vmul.f32 %v2690, 100.0
      %v2728 = vmul.f32 %v2693, 100.0
      %v2729 = vmul.f32 %v2696, 100.0
      %v2730 = vmin.f32 %v2698, 20.0
      %v2731 = vmin.f32 %v2699, 20.0
      %v2732 = vmin.f32 %v2700, 20.0
      %v2733 = vmin.f32 %v2701, 20.0
      %v2734 = vmin.f32 %v2702, 20.0
      %v2735 = vmin.f32 %v2703, 20.0
      %v2736 = vmin.f32 %v2704, 20.0
      %v2737 = vmin.f32 %v2705, 20.0
      %v2738 = vmin.f32 %v2706, 20.0
      %v2739 = vmin.f32 %v2707, 20.0
      %v2740 = vmin.f32 %v2708, 20.0
      %v2741 = vmin.f32 %v2709, 20.0
      %v2742 = vmin.f32 %v2710, 20.0
      %v2743 = vmin.f32 %v2711, 20.0
      %v2744 = vmin.f32 %v2712, 20.0
      %v2745 = vmin.f32 %v2713, 20.0
      %v2746 = vmin.f32 %v2714, 20.0
      %v2747 = vmin.f32 %v2715, 20.0
      %v2748 = vmin.f32 %v2716, 20.0
      %v2749 = vmin.f32 %v2717, 20.0
      %v2750 = vmin.f32 %v2718, 20.0
      %v2751 = vmin.f32 %v2719, 20.0
      %v2752 = vmin.f32 %v2720, 20.0
      %v2753 = vmin.f32 %v2721, 20.0
      %v2754 = vmin.f32 %v2722, 20.0
      %v2755 = vmin.f32 %v2723, 20.0
      %v2756 = vmin.f32 %v2724, 20.0
      %v2757 = vmin.f32 %v2725, 20.0
      %v2758 = vmin.f32 %v2726, 20.0
      %v2759 = vmin.f32 %v2727, 20.0
      %v2760 = vmin.f32 %v2728, 20.0
      %v2761 = vmin.f32 %v2729, 20.0
      %v2762 = vmul.f32 %v2730, 1.442695
      %v2763 = vpow.pop %v2762
      %v2764 = vmul.f32 %v2731, 1.442695
      %v2765 = vpow.pop %v2764
      %v2766 = vmul.f32 %v2732, 1.442695
      %v2767 = vpow.pop %v2766
      %v2768 = vmul.f32 %v2733, 1.442695
      %v2769 = vpow.pop %v2768
      %v2770 = vmul.f32 %v2734, 1.442695
      %v2771 = vpow.pop %v2770
      %v2772 = vmul.f32 %v2735, 1.442695
      %v2773 = vpow.pop %v2772
      %v2774 = vmul.f32 %v2736, 1.442695
      %v2775 = vpow.pop %v2774
      %v2776 = vmul.f32 %v2737, 1.442695
      %v2777 = vpow.pop %v2776
      %v2778 = vmul.f32 %v2738, 1.442695
      %v2779 = vpow.pop %v2778
      %v2780 = vmul.f32 %v2739, 1.442695
      %v2781 = vpow.pop %v2780
      %v2782 = vmul.f32 %v2740, 1.442695
      %v2783 = vpow.pop %v2782
      %v2784 = vmul.f32 %v2741, 1.442695
      %v2785 = vpow.pop %v2784
      %v2786 = vmul.f32 %v2742, 1.442695
      %v2787 = vpow.pop %v2786
      %v2788 = vmul.f32 %v2743, 1.442695
      %v2789 = vpow.pop %v2788
      %v2790 = vmul.f32 %v2744, 1.442695
      %v2791 = vpow.pop %v2790
      %v2792 = vmul.f32 %v2745, 1.442695
      %v2793 = vpow.pop %v2792
      %v2794 = vmul.f32 %v2746, 1.442695
      %v2795 = vpow.pop %v2794
      %v2796 = vmul.f32 %v2747, 1.442695
      %v2797 = vpow.pop %v2796
      %v2798 = vmul.f32 %v2748, 1.442695
      %v2799 = vpow.pop %v2798
      %v2800 = vmul.f32 %v2749, 1.442695
      %v2801 = vpow.pop %v2800
      %v2802 = vmul.f32 %v2750, 1.442695
      %v2803 = vpow.pop %v2802
      %v2804 = vmul.f32 %v2751, 1.442695
      %v2805 = vpow.pop %v2804
      %v2806 = vmul.f32 %v2752, 1.442695
      %v2807 = vpow.pop %v2806
      %v2808 = vmul.f32 %v2753, 1.442695
      %v2809 = vpow.pop %v2808
      %v2810 = vmul.f32 %v2754, 1.442695
      %v2811 = vpow.pop %v2810
      %v2812 = vmul.f32 %v2755, 1.442695
      %v2813 = vpow.pop %v2812
      %v2814 = vmul.f32 %v2756, 1.442695
      %v2815 = vpow.pop %v2814
      %v2816 = vmul.f32 %v2757, 1.442695
      %v2817 = vpow.pop %v2816
      %v2818 = vmul.f32 %v2758, 1.442695
      %v2819 = vpow.pop %v2818
      %v2820 = vmul.f32 %v2759, 1.442695
      %v2821 = vpow.pop %v2820
      %v2822 = vmul.f32 %v2760, 1.442695
      %v2823 = vpow.pop %v2822
      %v2824 = vmul.f32 %v2761, 1.442695
      %v2825 = vpow.pop %v2824
      %v2826 = vadd.f32 %v2763, 1.0
      %v2827 = vadd.f32 %v2765, 1.0
      %v2828 = vadd.f32 %v2767, 1.0
      %v2829 = vadd.f32 %v2769, 1.0
      %v2830 = vadd.f32 %v2771, 1.0
      %v2831 = vadd.f32 %v2773, 1.0
      %v2832 = vadd.f32 %v2775, 1.0
      %v2833 = vadd.f32 %v2777, 1.0
      %v2834 = vadd.f32 %v2779, 1.0
      %v2835 = vadd.f32 %v2781, 1.0
      %v2836 = vadd.f32 %v2783, 1.0
      %v2837 = vadd.f32 %v2785, 1.0
      %v2838 = vadd.f32 %v2787, 1.0
      %v2839 = vadd.f32 %v2789, 1.0
      %v2840 = vadd.f32 %v2791, 1.0
      %v2841 = vadd.f32 %v2793, 1.0
      %v2842 = vadd.f32 %v2795, 1.0
      %v2843 = vadd.f32 %v2797, 1.0
      %v2844 = vadd.f32 %v2799, 1.0
      %v2845 = vadd.f32 %v2801, 1.0
      %v2846 = vadd.f32 %v2803, 1.0
      %v2847 = vadd.f32 %v2805, 1.0
      %v2848 = vadd.f32 %v2807, 1.0
      %v2849 = vadd.f32 %v2809, 1.0
      %v2850 = vadd.f32 %v2811, 1.0
      %v2851 = vadd.f32 %v2813, 1.0
      %v2852 = vadd.f32 %v2815, 1.0
      %v2853 = vadd.f32 %v2817, 1.0
      %v2854 = vadd.f32 %v2819, 1.0
      %v2855 = vadd.f32 %v2821, 1.0
      %v2856 = vadd.f32 %v2823, 1.0
      %v2857 = vadd.f32 %v2825, 1.0
      %v2858 = vlog2.pop %v2826
      %v2859 = vmul.f32 %v2858, 0.6931472
      %v2860 = vlog2.pop %v2827
      %v2861 = vmul.f32 %v2860, 0.6931472
      %v2862 = vlog2.pop %v2828
      %v2863 = vmul.f32 %v2862, 0.6931472
      %v2864 = vlog2.pop %v2829
      %v2865 = vmul.f32 %v2864, 0.6931472
      %v2866 = vlog2.pop %v2830
      %v2867 = vmul.f32 %v2866, 0.6931472
      %v2868 = vlog2.pop %v2831
      %v2869 = vmul.f32 %v2868, 0.6931472
      %v2870 = vlog2.pop %v2832
      %v2871 = vmul.f32 %v2870, 0.6931472
      %v2872 = vlog2.pop %v2833
      %v2873 = vmul.f32 %v2872, 0.6931472
      %v2874 = vlog2.pop %v2834
      %v2875 = vmul.f32 %v2874, 0.6931472
      %v2876 = vlog2.pop %v2835
      %v2877 = vmul.f32 %v2876, 0.6931472
      %v2878 = vlog2.pop %v2836
      %v2879 = vmul.f32 %v2878, 0.6931472
      %v2880 = vlog2.pop %v2837
      %v2881 = vmul.f32 %v2880, 0.6931472
      %v2882 = vlog2.pop %v2838
      %v2883 = vmul.f32 %v2882, 0.6931472
      %v2884 = vlog2.pop %v2839
      %v2885 = vmul.f32 %v2884, 0.6931472
      %v2886 = vlog2.pop %v2840
      %v2887 = vmul.f32 %v2886, 0.6931472
      %v2888 = vlog2.pop %v2841
      %v2889 = vmul.f32 %v2888, 0.6931472
      %v2890 = vlog2.pop %v2842
      %v2891 = vmul.f32 %v2890, 0.6931472
      %v2892 = vlog2.pop %v2843
      %v2893 = vmul.f32 %v2892, 0.6931472
      %v2894 = vlog2.pop %v2844
      %v2895 = vmul.f32 %v2894, 0.6931472
      %v2896 = vlog2.pop %v2845
      %v2897 = vmul.f32 %v2896, 0.6931472
      %v2898 = vlog2.pop %v2846
      %v2899 = vmul.f32 %v2898, 0.6931472
      %v2900 = vlog2.pop %v2847
      %v2901 = vmul.f32 %v2900, 0.6931472
      %v2902 = vlog2.pop %v2848
      %v2903 = vmul.f32 %v2902, 0.6931472
      %v2904 = vlog2.pop %v2849
      %v2905 = vmul.f32 %v2904, 0.6931472
      %v2906 = vlog2.pop %v2850
      %v2907 = vmul.f32 %v2906, 0.6931472
      %v2908 = vlog2.pop %v2851
      %v2909 = vmul.f32 %v2908, 0.6931472
      %v2910 = vlog2.pop %v2852
      %v2911 = vmul.f32 %v2910, 0.6931472
      %v2912 = vlog2.pop %v2853
      %v2913 = vmul.f32 %v2912, 0.6931472
      %v2914 = vlog2.pop %v2854
      %v2915 = vmul.f32 %v2914, 0.6931472
      %v2916 = vlog2.pop %v2855
      %v2917 = vmul.f32 %v2916, 0.6931472
      %v2918 = vlog2.pop %v2856
      %v2919 = vmul.f32 %v2918, 0.6931472
      %v2920 = vlog2.pop %v2857
      %v2921 = vmul.f32 %v2920, 0.6931472
      %v2922 = vmul.f32 %v2859, %v1130
      %v2923 = vmul.f32 %v2861, %v1130
      %v2924 = vmul.f32 %v2863, %v1130
      %v2925 = vmul.f32 %v2865, %v1130
      %v2926 = vmul.f32 %v2867, %v1130
      %v2927 = vmul.f32 %v2869, %v1130
      %v2928 = vmul.f32 %v2871, %v1130
      %v2929 = vmul.f32 %v2873, %v1130
      %v2930 = vmul.f32 %v2875, %v1130
      %v2931 = vmul.f32 %v2877, %v1130
      %v2932 = vmul.f32 %v2879, %v1130
      %v2933 = vmul.f32 %v2881, %v1130
      %v2934 = vmul.f32 %v2883, %v1130
      %v2935 = vmul.f32 %v2885, %v1130
      %v2936 = vmul.f32 %v2887, %v1130
      %v2937 = vmul.f32 %v2889, %v1130
      %v2938 = vmul.f32 %v2891, %v1130
      %v2939 = vmul.f32 %v2893, %v1130
      %v2940 = vmul.f32 %v2895, %v1130
      %v2941 = vmul.f32 %v2897, %v1130
      %v2942 = vmul.f32 %v2899, %v1130
      %v2943 = vmul.f32 %v2901, %v1130
      %v2944 = vmul.f32 %v2903, %v1130
      %v2945 = vmul.f32 %v2905, %v1130
      %v2946 = vmul.f32 %v2907, %v1130
      %v2947 = vmul.f32 %v2909, %v1130
      %v2948 = vmul.f32 %v2911, %v1130
      %v2949 = vmul.f32 %v2913, %v1130
      %v2950 = vmul.f32 %v2915, %v1130
      %v2951 = vmul.f32 %v2917, %v1130
      %v2952 = vmul.f32 %v2919, %v1130
      %v2953 = vmul.f32 %v2921, %v1130
      %vm2954 = vcmp.gt.f32.partialorder %v2698, 20.0
      %vm2955 = vcmp.gt.f32.partialorder %v2699, 20.0
      %vm2956 = vcmp.gt.f32.partialorder %v2700, 20.0
      %vm2957 = vcmp.gt.f32.partialorder %v2701, 20.0
      %vm2958 = vcmp.gt.f32.partialorder %v2702, 20.0
      %vm2959 = vcmp.gt.f32.partialorder %v2703, 20.0
      %vm2960 = vcmp.gt.f32.partialorder %v2704, 20.0
      %vm2961 = vcmp.gt.f32.partialorder %v2705, 20.0
      %vm2962 = vcmp.gt.f32.partialorder %v2706, 20.0
      %vm2963 = vcmp.gt.f32.partialorder %v2707, 20.0
      %vm2964 = vcmp.gt.f32.partialorder %v2708, 20.0
      %vm2965 = vcmp.gt.f32.partialorder %v2709, 20.0
      %vm2966 = vcmp.gt.f32.partialorder %v2710, 20.0
      %vm2967 = vcmp.gt.f32.partialorder %v2711, 20.0
      %vm2968 = vcmp.gt.f32.partialorder %v2712, 20.0
      %vm2969 = vcmp.gt.f32.partialorder %v2713, 20.0
      %vm2970 = vcmp.gt.f32.partialorder %v2714, 20.0
      %vm2971 = vcmp.gt.f32.partialorder %v2715, 20.0
      %vm2972 = vcmp.gt.f32.partialorder %v2716, 20.0
      %vm2973 = vcmp.gt.f32.partialorder %v2717, 20.0
      %vm2974 = vcmp.gt.f32.partialorder %v2718, 20.0
      %vm2975 = vcmp.gt.f32.partialorder %v2719, 20.0
      %vm2976 = vcmp.gt.f32.partialorder %v2720, 20.0
      %vm2977 = vcmp.gt.f32.partialorder %v2721, 20.0
      %vm2978 = vcmp.gt.f32.partialorder %v2722, 20.0
      %vm2979 = vcmp.gt.f32.partialorder %v2723, 20.0
      %vm2980 = vcmp.gt.f32.partialorder %v2724, 20.0
      %vm2981 = vcmp.gt.f32.partialorder %v2725, 20.0
      %vm2982 = vcmp.gt.f32.partialorder %v2726, 20.0
      %vm2983 = vcmp.gt.f32.partialorder %v2727, 20.0
      %vm2984 = vcmp.gt.f32.partialorder %v2728, 20.0
      %vm2985 = vcmp.gt.f32.partialorder %v2729, 20.0
      %v2986 = vsel %vm2954, %v2603, %v2922
      %v2987 = vsel %vm2955, %v2606, %v2923
      %v2988 = vsel %vm2956, %v2609, %v2924
      %v2989 = vsel %vm2957, %v2612, %v2925
      %v2990 = vsel %vm2958, %v2615, %v2926
      %v2991 = vsel %vm2959, %v2618, %v2927
      %v2992 = vsel %vm2960, %v2621, %v2928
      %v2993 = vsel %vm2961, %v2624, %v2929
      %v2994 = vsel %vm2962, %v2627, %v2930
      %v2995 = vsel %vm2963, %v2630, %v2931
      %v2996 = vsel %vm2964, %v2633, %v2932
      %v2997 = vsel %vm2965, %v2636, %v2933
      %v2998 = vsel %vm2966, %v2639, %v2934
      %v2999 = vsel %vm2967, %v2642, %v2935
      %v3000 = vsel %vm2968, %v2645, %v2936
      %v3001 = vsel %vm2969, %v2648, %v2937
      %v3002 = vsel %vm2970, %v2651, %v2938
      %v3003 = vsel %vm2971, %v2654, %v2939
      %v3004 = vsel %vm2972, %v2657, %v2940
      %v3005 = vsel %vm2973, %v2660, %v2941
      %v3006 = vsel %vm2974, %v2663, %v2942
      %v3007 = vsel %vm2975, %v2666, %v2943
      %v3008 = vsel %vm2976, %v2669, %v2944
      %v3009 = vsel %vm2977, %v2672, %v2945
      %v3010 = vsel %vm2978, %v2675, %v2946
      %v3011 = vsel %vm2979, %v2678, %v2947
      %v3012 = vsel %vm2980, %v2681, %v2948
      %v3013 = vsel %vm2981, %v2684, %v2949
      %v3014 = vsel %vm2982, %v2687, %v2950
      %v3015 = vsel %vm2983, %v2690, %v2951
      %v3016 = vsel %vm2984, %v2693, %v2952
      %v3017 = vsel %vm2985, %v2696, %v2953
      %s3018 = scalar_lea.vmem %s2, 192
      %v3019 = vld [vmem:[%s3018] sm:$0xff]
      %v3020 = vld [vmem:[%s3018 + $0x8] sm:$0xff]
      %v3021 = vld [vmem:[%s3018 + $0x10] sm:$0xff]
      %v3022 = vld [vmem:[%s3018 + $0x18] sm:$0xff]
      %v3023 = vld [vmem:[%s3018 + $0x20] sm:$0xff]
      %v3024 = vld [vmem:[%s3018 + $0x28] sm:$0xff]
      %v3025 = vld [vmem:[%s3018 + $0x30] sm:$0xff]
      %v3026 = vld [vmem:[%s3018 + $0x38] sm:$0xff]
      %s3027 = scalar_lea.vmem %s3, 3
      %v3028 = vld [vmem:[%s3027] sm:$0x1]
      %v3030 = vperm.slane %v3028, 0
      %v3033 = vsel %vm1402, %v2986, 0
      %v3036 = vsel %vm1402, %v2987, 0
      %v3039 = vsel %vm1402, %v2988, 0
      %v3042 = vsel %vm1402, %v2989, 0
      %v3045 = vsel %vm1402, %v2990, 0
      %v3048 = vsel %vm1402, %v2991, 0
      %v3051 = vsel %vm1402, %v2992, 0
      %v3054 = vsel %vm1402, %v2993, 0
      %v3057 = vsel %vm1402, %v2994, 0
      %v3060 = vsel %vm1402, %v2995, 0
      %v3063 = vsel %vm1402, %v2996, 0
      %v3066 = vsel %vm1402, %v2997, 0
      %v3069 = vsel %vm1402, %v2998, 0
      %v3072 = vsel %vm1402, %v2999, 0
      %v3075 = vsel %vm1402, %v3000, 0
      %v3078 = vsel %vm1402, %v3001, 0
      %v3081 = vsel %vm1402, %v3002, 0
      %v3084 = vsel %vm1402, %v3003, 0
      %v3087 = vsel %vm1402, %v3004, 0
      %v3090 = vsel %vm1402, %v3005, 0
      %v3093 = vsel %vm1402, %v3006, 0
      %v3096 = vsel %vm1402, %v3007, 0
      %v3099 = vsel %vm1402, %v3008, 0
      %v3102 = vsel %vm1402, %v3009, 0
      %v3105 = vsel %vm1402, %v3010, 0
      %v3108 = vsel %vm1402, %v3011, 0
      %v3111 = vsel %vm1402, %v3012, 0
      %v3114 = vsel %vm1402, %v3013, 0
      %v3117 = vsel %vm1402, %v3014, 0
      %v3120 = vsel %vm1402, %v3015, 0
      %v3123 = vsel %vm1402, %v3016, 0
      %v3126 = vsel %vm1402, %v3017, 0
      %3128 = vmatpush.msra.mxu0 0.0
      %3129 = vmatpush.msra.mxu0 0.0
      %3130 = vmatpush.msra.mxu0 0.0
      %3131 = vmatpush.msra.mxu0 0.0
      %3132 = vmatpush.msra.mxu0 0.0
      %3133 = vmatpush.msra.mxu0 0.0
      %3134 = vmatpush.msra.mxu0 0.0
      %3135 = vmatpush.msra.mxu0 0.0
      %3136 = vmatpush.msra.mxu0 %v3026
      %3137 = vmatpush.msra.mxu0 %v3025
      %3138 = vmatpush.msra.mxu0 %v3024
      %3139 = vmatpush.msra.mxu0 %v3023
      %3140 = vmatpush.msra.mxu0 %v3022
      %3141 = vmatpush.msra.mxu0 %v3021
      %3142 = vmatpush.msra.mxu0 %v3020
      %3143 = vmatpush.msra.mxu0 %v3019
      %3144 = vmatmul.f32.gmra.mxu0 %v3033
      %v3145 = vpop.f32.mrf.mxu0
      %v3146 = vadd.f32 %v3030, %v3145
      %3147 = vmatmul.f32.gmra.mxu0 %v3036
      %v3148 = vpop.f32.mrf.mxu0
      %v3149 = vadd.f32 %v3030, %v3148
      %3150 = vmatmul.f32.gmra.mxu0 %v3039
      %v3151 = vpop.f32.mrf.mxu0
      %v3152 = vadd.f32 %v3030, %v3151
      %3153 = vmatmul.f32.gmra.mxu0 %v3042
      %v3154 = vpop.f32.mrf.mxu0
      %v3155 = vadd.f32 %v3030, %v3154
      %3156 = vmatmul.f32.gmra.mxu0 %v3045
      %v3157 = vpop.f32.mrf.mxu0
      %v3158 = vadd.f32 %v3030, %v3157
      %3159 = vmatmul.f32.gmra.mxu0 %v3048
      %v3160 = vpop.f32.mrf.mxu0
      %v3161 = vadd.f32 %v3030, %v3160
      %3162 = vmatmul.f32.gmra.mxu0 %v3051
      %v3163 = vpop.f32.mrf.mxu0
      %v3164 = vadd.f32 %v3030, %v3163
      %3165 = vmatmul.f32.gmra.mxu0 %v3054
      %v3166 = vpop.f32.mrf.mxu0
      %v3167 = vadd.f32 %v3030, %v3166
      %3168 = vmatmul.f32.gmra.mxu0 %v3057
      %v3169 = vpop.f32.mrf.mxu0
      %v3170 = vadd.f32 %v3030, %v3169
      %3171 = vmatmul.f32.gmra.mxu0 %v3060
      %v3172 = vpop.f32.mrf.mxu0
      %v3173 = vadd.f32 %v3030, %v3172
      %3174 = vmatmul.f32.gmra.mxu0 %v3063
      %v3175 = vpop.f32.mrf.mxu0
      %v3176 = vadd.f32 %v3030, %v3175
      %3177 = vmatmul.f32.gmra.mxu0 %v3066
      %v3178 = vpop.f32.mrf.mxu0
      %v3179 = vadd.f32 %v3030, %v3178
      %3180 = vmatmul.f32.gmra.mxu0 %v3069
      %v3181 = vpop.f32.mrf.mxu0
      %v3182 = vadd.f32 %v3030, %v3181
      %3183 = vmatmul.f32.gmra.mxu0 %v3072
      %v3184 = vpop.f32.mrf.mxu0
      %v3185 = vadd.f32 %v3030, %v3184
      %3186 = vmatmul.f32.gmra.mxu0 %v3075
      %v3187 = vpop.f32.mrf.mxu0
      %v3188 = vadd.f32 %v3030, %v3187
      %3189 = vmatmul.f32.gmra.mxu0 %v3078
      %v3190 = vpop.f32.mrf.mxu0
      %v3191 = vadd.f32 %v3030, %v3190
      %3192 = vmatmul.f32.gmra.mxu0 %v3081
      %v3193 = vpop.f32.mrf.mxu0
      %v3194 = vadd.f32 %v3030, %v3193
      %3195 = vmatmul.f32.gmra.mxu0 %v3084
      %v3196 = vpop.f32.mrf.mxu0
      %v3197 = vadd.f32 %v3030, %v3196
      %3198 = vmatmul.f32.gmra.mxu0 %v3087
      %v3199 = vpop.f32.mrf.mxu0
      %v3200 = vadd.f32 %v3030, %v3199
      %3201 = vmatmul.f32.gmra.mxu0 %v3090
      %v3202 = vpop.f32.mrf.mxu0
      %v3203 = vadd.f32 %v3030, %v3202
      %3204 = vmatmul.f32.gmra.mxu0 %v3093
      %v3205 = vpop.f32.mrf.mxu0
      %v3206 = vadd.f32 %v3030, %v3205
      %3207 = vmatmul.f32.gmra.mxu0 %v3096
      %v3208 = vpop.f32.mrf.mxu0
      %v3209 = vadd.f32 %v3030, %v3208
      %3210 = vmatmul.f32.gmra.mxu0 %v3099
      %v3211 = vpop.f32.mrf.mxu0
      %v3212 = vadd.f32 %v3030, %v3211
      %3213 = vmatmul.f32.gmra.mxu0 %v3102
      %v3214 = vpop.f32.mrf.mxu0
      %v3215 = vadd.f32 %v3030, %v3214
      %3216 = vmatmul.f32.gmra.mxu0 %v3105
      %v3217 = vpop.f32.mrf.mxu0
      %v3218 = vadd.f32 %v3030, %v3217
      %3219 = vmatmul.f32.gmra.mxu0 %v3108
      %v3220 = vpop.f32.mrf.mxu0
      %v3221 = vadd.f32 %v3030, %v3220
      %3222 = vmatmul.f32.gmra.mxu0 %v3111
      %v3223 = vpop.f32.mrf.mxu0
      %v3224 = vadd.f32 %v3030, %v3223
      %3225 = vmatmul.f32.gmra.mxu0 %v3114
      %v3226 = vpop.f32.mrf.mxu0
      %v3227 = vadd.f32 %v3030, %v3226
      %3228 = vmatmul.f32.gmra.mxu0 %v3117
      %v3229 = vpop.f32.mrf.mxu0
      %v3230 = vadd.f32 %v3030, %v3229
      %3231 = vmatmul.f32.gmra.mxu0 %v3120
      %v3232 = vpop.f32.mrf.mxu0
      %v3233 = vadd.f32 %v3030, %v3232
      %3234 = vmatmul.f32.gmra.mxu0 %v3123
      %v3235 = vpop.f32.mrf.mxu0
      %v3236 = vadd.f32 %v3030, %v3235
      %3237 = vmatmul.f32.gmra.mxu0 %v3126
      %v3238 = vpop.f32.mrf.mxu0
      %v3239 = vadd.f32 %v3030, %v3238
      %3240 = vdwg.mxu0
      %v3241 = vadd.f32 %v3146, %v1358
      %v3242 = vadd.f32 %v3149, %v1359
      %v3243 = vadd.f32 %v3152, %v1360
      %v3244 = vadd.f32 %v3155, %v1361
      %v3245 = vadd.f32 %v3158, %v1362
      %v3246 = vadd.f32 %v3161, %v1363
      %v3247 = vadd.f32 %v3164, %v1364
      %v3248 = vadd.f32 %v3167, %v1365
      %v3249 = vadd.f32 %v3170, %v1366
      %v3250 = vadd.f32 %v3173, %v1367
      %v3251 = vadd.f32 %v3176, %v1368
      %v3252 = vadd.f32 %v3179, %v1369
      %v3253 = vadd.f32 %v3182, %v1370
      %v3254 = vadd.f32 %v3185, %v1371
      %v3255 = vadd.f32 %v3188, %v1372
      %v3256 = vadd.f32 %v3191, %v1373
      %v3257 = vadd.f32 %v3194, %v1374
      %v3258 = vadd.f32 %v3197, %v1375
      %v3259 = vadd.f32 %v3200, %v1376
      %v3260 = vadd.f32 %v3203, %v1377
      %v3261 = vadd.f32 %v3206, %v1378
      %v3262 = vadd.f32 %v3209, %v1379
      %v3263 = vadd.f32 %v3212, %v1380
      %v3264 = vadd.f32 %v3215, %v1381
      %v3265 = vadd.f32 %v3218, %v1382
      %v3266 = vadd.f32 %v3221, %v1383
      %v3267 = vadd.f32 %v3224, %v1384
      %v3268 = vadd.f32 %v3227, %v1385
      %v3269 = vadd.f32 %v3230, %v1386
      %v3270 = vadd.f32 %v3233, %v1387
      %v3271 = vadd.f32 %v3236, %v1388
      %v3272 = vadd.f32 %v3239, %v1389
      %v3273 = vmul.f32 %v3241, 100.0
      %v3274 = vmul.f32 %v3242, 100.0
      %v3275 = vmul.f32 %v3243, 100.0
      %v3276 = vmul.f32 %v3244, 100.0
      %v3277 = vmul.f32 %v3245, 100.0
      %v3278 = vmul.f32 %v3246, 100.0
      %v3279 = vmul.f32 %v3247, 100.0
      %v3280 = vmul.f32 %v3248, 100.0
      %v3281 = vmul.f32 %v3249, 100.0
      %v3282 = vmul.f32 %v3250, 100.0
      %v3283 = vmul.f32 %v3251, 100.0
      %v3284 = vmul.f32 %v3252, 100.0
      %v3285 = vmul.f32 %v3253, 100.0
      %v3286 = vmul.f32 %v3254, 100.0
      %v3287 = vmul.f32 %v3255, 100.0
      %v3288 = vmul.f32 %v3256, 100.0
      %v3289 = vmul.f32 %v3257, 100.0
      %v3290 = vmul.f32 %v3258, 100.0
      %v3291 = vmul.f32 %v3259, 100.0
      %v3292 = vmul.f32 %v3260, 100.0
      %v3293 = vmul.f32 %v3261, 100.0
      %v3294 = vmul.f32 %v3262, 100.0
      %v3295 = vmul.f32 %v3263, 100.0
      %v3296 = vmul.f32 %v3264, 100.0
      %v3297 = vmul.f32 %v3265, 100.0
      %v3298 = vmul.f32 %v3266, 100.0
      %v3299 = vmul.f32 %v3267, 100.0
      %v3300 = vmul.f32 %v3268, 100.0
      %v3301 = vmul.f32 %v3269, 100.0
      %v3302 = vmul.f32 %v3270, 100.0
      %v3303 = vmul.f32 %v3271, 100.0
      %v3304 = vmul.f32 %v3272, 100.0
      %v3305 = vmin.f32 %v3273, 20.0
      %v3306 = vmin.f32 %v3274, 20.0
      %v3307 = vmin.f32 %v3275, 20.0
      %v3308 = vmin.f32 %v3276, 20.0
      %v3309 = vmin.f32 %v3277, 20.0
      %v3310 = vmin.f32 %v3278, 20.0
      %v3311 = vmin.f32 %v3279, 20.0
      %v3312 = vmin.f32 %v3280, 20.0
      %v3313 = vmin.f32 %v3281, 20.0
      %v3314 = vmin.f32 %v3282, 20.0
      %v3315 = vmin.f32 %v3283, 20.0
      %v3316 = vmin.f32 %v3284, 20.0
      %v3317 = vmin.f32 %v3285, 20.0
      %v3318 = vmin.f32 %v3286, 20.0
      %v3319 = vmin.f32 %v3287, 20.0
      %v3320 = vmin.f32 %v3288, 20.0
      %v3321 = vmin.f32 %v3289, 20.0
      %v3322 = vmin.f32 %v3290, 20.0
      %v3323 = vmin.f32 %v3291, 20.0
      %v3324 = vmin.f32 %v3292, 20.0
      %v3325 = vmin.f32 %v3293, 20.0
      %v3326 = vmin.f32 %v3294, 20.0
      %v3327 = vmin.f32 %v3295, 20.0
      %v3328 = vmin.f32 %v3296, 20.0
      %v3329 = vmin.f32 %v3297, 20.0
      %v3330 = vmin.f32 %v3298, 20.0
      %v3331 = vmin.f32 %v3299, 20.0
      %v3332 = vmin.f32 %v3300, 20.0
      %v3333 = vmin.f32 %v3301, 20.0
      %v3334 = vmin.f32 %v3302, 20.0
      %v3335 = vmin.f32 %v3303, 20.0
      %v3336 = vmin.f32 %v3304, 20.0
      %v3337 = vmul.f32 %v3305, 1.442695
      %v3338 = vpow.pop %v3337
      %v3339 = vmul.f32 %v3306, 1.442695
      %v3340 = vpow.pop %v3339
      %v3341 = vmul.f32 %v3307, 1.442695
      %v3342 = vpow.pop %v3341
      %v3343 = vmul.f32 %v3308, 1.442695
      %v3344 = vpow.pop %v3343
      %v3345 = vmul.f32 %v3309, 1.442695
      %v3346 = vpow.pop %v3345
      %v3347 = vmul.f32 %v3310, 1.442695
      %v3348 = vpow.pop %v3347
      %v3349 = vmul.f32 %v3311, 1.442695
      %v3350 = vpow.pop %v3349
      %v3351 = vmul.f32 %v3312, 1.442695
      %v3352 = vpow.pop %v3351
      %v3353 = vmul.f32 %v3313, 1.442695
      %v3354 = vpow.pop %v3353
      %v3355 = vmul.f32 %v3314, 1.442695
      %v3356 = vpow.pop %v3355
      %v3357 = vmul.f32 %v3315, 1.442695
      %v3358 = vpow.pop %v3357
      %v3359 = vmul.f32 %v3316, 1.442695
      %v3360 = vpow.pop %v3359
      %v3361 = vmul.f32 %v3317, 1.442695
      %v3362 = vpow.pop %v3361
      %v3363 = vmul.f32 %v3318, 1.442695
      %v3364 = vpow.pop %v3363
      %v3365 = vmul.f32 %v3319, 1.442695
      %v3366 = vpow.pop %v3365
      %v3367 = vmul.f32 %v3320, 1.442695
      %v3368 = vpow.pop %v3367
      %v3369 = vmul.f32 %v3321, 1.442695
      %v3370 = vpow.pop %v3369
      %v3371 = vmul.f32 %v3322, 1.442695
      %v3372 = vpow.pop %v3371
      %v3373 = vmul.f32 %v3323, 1.442695
      %v3374 = vpow.pop %v3373
      %v3375 = vmul.f32 %v3324, 1.442695
      %v3376 = vpow.pop %v3375
      %v3377 = vmul.f32 %v3325, 1.442695
      %v3378 = vpow.pop %v3377
      %v3379 = vmul.f32 %v3326, 1.442695
      %v3380 = vpow.pop %v3379
      %v3381 = vmul.f32 %v3327, 1.442695
      %v3382 = vpow.pop %v3381
      %v3383 = vmul.f32 %v3328, 1.442695
      %v3384 = vpow.pop %v3383
      %v3385 = vmul.f32 %v3329, 1.442695
      %v3386 = vpow.pop %v3385
      %v3387 = vmul.f32 %v3330, 1.442695
      %v3388 = vpow.pop %v3387
      %v3389 = vmul.f32 %v3331, 1.442695
      %v3390 = vpow.pop %v3389
      %v3391 = vmul.f32 %v3332, 1.442695
      %v3392 = vpow.pop %v3391
      %v3393 = vmul.f32 %v3333, 1.442695
      %v3394 = vpow.pop %v3393
      %v3395 = vmul.f32 %v3334, 1.442695
      %v3396 = vpow.pop %v3395
      %v3397 = vmul.f32 %v3335, 1.442695
      %v3398 = vpow.pop %v3397
      %v3399 = vmul.f32 %v3336, 1.442695
      %v3400 = vpow.pop %v3399
      %v3401 = vadd.f32 %v3338, 1.0
      %v3402 = vadd.f32 %v3340, 1.0
      %v3403 = vadd.f32 %v3342, 1.0
      %v3404 = vadd.f32 %v3344, 1.0
      %v3405 = vadd.f32 %v3346, 1.0
      %v3406 = vadd.f32 %v3348, 1.0
      %v3407 = vadd.f32 %v3350, 1.0
      %v3408 = vadd.f32 %v3352, 1.0
      %v3409 = vadd.f32 %v3354, 1.0
      %v3410 = vadd.f32 %v3356, 1.0
      %v3411 = vadd.f32 %v3358, 1.0
      %v3412 = vadd.f32 %v3360, 1.0
      %v3413 = vadd.f32 %v3362, 1.0
      %v3414 = vadd.f32 %v3364, 1.0
      %v3415 = vadd.f32 %v3366, 1.0
      %v3416 = vadd.f32 %v3368, 1.0
      %v3417 = vadd.f32 %v3370, 1.0
      %v3418 = vadd.f32 %v3372, 1.0
      %v3419 = vadd.f32 %v3374, 1.0
      %v3420 = vadd.f32 %v3376, 1.0
      %v3421 = vadd.f32 %v3378, 1.0
      %v3422 = vadd.f32 %v3380, 1.0
      %v3423 = vadd.f32 %v3382, 1.0
      %v3424 = vadd.f32 %v3384, 1.0
      %v3425 = vadd.f32 %v3386, 1.0
      %v3426 = vadd.f32 %v3388, 1.0
      %v3427 = vadd.f32 %v3390, 1.0
      %v3428 = vadd.f32 %v3392, 1.0
      %v3429 = vadd.f32 %v3394, 1.0
      %v3430 = vadd.f32 %v3396, 1.0
      %v3431 = vadd.f32 %v3398, 1.0
      %v3432 = vadd.f32 %v3400, 1.0
      %v3433 = vlog2.pop %v3401
      %v3434 = vmul.f32 %v3433, 0.6931472
      %v3435 = vlog2.pop %v3402
      %v3436 = vmul.f32 %v3435, 0.6931472
      %v3437 = vlog2.pop %v3403
      %v3438 = vmul.f32 %v3437, 0.6931472
      %v3439 = vlog2.pop %v3404
      %v3440 = vmul.f32 %v3439, 0.6931472
      %v3441 = vlog2.pop %v3405
      %v3442 = vmul.f32 %v3441, 0.6931472
      %v3443 = vlog2.pop %v3406
      %v3444 = vmul.f32 %v3443, 0.6931472
      %v3445 = vlog2.pop %v3407
      %v3446 = vmul.f32 %v3445, 0.6931472
      %v3447 = vlog2.pop %v3408
      %v3448 = vmul.f32 %v3447, 0.6931472
      %v3449 = vlog2.pop %v3409
      %v3450 = vmul.f32 %v3449, 0.6931472
      %v3451 = vlog2.pop %v3410
      %v3452 = vmul.f32 %v3451, 0.6931472
      %v3453 = vlog2.pop %v3411
      %v3454 = vmul.f32 %v3453, 0.6931472
      %v3455 = vlog2.pop %v3412
      %v3456 = vmul.f32 %v3455, 0.6931472
      %v3457 = vlog2.pop %v3413
      %v3458 = vmul.f32 %v3457, 0.6931472
      %v3459 = vlog2.pop %v3414
      %v3460 = vmul.f32 %v3459, 0.6931472
      %v3461 = vlog2.pop %v3415
      %v3462 = vmul.f32 %v3461, 0.6931472
      %v3463 = vlog2.pop %v3416
      %v3464 = vmul.f32 %v3463, 0.6931472
      %v3465 = vlog2.pop %v3417
      %v3466 = vmul.f32 %v3465, 0.6931472
      %v3467 = vlog2.pop %v3418
      %v3468 = vmul.f32 %v3467, 0.6931472
      %v3469 = vlog2.pop %v3419
      %v3470 = vmul.f32 %v3469, 0.6931472
      %v3471 = vlog2.pop %v3420
      %v3472 = vmul.f32 %v3471, 0.6931472
      %v3473 = vlog2.pop %v3421
      %v3474 = vmul.f32 %v3473, 0.6931472
      %v3475 = vlog2.pop %v3422
      %v3476 = vmul.f32 %v3475, 0.6931472
      %v3477 = vlog2.pop %v3423
      %v3478 = vmul.f32 %v3477, 0.6931472
      %v3479 = vlog2.pop %v3424
      %v3480 = vmul.f32 %v3479, 0.6931472
      %v3481 = vlog2.pop %v3425
      %v3482 = vmul.f32 %v3481, 0.6931472
      %v3483 = vlog2.pop %v3426
      %v3484 = vmul.f32 %v3483, 0.6931472
      %v3485 = vlog2.pop %v3427
      %v3486 = vmul.f32 %v3485, 0.6931472
      %v3487 = vlog2.pop %v3428
      %v3488 = vmul.f32 %v3487, 0.6931472
      %v3489 = vlog2.pop %v3429
      %v3490 = vmul.f32 %v3489, 0.6931472
      %v3491 = vlog2.pop %v3430
      %v3492 = vmul.f32 %v3491, 0.6931472
      %v3493 = vlog2.pop %v3431
      %v3494 = vmul.f32 %v3493, 0.6931472
      %v3495 = vlog2.pop %v3432
      %v3496 = vmul.f32 %v3495, 0.6931472
      %v3497 = vmul.f32 %v3434, %v1130
      %v3498 = vmul.f32 %v3436, %v1130
      %v3499 = vmul.f32 %v3438, %v1130
      %v3500 = vmul.f32 %v3440, %v1130
      %v3501 = vmul.f32 %v3442, %v1130
      %v3502 = vmul.f32 %v3444, %v1130
      %v3503 = vmul.f32 %v3446, %v1130
      %v3504 = vmul.f32 %v3448, %v1130
      %v3505 = vmul.f32 %v3450, %v1130
      %v3506 = vmul.f32 %v3452, %v1130
      %v3507 = vmul.f32 %v3454, %v1130
      %v3508 = vmul.f32 %v3456, %v1130
      %v3509 = vmul.f32 %v3458, %v1130
      %v3510 = vmul.f32 %v3460, %v1130
      %v3511 = vmul.f32 %v3462, %v1130
      %v3512 = vmul.f32 %v3464, %v1130
      %v3513 = vmul.f32 %v3466, %v1130
      %v3514 = vmul.f32 %v3468, %v1130
      %v3515 = vmul.f32 %v3470, %v1130
      %v3516 = vmul.f32 %v3472, %v1130
      %v3517 = vmul.f32 %v3474, %v1130
      %v3518 = vmul.f32 %v3476, %v1130
      %v3519 = vmul.f32 %v3478, %v1130
      %v3520 = vmul.f32 %v3480, %v1130
      %v3521 = vmul.f32 %v3482, %v1130
      %v3522 = vmul.f32 %v3484, %v1130
      %v3523 = vmul.f32 %v3486, %v1130
      %v3524 = vmul.f32 %v3488, %v1130
      %v3525 = vmul.f32 %v3490, %v1130
      %v3526 = vmul.f32 %v3492, %v1130
      %v3527 = vmul.f32 %v3494, %v1130
      %v3528 = vmul.f32 %v3496, %v1130
      %vm3529 = vcmp.gt.f32.partialorder %v3273, 20.0
      %vm3530 = vcmp.gt.f32.partialorder %v3274, 20.0
      %vm3531 = vcmp.gt.f32.partialorder %v3275, 20.0
      %vm3532 = vcmp.gt.f32.partialorder %v3276, 20.0
      %vm3533 = vcmp.gt.f32.partialorder %v3277, 20.0
      %vm3534 = vcmp.gt.f32.partialorder %v3278, 20.0
      %vm3535 = vcmp.gt.f32.partialorder %v3279, 20.0
      %vm3536 = vcmp.gt.f32.partialorder %v3280, 20.0
      %vm3537 = vcmp.gt.f32.partialorder %v3281, 20.0
      %vm3538 = vcmp.gt.f32.partialorder %v3282, 20.0
      %vm3539 = vcmp.gt.f32.partialorder %v3283, 20.0
      %vm3540 = vcmp.gt.f32.partialorder %v3284, 20.0
      %vm3541 = vcmp.gt.f32.partialorder %v3285, 20.0
      %vm3542 = vcmp.gt.f32.partialorder %v3286, 20.0
      %vm3543 = vcmp.gt.f32.partialorder %v3287, 20.0
      %vm3544 = vcmp.gt.f32.partialorder %v3288, 20.0
      %vm3545 = vcmp.gt.f32.partialorder %v3289, 20.0
      %vm3546 = vcmp.gt.f32.partialorder %v3290, 20.0
      %vm3547 = vcmp.gt.f32.partialorder %v3291, 20.0
      %vm3548 = vcmp.gt.f32.partialorder %v3292, 20.0
      %vm3549 = vcmp.gt.f32.partialorder %v3293, 20.0
      %vm3550 = vcmp.gt.f32.partialorder %v3294, 20.0
      %vm3551 = vcmp.gt.f32.partialorder %v3295, 20.0
      %vm3552 = vcmp.gt.f32.partialorder %v3296, 20.0
      %vm3553 = vcmp.gt.f32.partialorder %v3297, 20.0
      %vm3554 = vcmp.gt.f32.partialorder %v3298, 20.0
      %vm3555 = vcmp.gt.f32.partialorder %v3299, 20.0
      %vm3556 = vcmp.gt.f32.partialorder %v3300, 20.0
      %vm3557 = vcmp.gt.f32.partialorder %v3301, 20.0
      %vm3558 = vcmp.gt.f32.partialorder %v3302, 20.0
      %vm3559 = vcmp.gt.f32.partialorder %v3303, 20.0
      %vm3560 = vcmp.gt.f32.partialorder %v3304, 20.0
      %v3561 = vsel %vm3529, %v3241, %v3497
      %v3562 = vsel %vm3530, %v3242, %v3498
      %v3563 = vsel %vm3531, %v3243, %v3499
      %v3564 = vsel %vm3532, %v3244, %v3500
      %v3565 = vsel %vm3533, %v3245, %v3501
      %v3566 = vsel %vm3534, %v3246, %v3502
      %v3567 = vsel %vm3535, %v3247, %v3503
      %v3568 = vsel %vm3536, %v3248, %v3504
      %v3569 = vsel %vm3537, %v3249, %v3505
      %v3570 = vsel %vm3538, %v3250, %v3506
      %v3571 = vsel %vm3539, %v3251, %v3507
      %v3572 = vsel %vm3540, %v3252, %v3508
      %v3573 = vsel %vm3541, %v3253, %v3509
      %v3574 = vsel %vm3542, %v3254, %v3510
      %v3575 = vsel %vm3543, %v3255, %v3511
      %v3576 = vsel %vm3544, %v3256, %v3512
      %v3577 = vsel %vm3545, %v3257, %v3513
      %v3578 = vsel %vm3546, %v3258, %v3514
      %v3579 = vsel %vm3547, %v3259, %v3515
      %v3580 = vsel %vm3548, %v3260, %v3516
      %v3581 = vsel %vm3549, %v3261, %v3517
      %v3582 = vsel %vm3550, %v3262, %v3518
      %v3583 = vsel %vm3551, %v3263, %v3519
      %v3584 = vsel %vm3552, %v3264, %v3520
      %v3585 = vsel %vm3553, %v3265, %v3521
      %v3586 = vsel %vm3554, %v3266, %v3522
      %v3587 = vsel %vm3555, %v3267, %v3523
      %v3588 = vsel %vm3556, %v3268, %v3524
      %v3589 = vsel %vm3557, %v3269, %v3525
      %v3590 = vsel %vm3558, %v3270, %v3526
      %v3591 = vsel %vm3559, %v3271, %v3527
      %v3592 = vsel %vm3560, %v3272, %v3528
      %s3593 = scalar_lea.vmem %s2, 256
      %v3594 = vld [vmem:[%s3593] sm:$0xff]
      %v3595 = vld [vmem:[%s3593 + $0x8] sm:$0xff]
      %v3596 = vld [vmem:[%s3593 + $0x10] sm:$0xff]
      %v3597 = vld [vmem:[%s3593 + $0x18] sm:$0xff]
      %v3598 = vld [vmem:[%s3593 + $0x20] sm:$0xff]
      %v3599 = vld [vmem:[%s3593 + $0x28] sm:$0xff]
      %v3600 = vld [vmem:[%s3593 + $0x30] sm:$0xff]
      %v3601 = vld [vmem:[%s3593 + $0x38] sm:$0xff]
      %s3602 = scalar_lea.vmem %s3, 4
      %v3603 = vld [vmem:[%s3602] sm:$0x1]
      %v3605 = vperm.slane %v3603, 0
      %v3608 = vsel %vm1402, %v3561, 0
      %v3611 = vsel %vm1402, %v3562, 0
      %v3614 = vsel %vm1402, %v3563, 0
      %v3617 = vsel %vm1402, %v3564, 0
      %v3620 = vsel %vm1402, %v3565, 0
      %v3623 = vsel %vm1402, %v3566, 0
      %v3626 = vsel %vm1402, %v3567, 0
      %v3629 = vsel %vm1402, %v3568, 0
      %v3632 = vsel %vm1402, %v3569, 0
      %v3635 = vsel %vm1402, %v3570, 0
      %v3638 = vsel %vm1402, %v3571, 0
      %v3641 = vsel %vm1402, %v3572, 0
      %v3644 = vsel %vm1402, %v3573, 0
      %v3647 = vsel %vm1402, %v3574, 0
      %v3650 = vsel %vm1402, %v3575, 0
      %v3653 = vsel %vm1402, %v3576, 0
      %v3656 = vsel %vm1402, %v3577, 0
      %v3659 = vsel %vm1402, %v3578, 0
      %v3662 = vsel %vm1402, %v3579, 0
      %v3665 = vsel %vm1402, %v3580, 0
      %v3668 = vsel %vm1402, %v3581, 0
      %v3671 = vsel %vm1402, %v3582, 0
      %v3674 = vsel %vm1402, %v3583, 0
      %v3677 = vsel %vm1402, %v3584, 0
      %v3680 = vsel %vm1402, %v3585, 0
      %v3683 = vsel %vm1402, %v3586, 0
      %v3686 = vsel %vm1402, %v3587, 0
      %v3689 = vsel %vm1402, %v3588, 0
      %v3692 = vsel %vm1402, %v3589, 0
      %v3695 = vsel %vm1402, %v3590, 0
      %v3698 = vsel %vm1402, %v3591, 0
      %v3701 = vsel %vm1402, %v3592, 0
      %3703 = vmatpush.msra.mxu0 0.0
      %3704 = vmatpush.msra.mxu0 0.0
      %3705 = vmatpush.msra.mxu0 0.0
      %3706 = vmatpush.msra.mxu0 0.0
      %3707 = vmatpush.msra.mxu0 0.0
      %3708 = vmatpush.msra.mxu0 0.0
      %3709 = vmatpush.msra.mxu0 0.0
      %3710 = vmatpush.msra.mxu0 0.0
      %3711 = vmatpush.msra.mxu0 %v3601
      %3712 = vmatpush.msra.mxu0 %v3600
      %3713 = vmatpush.msra.mxu0 %v3599
      %3714 = vmatpush.msra.mxu0 %v3598
      %3715 = vmatpush.msra.mxu0 %v3597
      %3716 = vmatpush.msra.mxu0 %v3596
      %3717 = vmatpush.msra.mxu0 %v3595
      %3718 = vmatpush.msra.mxu0 %v3594
      %3719 = vmatmul.f32.gmra.mxu0 %v3608
      %v3720 = vpop.f32.mrf.mxu0
      %v3721 = vadd.f32 %v3605, %v3720
      %3722 = vmatmul.f32.gmra.mxu0 %v3611
      %v3723 = vpop.f32.mrf.mxu0
      %v3724 = vadd.f32 %v3605, %v3723
      %3725 = vmatmul.f32.gmra.mxu0 %v3614
      %v3726 = vpop.f32.mrf.mxu0
      %v3727 = vadd.f32 %v3605, %v3726
      %3728 = vmatmul.f32.gmra.mxu0 %v3617
      %v3729 = vpop.f32.mrf.mxu0
      %v3730 = vadd.f32 %v3605, %v3729
      %3731 = vmatmul.f32.gmra.mxu0 %v3620
      %v3732 = vpop.f32.mrf.mxu0
      %v3733 = vadd.f32 %v3605, %v3732
      %3734 = vmatmul.f32.gmra.mxu0 %v3623
      %v3735 = vpop.f32.mrf.mxu0
      %v3736 = vadd.f32 %v3605, %v3735
      %3737 = vmatmul.f32.gmra.mxu0 %v3626
      %v3738 = vpop.f32.mrf.mxu0
      %v3739 = vadd.f32 %v3605, %v3738
      %3740 = vmatmul.f32.gmra.mxu0 %v3629
      %v3741 = vpop.f32.mrf.mxu0
      %v3742 = vadd.f32 %v3605, %v3741
      %3743 = vmatmul.f32.gmra.mxu0 %v3632
      %v3744 = vpop.f32.mrf.mxu0
      %v3745 = vadd.f32 %v3605, %v3744
      %3746 = vmatmul.f32.gmra.mxu0 %v3635
      %v3747 = vpop.f32.mrf.mxu0
      %v3748 = vadd.f32 %v3605, %v3747
      %3749 = vmatmul.f32.gmra.mxu0 %v3638
      %v3750 = vpop.f32.mrf.mxu0
      %v3751 = vadd.f32 %v3605, %v3750
      %3752 = vmatmul.f32.gmra.mxu0 %v3641
      %v3753 = vpop.f32.mrf.mxu0
      %v3754 = vadd.f32 %v3605, %v3753
      %3755 = vmatmul.f32.gmra.mxu0 %v3644
      %v3756 = vpop.f32.mrf.mxu0
      %v3757 = vadd.f32 %v3605, %v3756
      %3758 = vmatmul.f32.gmra.mxu0 %v3647
      %v3759 = vpop.f32.mrf.mxu0
      %v3760 = vadd.f32 %v3605, %v3759
      %3761 = vmatmul.f32.gmra.mxu0 %v3650
      %v3762 = vpop.f32.mrf.mxu0
      %v3763 = vadd.f32 %v3605, %v3762
      %3764 = vmatmul.f32.gmra.mxu0 %v3653
      %v3765 = vpop.f32.mrf.mxu0
      %v3766 = vadd.f32 %v3605, %v3765
      %3767 = vmatmul.f32.gmra.mxu0 %v3656
      %v3768 = vpop.f32.mrf.mxu0
      %v3769 = vadd.f32 %v3605, %v3768
      %3770 = vmatmul.f32.gmra.mxu0 %v3659
      %v3771 = vpop.f32.mrf.mxu0
      %v3772 = vadd.f32 %v3605, %v3771
      %3773 = vmatmul.f32.gmra.mxu0 %v3662
      %v3774 = vpop.f32.mrf.mxu0
      %v3775 = vadd.f32 %v3605, %v3774
      %3776 = vmatmul.f32.gmra.mxu0 %v3665
      %v3777 = vpop.f32.mrf.mxu0
      %v3778 = vadd.f32 %v3605, %v3777
      %3779 = vmatmul.f32.gmra.mxu0 %v3668
      %v3780 = vpop.f32.mrf.mxu0
      %v3781 = vadd.f32 %v3605, %v3780
      %3782 = vmatmul.f32.gmra.mxu0 %v3671
      %v3783 = vpop.f32.mrf.mxu0
      %v3784 = vadd.f32 %v3605, %v3783
      %3785 = vmatmul.f32.gmra.mxu0 %v3674
      %v3786 = vpop.f32.mrf.mxu0
      %v3787 = vadd.f32 %v3605, %v3786
      %3788 = vmatmul.f32.gmra.mxu0 %v3677
      %v3789 = vpop.f32.mrf.mxu0
      %v3790 = vadd.f32 %v3605, %v3789
      %3791 = vmatmul.f32.gmra.mxu0 %v3680
      %v3792 = vpop.f32.mrf.mxu0
      %v3793 = vadd.f32 %v3605, %v3792
      %3794 = vmatmul.f32.gmra.mxu0 %v3683
      %v3795 = vpop.f32.mrf.mxu0
      %v3796 = vadd.f32 %v3605, %v3795
      %3797 = vmatmul.f32.gmra.mxu0 %v3686
      %v3798 = vpop.f32.mrf.mxu0
      %v3799 = vadd.f32 %v3605, %v3798
      %3800 = vmatmul.f32.gmra.mxu0 %v3689
      %v3801 = vpop.f32.mrf.mxu0
      %v3802 = vadd.f32 %v3605, %v3801
      %3803 = vmatmul.f32.gmra.mxu0 %v3692
      %v3804 = vpop.f32.mrf.mxu0
      %v3805 = vadd.f32 %v3605, %v3804
      %3806 = vmatmul.f32.gmra.mxu0 %v3695
      %v3807 = vpop.f32.mrf.mxu0
      %v3808 = vadd.f32 %v3605, %v3807
      %3809 = vmatmul.f32.gmra.mxu0 %v3698
      %v3810 = vpop.f32.mrf.mxu0
      %v3811 = vadd.f32 %v3605, %v3810
      %3812 = vmatmul.f32.gmra.mxu0 %v3701
      %v3813 = vpop.f32.mrf.mxu0
      %v3814 = vadd.f32 %v3605, %v3813
      %3815 = vdwg.mxu0
      %v3816 = vmul.f32 %v3721, 100.0
      %v3817 = vmul.f32 %v3724, 100.0
      %v3818 = vmul.f32 %v3727, 100.0
      %v3819 = vmul.f32 %v3730, 100.0
      %v3820 = vmul.f32 %v3733, 100.0
      %v3821 = vmul.f32 %v3736, 100.0
      %v3822 = vmul.f32 %v3739, 100.0
      %v3823 = vmul.f32 %v3742, 100.0
      %v3824 = vmul.f32 %v3745, 100.0
      %v3825 = vmul.f32 %v3748, 100.0
      %v3826 = vmul.f32 %v3751, 100.0
      %v3827 = vmul.f32 %v3754, 100.0
      %v3828 = vmul.f32 %v3757, 100.0
      %v3829 = vmul.f32 %v3760, 100.0
      %v3830 = vmul.f32 %v3763, 100.0
      %v3831 = vmul.f32 %v3766, 100.0
      %v3832 = vmul.f32 %v3769, 100.0
      %v3833 = vmul.f32 %v3772, 100.0
      %v3834 = vmul.f32 %v3775, 100.0
      %v3835 = vmul.f32 %v3778, 100.0
      %v3836 = vmul.f32 %v3781, 100.0
      %v3837 = vmul.f32 %v3784, 100.0
      %v3838 = vmul.f32 %v3787, 100.0
      %v3839 = vmul.f32 %v3790, 100.0
      %v3840 = vmul.f32 %v3793, 100.0
      %v3841 = vmul.f32 %v3796, 100.0
      %v3842 = vmul.f32 %v3799, 100.0
      %v3843 = vmul.f32 %v3802, 100.0
      %v3844 = vmul.f32 %v3805, 100.0
      %v3845 = vmul.f32 %v3808, 100.0
      %v3846 = vmul.f32 %v3811, 100.0
      %v3847 = vmul.f32 %v3814, 100.0
      %v3848 = vmin.f32 %v3816, 20.0
      %v3849 = vmin.f32 %v3817, 20.0
      %v3850 = vmin.f32 %v3818, 20.0
      %v3851 = vmin.f32 %v3819, 20.0
      %v3852 = vmin.f32 %v3820, 20.0
      %v3853 = vmin.f32 %v3821, 20.0
      %v3854 = vmin.f32 %v3822, 20.0
      %v3855 = vmin.f32 %v3823, 20.0
      %v3856 = vmin.f32 %v3824, 20.0
      %v3857 = vmin.f32 %v3825, 20.0
      %v3858 = vmin.f32 %v3826, 20.0
      %v3859 = vmin.f32 %v3827, 20.0
      %v3860 = vmin.f32 %v3828, 20.0
      %v3861 = vmin.f32 %v3829, 20.0
      %v3862 = vmin.f32 %v3830, 20.0
      %v3863 = vmin.f32 %v3831, 20.0
      %v3864 = vmin.f32 %v3832, 20.0
      %v3865 = vmin.f32 %v3833, 20.0
      %v3866 = vmin.f32 %v3834, 20.0
      %v3867 = vmin.f32 %v3835, 20.0
      %v3868 = vmin.f32 %v3836, 20.0
      %v3869 = vmin.f32 %v3837, 20.0
      %v3870 = vmin.f32 %v3838, 20.0
      %v3871 = vmin.f32 %v3839, 20.0
      %v3872 = vmin.f32 %v3840, 20.0
      %v3873 = vmin.f32 %v3841, 20.0
      %v3874 = vmin.f32 %v3842, 20.0
      %v3875 = vmin.f32 %v3843, 20.0
      %v3876 = vmin.f32 %v3844, 20.0
      %v3877 = vmin.f32 %v3845, 20.0
      %v3878 = vmin.f32 %v3846, 20.0
      %v3879 = vmin.f32 %v3847, 20.0
      %v3880 = vmul.f32 %v3848, 1.442695
      %v3881 = vpow.pop %v3880
      %v3882 = vmul.f32 %v3849, 1.442695
      %v3883 = vpow.pop %v3882
      %v3884 = vmul.f32 %v3850, 1.442695
      %v3885 = vpow.pop %v3884
      %v3886 = vmul.f32 %v3851, 1.442695
      %v3887 = vpow.pop %v3886
      %v3888 = vmul.f32 %v3852, 1.442695
      %v3889 = vpow.pop %v3888
      %v3890 = vmul.f32 %v3853, 1.442695
      %v3891 = vpow.pop %v3890
      %v3892 = vmul.f32 %v3854, 1.442695
      %v3893 = vpow.pop %v3892
      %v3894 = vmul.f32 %v3855, 1.442695
      %v3895 = vpow.pop %v3894
      %v3896 = vmul.f32 %v3856, 1.442695
      %v3897 = vpow.pop %v3896
      %v3898 = vmul.f32 %v3857, 1.442695
      %v3899 = vpow.pop %v3898
      %v3900 = vmul.f32 %v3858, 1.442695
      %v3901 = vpow.pop %v3900
      %v3902 = vmul.f32 %v3859, 1.442695
      %v3903 = vpow.pop %v3902
      %v3904 = vmul.f32 %v3860, 1.442695
      %v3905 = vpow.pop %v3904
      %v3906 = vmul.f32 %v3861, 1.442695
      %v3907 = vpow.pop %v3906
      %v3908 = vmul.f32 %v3862, 1.442695
      %v3909 = vpow.pop %v3908
      %v3910 = vmul.f32 %v3863, 1.442695
      %v3911 = vpow.pop %v3910
      %v3912 = vmul.f32 %v3864, 1.442695
      %v3913 = vpow.pop %v3912
      %v3914 = vmul.f32 %v3865, 1.442695
      %v3915 = vpow.pop %v3914
      %v3916 = vmul.f32 %v3866, 1.442695
      %v3917 = vpow.pop %v3916
      %v3918 = vmul.f32 %v3867, 1.442695
      %v3919 = vpow.pop %v3918
      %v3920 = vmul.f32 %v3868, 1.442695
      %v3921 = vpow.pop %v3920
      %v3922 = vmul.f32 %v3869, 1.442695
      %v3923 = vpow.pop %v3922
      %v3924 = vmul.f32 %v3870, 1.442695
      %v3925 = vpow.pop %v3924
      %v3926 = vmul.f32 %v3871, 1.442695
      %v3927 = vpow.pop %v3926
      %v3928 = vmul.f32 %v3872, 1.442695
      %v3929 = vpow.pop %v3928
      %v3930 = vmul.f32 %v3873, 1.442695
      %v3931 = vpow.pop %v3930
      %v3932 = vmul.f32 %v3874, 1.442695
      %v3933 = vpow.pop %v3932
      %v3934 = vmul.f32 %v3875, 1.442695
      %v3935 = vpow.pop %v3934
      %v3936 = vmul.f32 %v3876, 1.442695
      %v3937 = vpow.pop %v3936
      %v3938 = vmul.f32 %v3877, 1.442695
      %v3939 = vpow.pop %v3938
      %v3940 = vmul.f32 %v3878, 1.442695
      %v3941 = vpow.pop %v3940
      %v3942 = vmul.f32 %v3879, 1.442695
      %v3943 = vpow.pop %v3942
      %v3944 = vadd.f32 %v3881, 1.0
      %v3945 = vadd.f32 %v3883, 1.0
      %v3946 = vadd.f32 %v3885, 1.0
      %v3947 = vadd.f32 %v3887, 1.0
      %v3948 = vadd.f32 %v3889, 1.0
      %v3949 = vadd.f32 %v3891, 1.0
      %v3950 = vadd.f32 %v3893, 1.0
      %v3951 = vadd.f32 %v3895, 1.0
      %v3952 = vadd.f32 %v3897, 1.0
      %v3953 = vadd.f32 %v3899, 1.0
      %v3954 = vadd.f32 %v3901, 1.0
      %v3955 = vadd.f32 %v3903, 1.0
      %v3956 = vadd.f32 %v3905, 1.0
      %v3957 = vadd.f32 %v3907, 1.0
      %v3958 = vadd.f32 %v3909, 1.0
      %v3959 = vadd.f32 %v3911, 1.0
      %v3960 = vadd.f32 %v3913, 1.0
      %v3961 = vadd.f32 %v3915, 1.0
      %v3962 = vadd.f32 %v3917, 1.0
      %v3963 = vadd.f32 %v3919, 1.0
      %v3964 = vadd.f32 %v3921, 1.0
      %v3965 = vadd.f32 %v3923, 1.0
      %v3966 = vadd.f32 %v3925, 1.0
      %v3967 = vadd.f32 %v3927, 1.0
      %v3968 = vadd.f32 %v3929, 1.0
      %v3969 = vadd.f32 %v3931, 1.0
      %v3970 = vadd.f32 %v3933, 1.0
      %v3971 = vadd.f32 %v3935, 1.0
      %v3972 = vadd.f32 %v3937, 1.0
      %v3973 = vadd.f32 %v3939, 1.0
      %v3974 = vadd.f32 %v3941, 1.0
      %v3975 = vadd.f32 %v3943, 1.0
      %v3976 = vlog2.pop %v3944
      %v3977 = vmul.f32 %v3976, 0.6931472
      %v3978 = vlog2.pop %v3945
      %v3979 = vmul.f32 %v3978, 0.6931472
      %v3980 = vlog2.pop %v3946
      %v3981 = vmul.f32 %v3980, 0.6931472
      %v3982 = vlog2.pop %v3947
      %v3983 = vmul.f32 %v3982, 0.6931472
      %v3984 = vlog2.pop %v3948
      %v3985 = vmul.f32 %v3984, 0.6931472
      %v3986 = vlog2.pop %v3949
      %v3987 = vmul.f32 %v3986, 0.6931472
      %v3988 = vlog2.pop %v3950
      %v3989 = vmul.f32 %v3988, 0.6931472
      %v3990 = vlog2.pop %v3951
      %v3991 = vmul.f32 %v3990, 0.6931472
      %v3992 = vlog2.pop %v3952
      %v3993 = vmul.f32 %v3992, 0.6931472
      %v3994 = vlog2.pop %v3953
      %v3995 = vmul.f32 %v3994, 0.6931472
      %v3996 = vlog2.pop %v3954
      %v3997 = vmul.f32 %v3996, 0.6931472
      %v3998 = vlog2.pop %v3955
      %v3999 = vmul.f32 %v3998, 0.6931472
      %v4000 = vlog2.pop %v3956
      %v4001 = vmul.f32 %v4000, 0.6931472
      %v4002 = vlog2.pop %v3957
      %v4003 = vmul.f32 %v4002, 0.6931472
      %v4004 = vlog2.pop %v3958
      %v4005 = vmul.f32 %v4004, 0.6931472
      %v4006 = vlog2.pop %v3959
      %v4007 = vmul.f32 %v4006, 0.6931472
      %v4008 = vlog2.pop %v3960
      %v4009 = vmul.f32 %v4008, 0.6931472
      %v4010 = vlog2.pop %v3961
      %v4011 = vmul.f32 %v4010, 0.6931472
      %v4012 = vlog2.pop %v3962
      %v4013 = vmul.f32 %v4012, 0.6931472
      %v4014 = vlog2.pop %v3963
      %v4015 = vmul.f32 %v4014, 0.6931472
      %v4016 = vlog2.pop %v3964
      %v4017 = vmul.f32 %v4016, 0.6931472
      %v4018 = vlog2.pop %v3965
      %v4019 = vmul.f32 %v4018, 0.6931472
      %v4020 = vlog2.pop %v3966
      %v4021 = vmul.f32 %v4020, 0.6931472
      %v4022 = vlog2.pop %v3967
      %v4023 = vmul.f32 %v4022, 0.6931472
      %v4024 = vlog2.pop %v3968
      %v4025 = vmul.f32 %v4024, 0.6931472
      %v4026 = vlog2.pop %v3969
      %v4027 = vmul.f32 %v4026, 0.6931472
      %v4028 = vlog2.pop %v3970
      %v4029 = vmul.f32 %v4028, 0.6931472
      %v4030 = vlog2.pop %v3971
      %v4031 = vmul.f32 %v4030, 0.6931472
      %v4032 = vlog2.pop %v3972
      %v4033 = vmul.f32 %v4032, 0.6931472
      %v4034 = vlog2.pop %v3973
      %v4035 = vmul.f32 %v4034, 0.6931472
      %v4036 = vlog2.pop %v3974
      %v4037 = vmul.f32 %v4036, 0.6931472
      %v4038 = vlog2.pop %v3975
      %v4039 = vmul.f32 %v4038, 0.6931472
      %v4040 = vmul.f32 %v3977, %v1130
      %v4041 = vmul.f32 %v3979, %v1130
      %v4042 = vmul.f32 %v3981, %v1130
      %v4043 = vmul.f32 %v3983, %v1130
      %v4044 = vmul.f32 %v3985, %v1130
      %v4045 = vmul.f32 %v3987, %v1130
      %v4046 = vmul.f32 %v3989, %v1130
      %v4047 = vmul.f32 %v3991, %v1130
      %v4048 = vmul.f32 %v3993, %v1130
      %v4049 = vmul.f32 %v3995, %v1130
      %v4050 = vmul.f32 %v3997, %v1130
      %v4051 = vmul.f32 %v3999, %v1130
      %v4052 = vmul.f32 %v4001, %v1130
      %v4053 = vmul.f32 %v4003, %v1130
      %v4054 = vmul.f32 %v4005, %v1130
      %v4055 = vmul.f32 %v4007, %v1130
      %v4056 = vmul.f32 %v4009, %v1130
      %v4057 = vmul.f32 %v4011, %v1130
      %v4058 = vmul.f32 %v4013, %v1130
      %v4059 = vmul.f32 %v4015, %v1130
      %v4060 = vmul.f32 %v4017, %v1130
      %v4061 = vmul.f32 %v4019, %v1130
      %v4062 = vmul.f32 %v4021, %v1130
      %v4063 = vmul.f32 %v4023, %v1130
      %v4064 = vmul.f32 %v4025, %v1130
      %v4065 = vmul.f32 %v4027, %v1130
      %v4066 = vmul.f32 %v4029, %v1130
      %v4067 = vmul.f32 %v4031, %v1130
      %v4068 = vmul.f32 %v4033, %v1130
      %v4069 = vmul.f32 %v4035, %v1130
      %v4070 = vmul.f32 %v4037, %v1130
      %v4071 = vmul.f32 %v4039, %v1130
      %vm4072 = vcmp.gt.f32.partialorder %v3816, 20.0
      %vm4073 = vcmp.gt.f32.partialorder %v3817, 20.0
      %vm4074 = vcmp.gt.f32.partialorder %v3818, 20.0
      %vm4075 = vcmp.gt.f32.partialorder %v3819, 20.0
      %vm4076 = vcmp.gt.f32.partialorder %v3820, 20.0
      %vm4077 = vcmp.gt.f32.partialorder %v3821, 20.0
      %vm4078 = vcmp.gt.f32.partialorder %v3822, 20.0
      %vm4079 = vcmp.gt.f32.partialorder %v3823, 20.0
      %vm4080 = vcmp.gt.f32.partialorder %v3824, 20.0
      %vm4081 = vcmp.gt.f32.partialorder %v3825, 20.0
      %vm4082 = vcmp.gt.f32.partialorder %v3826, 20.0
      %vm4083 = vcmp.gt.f32.partialorder %v3827, 20.0
      %vm4084 = vcmp.gt.f32.partialorder %v3828, 20.0
      %vm4085 = vcmp.gt.f32.partialorder %v3829, 20.0
      %vm4086 = vcmp.gt.f32.partialorder %v3830, 20.0
      %vm4087 = vcmp.gt.f32.partialorder %v3831, 20.0
      %vm4088 = vcmp.gt.f32.partialorder %v3832, 20.0
      %vm4089 = vcmp.gt.f32.partialorder %v3833, 20.0
      %vm4090 = vcmp.gt.f32.partialorder %v3834, 20.0
      %vm4091 = vcmp.gt.f32.partialorder %v3835, 20.0
      %vm4092 = vcmp.gt.f32.partialorder %v3836, 20.0
      %vm4093 = vcmp.gt.f32.partialorder %v3837, 20.0
      %vm4094 = vcmp.gt.f32.partialorder %v3838, 20.0
      %vm4095 = vcmp.gt.f32.partialorder %v3839, 20.0
      %vm4096 = vcmp.gt.f32.partialorder %v3840, 20.0
      %vm4097 = vcmp.gt.f32.partialorder %v3841, 20.0
      %vm4098 = vcmp.gt.f32.partialorder %v3842, 20.0
      %vm4099 = vcmp.gt.f32.partialorder %v3843, 20.0
      %vm4100 = vcmp.gt.f32.partialorder %v3844, 20.0
      %vm4101 = vcmp.gt.f32.partialorder %v3845, 20.0
      %vm4102 = vcmp.gt.f32.partialorder %v3846, 20.0
      %vm4103 = vcmp.gt.f32.partialorder %v3847, 20.0
      %v4104 = vsel %vm4072, %v3721, %v4040
      %v4105 = vsel %vm4073, %v3724, %v4041
      %v4106 = vsel %vm4074, %v3727, %v4042
      %v4107 = vsel %vm4075, %v3730, %v4043
      %v4108 = vsel %vm4076, %v3733, %v4044
      %v4109 = vsel %vm4077, %v3736, %v4045
      %v4110 = vsel %vm4078, %v3739, %v4046
      %v4111 = vsel %vm4079, %v3742, %v4047
      %v4112 = vsel %vm4080, %v3745, %v4048
      %v4113 = vsel %vm4081, %v3748, %v4049
      %v4114 = vsel %vm4082, %v3751, %v4050
      %v4115 = vsel %vm4083, %v3754, %v4051
      %v4116 = vsel %vm4084, %v3757, %v4052
      %v4117 = vsel %vm4085, %v3760, %v4053
      %v4118 = vsel %vm4086, %v3763, %v4054
      %v4119 = vsel %vm4087, %v3766, %v4055
      %v4120 = vsel %vm4088, %v3769, %v4056
      %v4121 = vsel %vm4089, %v3772, %v4057
      %v4122 = vsel %vm4090, %v3775, %v4058
      %v4123 = vsel %vm4091, %v3778, %v4059
      %v4124 = vsel %vm4092, %v3781, %v4060
      %v4125 = vsel %vm4093, %v3784, %v4061
      %v4126 = vsel %vm4094, %v3787, %v4062
      %v4127 = vsel %vm4095, %v3790, %v4063
      %v4128 = vsel %vm4096, %v3793, %v4064
      %v4129 = vsel %vm4097, %v3796, %v4065
      %v4130 = vsel %vm4098, %v3799, %v4066
      %v4131 = vsel %vm4099, %v3802, %v4067
      %v4132 = vsel %vm4100, %v3805, %v4068
      %v4133 = vsel %vm4101, %v3808, %v4069
      %v4134 = vsel %vm4102, %v3811, %v4070
      %v4135 = vsel %vm4103, %v3814, %v4071
      %v4136 = vld [vmem:[%s4] sm:$0xff]
      %v4137 = vld [vmem:[%s4 + $0x8] sm:$0xff]
      %v4138 = vld [vmem:[%s4 + $0x10] sm:$0xff]
      %v4139 = vld [vmem:[%s4 + $0x18] sm:$0xff]
      %v4140 = vld [vmem:[%s4 + $0x20] sm:$0xff]
      %v4141 = vld [vmem:[%s4 + $0x28] sm:$0xff]
      %v4142 = vld [vmem:[%s4 + $0x30] sm:$0xff]
      %v4143 = vld [vmem:[%s4 + $0x38] sm:$0xff]
      %v4144 = vld [vmem:[%s5] sm:$0x1]
      %v4146 = vperm.slane %v4144, 0
      %v4149 = vsel %vm1402, %v4104, 0
      %v4152 = vsel %vm1402, %v4105, 0
      %v4155 = vsel %vm1402, %v4106, 0
      %v4158 = vsel %vm1402, %v4107, 0
      %v4161 = vsel %vm1402, %v4108, 0
      %v4164 = vsel %vm1402, %v4109, 0
      %v4167 = vsel %vm1402, %v4110, 0
      %v4170 = vsel %vm1402, %v4111, 0
      %v4173 = vsel %vm1402, %v4112, 0
      %v4176 = vsel %vm1402, %v4113, 0
      %v4179 = vsel %vm1402, %v4114, 0
      %v4182 = vsel %vm1402, %v4115, 0
      %v4185 = vsel %vm1402, %v4116, 0
      %v4188 = vsel %vm1402, %v4117, 0
      %v4191 = vsel %vm1402, %v4118, 0
      %v4194 = vsel %vm1402, %v4119, 0
      %v4197 = vsel %vm1402, %v4120, 0
      %v4200 = vsel %vm1402, %v4121, 0
      %v4203 = vsel %vm1402, %v4122, 0
      %v4206 = vsel %vm1402, %v4123, 0
      %v4209 = vsel %vm1402, %v4124, 0
      %v4212 = vsel %vm1402, %v4125, 0
      %v4215 = vsel %vm1402, %v4126, 0
      %v4218 = vsel %vm1402, %v4127, 0
      %v4221 = vsel %vm1402, %v4128, 0
      %v4224 = vsel %vm1402, %v4129, 0
      %v4227 = vsel %vm1402, %v4130, 0
      %v4230 = vsel %vm1402, %v4131, 0
      %v4233 = vsel %vm1402, %v4132, 0
      %v4236 = vsel %vm1402, %v4133, 0
      %v4239 = vsel %vm1402, %v4134, 0
      %v4242 = vsel %vm1402, %v4135, 0
      %4244 = vmatpush.msra.mxu0 0.0
      %4245 = vmatpush.msra.mxu0 0.0
      %4246 = vmatpush.msra.mxu0 0.0
      %4247 = vmatpush.msra.mxu0 0.0
      %4248 = vmatpush.msra.mxu0 0.0
      %4249 = vmatpush.msra.mxu0 0.0
      %4250 = vmatpush.msra.mxu0 0.0
      %4251 = vmatpush.msra.mxu0 0.0
      %4252 = vmatpush.msra.mxu0 %v4143
      %4253 = vmatpush.msra.mxu0 %v4142
      %4254 = vmatpush.msra.mxu0 %v4141
      %4255 = vmatpush.msra.mxu0 %v4140
      %4256 = vmatpush.msra.mxu0 %v4139
      %4257 = vmatpush.msra.mxu0 %v4138
      %4258 = vmatpush.msra.mxu0 %v4137
      %4259 = vmatpush.msra.mxu0 %v4136
      %4260 = vmatmul.f32.gmra.mxu0 %v4149
      %v4261 = vpop.f32.mrf.mxu0
      %v4262 = vadd.f32 %v4146, %v4261
      %4263 = vmatmul.f32.gmra.mxu0 %v4152
      %v4264 = vpop.f32.mrf.mxu0
      %v4265 = vadd.f32 %v4146, %v4264
      %4266 = vmatmul.f32.gmra.mxu0 %v4155
      %v4267 = vpop.f32.mrf.mxu0
      %v4268 = vadd.f32 %v4146, %v4267
      %4269 = vmatmul.f32.gmra.mxu0 %v4158
      %v4270 = vpop.f32.mrf.mxu0
      %v4271 = vadd.f32 %v4146, %v4270
      %4272 = vmatmul.f32.gmra.mxu0 %v4161
      %v4273 = vpop.f32.mrf.mxu0
      %v4274 = vadd.f32 %v4146, %v4273
      %4275 = vmatmul.f32.gmra.mxu0 %v4164
      %v4276 = vpop.f32.mrf.mxu0
      %v4277 = vadd.f32 %v4146, %v4276
      %4278 = vmatmul.f32.gmra.mxu0 %v4167
      %v4279 = vpop.f32.mrf.mxu0
      %v4280 = vadd.f32 %v4146, %v4279
      %4281 = vmatmul.f32.gmra.mxu0 %v4170
      %v4282 = vpop.f32.mrf.mxu0
      %v4283 = vadd.f32 %v4146, %v4282
      %4284 = vmatmul.f32.gmra.mxu0 %v4173
      %v4285 = vpop.f32.mrf.mxu0
      %v4286 = vadd.f32 %v4146, %v4285
      %4287 = vmatmul.f32.gmra.mxu0 %v4176
      %v4288 = vpop.f32.mrf.mxu0
      %v4289 = vadd.f32 %v4146, %v4288
      %4290 = vmatmul.f32.gmra.mxu0 %v4179
      %v4291 = vpop.f32.mrf.mxu0
      %v4292 = vadd.f32 %v4146, %v4291
      %4293 = vmatmul.f32.gmra.mxu0 %v4182
      %v4294 = vpop.f32.mrf.mxu0
      %v4295 = vadd.f32 %v4146, %v4294
      %4296 = vmatmul.f32.gmra.mxu0 %v4185
      %v4297 = vpop.f32.mrf.mxu0
      %v4298 = vadd.f32 %v4146, %v4297
      %4299 = vmatmul.f32.gmra.mxu0 %v4188
      %v4300 = vpop.f32.mrf.mxu0
      %v4301 = vadd.f32 %v4146, %v4300
      %4302 = vmatmul.f32.gmra.mxu0 %v4191
      %v4303 = vpop.f32.mrf.mxu0
      %v4304 = vadd.f32 %v4146, %v4303
      %4305 = vmatmul.f32.gmra.mxu0 %v4194
      %v4306 = vpop.f32.mrf.mxu0
      %v4307 = vadd.f32 %v4146, %v4306
      %4308 = vmatmul.f32.gmra.mxu0 %v4197
      %v4309 = vpop.f32.mrf.mxu0
      %v4310 = vadd.f32 %v4146, %v4309
      %4311 = vmatmul.f32.gmra.mxu0 %v4200
      %v4312 = vpop.f32.mrf.mxu0
      %v4313 = vadd.f32 %v4146, %v4312
      %4314 = vmatmul.f32.gmra.mxu0 %v4203
      %v4315 = vpop.f32.mrf.mxu0
      %v4316 = vadd.f32 %v4146, %v4315
      %4317 = vmatmul.f32.gmra.mxu0 %v4206
      %v4318 = vpop.f32.mrf.mxu0
      %v4319 = vadd.f32 %v4146, %v4318
      %4320 = vmatmul.f32.gmra.mxu0 %v4209
      %v4321 = vpop.f32.mrf.mxu0
      %v4322 = vadd.f32 %v4146, %v4321
      %4323 = vmatmul.f32.gmra.mxu0 %v4212
      %v4324 = vpop.f32.mrf.mxu0
      %v4325 = vadd.f32 %v4146, %v4324
      %4326 = vmatmul.f32.gmra.mxu0 %v4215
      %v4327 = vpop.f32.mrf.mxu0
      %v4328 = vadd.f32 %v4146, %v4327
      %4329 = vmatmul.f32.gmra.mxu0 %v4218
      %v4330 = vpop.f32.mrf.mxu0
      %v4331 = vadd.f32 %v4146, %v4330
      %4332 = vmatmul.f32.gmra.mxu0 %v4221
      %v4333 = vpop.f32.mrf.mxu0
      %v4334 = vadd.f32 %v4146, %v4333
      %4335 = vmatmul.f32.gmra.mxu0 %v4224
      %v4336 = vpop.f32.mrf.mxu0
      %v4337 = vadd.f32 %v4146, %v4336
      %4338 = vmatmul.f32.gmra.mxu0 %v4227
      %v4339 = vpop.f32.mrf.mxu0
      %v4340 = vadd.f32 %v4146, %v4339
      %4341 = vmatmul.f32.gmra.mxu0 %v4230
      %v4342 = vpop.f32.mrf.mxu0
      %v4343 = vadd.f32 %v4146, %v4342
      %4344 = vmatmul.f32.gmra.mxu0 %v4233
      %v4345 = vpop.f32.mrf.mxu0
      %v4346 = vadd.f32 %v4146, %v4345
      %4347 = vmatmul.f32.gmra.mxu0 %v4236
      %v4348 = vpop.f32.mrf.mxu0
      %v4349 = vadd.f32 %v4146, %v4348
      %4350 = vmatmul.f32.gmra.mxu0 %v4239
      %v4351 = vpop.f32.mrf.mxu0
      %v4352 = vadd.f32 %v4146, %v4351
      %4353 = vmatmul.f32.gmra.mxu0 %v4242
      %v4354 = vpop.f32.mrf.mxu0
      %v4355 = vadd.f32 %v4146, %v4354
      %4356 = vdwg.mxu0
      %vm4357 = vcmask 39936
      %4358 = vst.msk [vmem:[%s253] sm:$0xff] %vm4357, %v4262
      %4359 = vst.msk [vmem:[%s253 + $0x8] sm:$0xff] %vm4357, %v4265
      %4360 = vst.msk [vmem:[%s253 + $0x10] sm:$0xff] %vm4357, %v4268
      %4361 = vst.msk [vmem:[%s253 + $0x18] sm:$0xff] %vm4357, %v4271
      %4362 = vst.msk [vmem:[%s253 + $0x20] sm:$0xff] %vm4357, %v4274
      %4363 = vst.msk [vmem:[%s253 + $0x28] sm:$0xff] %vm4357, %v4277
      %4364 = vst.msk [vmem:[%s253 + $0x30] sm:$0xff] %vm4357, %v4280
      %4365 = vst.msk [vmem:[%s253 + $0x38] sm:$0xff] %vm4357, %v4283
      %4366 = vst.msk [vmem:[%s253 + $0x40] sm:$0xff] %vm4357, %v4286
      %4367 = vst.msk [vmem:[%s253 + $0x48] sm:$0xff] %vm4357, %v4289
      %4368 = vst.msk [vmem:[%s253 + $0x50] sm:$0xff] %vm4357, %v4292
      %4369 = vst.msk [vmem:[%s253 + $0x58] sm:$0xff] %vm4357, %v4295
      %4370 = vst.msk [vmem:[%s253 + $0x60] sm:$0xff] %vm4357, %v4298
      %4371 = vst.msk [vmem:[%s253 + $0x68] sm:$0xff] %vm4357, %v4301
      %4372 = vst.msk [vmem:[%s253 + $0x70] sm:$0xff] %vm4357, %v4304
      %4373 = vst.msk [vmem:[%s253 + $0x78] sm:$0xff] %vm4357, %v4307
      %4374 = vst.msk [vmem:[%s253 + $0x80] sm:$0xff] %vm4357, %v4310
      %4375 = vst.msk [vmem:[%s253 + $0x88] sm:$0xff] %vm4357, %v4313
      %4376 = vst.msk [vmem:[%s253 + $0x90] sm:$0xff] %vm4357, %v4316
      %4377 = vst.msk [vmem:[%s253 + $0x98] sm:$0xff] %vm4357, %v4319
      %4378 = vst.msk [vmem:[%s253 + $0xa0] sm:$0xff] %vm4357, %v4322
      %4379 = vst.msk [vmem:[%s253 + $0xa8] sm:$0xff] %vm4357, %v4325
      %4380 = vst.msk [vmem:[%s253 + $0xb0] sm:$0xff] %vm4357, %v4328
      %4381 = vst.msk [vmem:[%s253 + $0xb8] sm:$0xff] %vm4357, %v4331
      %4382 = vst.msk [vmem:[%s253 + $0xc0] sm:$0xff] %vm4357, %v4334
      %4383 = vst.msk [vmem:[%s253 + $0xc8] sm:$0xff] %vm4357, %v4337
      %4384 = vst.msk [vmem:[%s253 + $0xd0] sm:$0xff] %vm4357, %v4340
      %4385 = vst.msk [vmem:[%s253 + $0xd8] sm:$0xff] %vm4357, %v4343
      %4386 = vst.msk [vmem:[%s253 + $0xe0] sm:$0xff] %vm4357, %v4346
      %4387 = vst.msk [vmem:[%s253 + $0xe8] sm:$0xff] %vm4357, %v4349
      %4388 = vst.msk [vmem:[%s253 + $0xf0] sm:$0xff] %vm4357, %v4352
      %4389 = vst.msk [vmem:[%s253 + $0xf8] sm:$0xff] %vm4357, %v4355
      %s4390 = smul.u32 32, %s17
      %p4391 = scmp.lt.s32.totalorder %s4390, 127
      %s4392 = scalar_select %p4391, %s4390, 127
      %s4393 = smul.addr %s4392, 8
      %s4394 = scalar_lea.vmem %s6, %s4393
      // Predicated region
      $region45: #{tpu_custom_call.1} parent=43 // pred_check
        %p4395 = pneg %p166
      $region46: #{tpu_custom_call.1} parent=43 // pred_check_branch
        %4397 = sbr.rel (%p4395) target = $region48
      $region47: #{tpu_custom_call.1} parent=43 // pred_region
        %s4398 = smul.u32 32, %s17
      $region48: #{tpu_custom_call.1} parent=43 // pred_fallthru
        _
    $region44: #{tpu_custom_call.1} parent=5 // pred_fallthru
      _
    %p4399 = scmp.le.s32.totalorder 2, %s12
    // Predicated region
    $region49: #{tpu_custom_call.1} parent=5 // pred_check
      %p4400 = pneg %p4399
    $region50: #{tpu_custom_call.1} parent=5 // pred_check_branch
      %4402 = sbr.rel (%p4400) target = $region52
    $region51: #{tpu_custom_call.1} parent=5 // pred_region
      %s4403 = ssub.s32 %s12, 2
      // Predicated region
      $region53: #{tpu_custom_call.1} parent=51 // pred_check
        %p4404 = pneg %p172
      $region54: #{tpu_custom_call.1} parent=51 // pred_check_branch
        %4406 = sbr.rel (%p4404) target = $region56
      $region55: #{tpu_custom_call.1} parent=51 // pred_region
        %s4407 = smul.u32 32, %s18
        %p4408 = scmp.lt.s32.totalorder %s4407, 127
        %s4409 = scalar_select %p4408, %s4407, 127
        %s4410 = smul.addr %s4409, 8
        %s4411 = scalar_lea.vmem %s6, %s4410
      $region56: #{tpu_custom_call.1} parent=51 // pred_fallthru
        _
    $region52: #{tpu_custom_call.1} parent=5 // pred_fallthru
      _
  $region6: #{tpu_custom_call.1} parent=0 // loop_footer
    %s16 = sadd.s32 1, %s12
  $region7: #{tpu_custom_call.1} parent=0 // loop_footer_branch
    %11 = sbr.rel target = $region3
  $region8: #{tpu_custom_call.1} parent=0 // loop_exit
    _

</llo_original>
